<compile_context>
chip_gen: v6e
topology: v6e:2x2x1
jax: 0.10.0
libtpu: 0.0.40
codegen_flags: <defaults>
</compile_context>

<pallas_src>
import jax
import jax.numpy as jnp
import numpy as np
from jax.experimental import pallas as pl
from jax.experimental.pallas import tpu as pltpu

LANE = 128


def _round_up(x, m):
    return ((x + m - 1) // m) * m


# ---------------------------------------------------------------------------
# Pallas kernel: one (B_blk, H, W, C) block of images per grid step.
# All channel dims are lane-padded (multiples of 128); x/out are bf16 in HBM.
# ---------------------------------------------------------------------------
def bottleneck_kernel(x_ref, w1_ref, b1_ref, w2_ref, b2_ref, w3_ref, b3_ref,
                      out_ref, pad_ref):
    B, H, W, Cinp = x_ref.shape
    Cmidp = w1_ref.shape[1]
    C3 = 3 * Cmidp
    Coutp = w3_ref.shape[1]
    M = B * H * W

    # ---- conv1 (1x1, BN1 scale folded into weights) + bias + relu -----------
    # x is bf16 in VMEM; matmul accumulates in f32.
    x_bf16 = x_ref[...].reshape(M, Cinp)
    t1 = jnp.dot(x_bf16, w1_ref[...], preferred_element_type=jnp.float32)
    t1 = jnp.maximum(t1 + b1_ref[...], 0.0)

    # ---- stage t1 pre-im2col'd along dx into the (B, H+2, W, 3*Cmid) scratch -
    # Slab k (channels [k*Cmid:(k+1)*Cmid]) holds the column tap x+(k-1); the
    # +-1 shift is applied in registers so every store is full-width along W
    # (sublane-aligned) and lane-aligned along channels.  Scratch is fully
    # rewritten each grid step (safe under "parallel" megacore sharding).
    zdt = pad_ref.dtype
    t1_hw = t1.reshape(B, H, W, Cmidp).astype(zdt)
    zrow = jnp.zeros((B, 1, W, C3), zdt)
    pad_ref[:, 0:1, :, :] = zrow                       # top halo row
    pad_ref[:, H + 1:H + 2, :, :] = zrow               # bottom halo row
    zcol = jnp.zeros((B, H, 1, Cmidp), zdt)
    # dx = 0 slab: tap at column x-1  (shift right by one, zero column 0)
    pad_ref[:, 1:H + 1, :, 0:Cmidp] = jnp.concatenate(
        [zcol, t1_hw[:, :, :W - 1, :]], axis=2)
    # dx = 1 slab: centre tap
    pad_ref[:, 1:H + 1, :, Cmidp:2 * Cmidp] = t1_hw
    # dx = 2 slab: tap at column x+1  (shift left by one, zero column W-1)
    pad_ref[:, 1:H + 1, :, 2 * Cmidp:C3] = jnp.concatenate(
        [t1_hw[:, :, 1:, :], zcol], axis=2)

    # ---- conv2 (3x3, stride=1, pad=1): 3 matmuls with K = 3*Cmid -------------
    acc = None
    for dy in range(3):
        patch = pad_ref[:, dy:dy + H, :, :].reshape(M, C3)
        part = jnp.dot(patch, w2_ref[dy], preferred_element_type=jnp.float32)
        acc = part if acc is None else acc + part
    t2 = jnp.maximum(acc + b2_ref[...], 0.0).astype(jnp.bfloat16)

    # ---- conv3 (1x1) + bias + residual add + relu ----------------------------
    t3 = jnp.dot(t2, w3_ref[...], preferred_element_type=jnp.float32)
    # downsample=None => identity = x; re-read x_ref (VMEM-resident) here so no
    # f32 copy of x stays live across conv2.
    identity = x_ref[...].reshape(M, Cinp).astype(jnp.float32)
    out = jnp.maximum(t3 + b3_ref[...] + identity, 0.0)
    out_ref[...] = out.reshape(B, H, W, Coutp).astype(out_ref.dtype)


# ---------------------------------------------------------------------------
# Glue: BN folding, channel padding (only when needed), batch blocking.
# ---------------------------------------------------------------------------
def fold_bn(gamma, beta, mean, var, eps=1e-5):
    scale = gamma / jnp.sqrt(var + eps)
    bias = beta - mean * scale
    return scale, bias


def _pick_batch_block(N, H, W):
    # Keep M = B_blk*H*W around >= 1024 for the MXU, but keep >= 2 grid steps
    # when N >= 2 so both v7x TensorCores get a share of the "parallel" axis.
    target = max(1, -(-1024 // (H * W)))
    b = min(target, max(N // 2, 1))
    while N % b:
        b -= 1
    return max(b, 1)


def _vmem_limit(B, H, W, Cinp, Cmidp, Coutp):
    bf16, f32 = 2, 4
    M = B * H * W
    x_blk = M * Cinp * bf16
    o_blk = M * Coutp * bf16
    wts = (Cinp + 9 * Cmidp + Coutp) * Cmidp * bf16 + (2 * Cmidp + Coutp) * f32
    scratch = B * (H + 2) * W * 3 * Cmidp * bf16
    # rough bound on in-kernel temporaries (t1/acc f32, shifted slabs, patch,
    # t2 bf16, t3/out f32, out bf16)
    temps = M * (2 * Cmidp * f32 + 4 * Cmidp * bf16 + 3 * Cmidp * bf16
                 + Coutp * f32 + Coutp * bf16)
    est = 2 * (x_blk + o_blk + wts) + scratch + temps     # double-buffered I/O
    return int(min(64 * 1024 * 1024, max(32 * 1024 * 1024, 2 * est)))


def init_params(key, in_channels, mid_channels):
    out_channels = mid_channels * 4  # Bottleneck.expansion = 4
    ks = jax.random.split(key, 6)

    def bn_params(k, c):
        k1, k2, k3, k4 = jax.random.split(k, 4)
        gamma = 1.0 + 0.1 * jax.random.normal(k1, (c,), jnp.float32)
        beta = 0.1 * jax.random.normal(k2, (c,), jnp.float32)
        mean = 0.1 * jax.random.normal(k3, (c,), jnp.float32)
        var = jax.random.uniform(k4, (c,), jnp.float32, minval=0.5, maxval=1.5)
        return (gamma, beta, mean, var)

    return {
        # PyTorch conv weight layout: (out, in, kh, kw), bias=False
        'w1': 0.1 * jax.random.normal(ks[0], (mid_channels, in_channels, 1, 1), jnp.float32),
        'w2': 0.1 * jax.random.normal(ks[1], (mid_channels, mid_channels, 3, 3), jnp.float32),
        'w3': 0.1 * jax.random.normal(ks[2], (out_channels, mid_channels, 1, 1), jnp.float32),
        'bn1': bn_params(ks[3], mid_channels),
        'bn2': bn_params(ks[4], mid_channels),
        'bn3': bn_params(ks[5], out_channels),
    }


def bottleneck_pallas_nhwc(x_nhwc, params, eps=1e-5):
    """NHWC entry point (preferred): x (N, H, W, Cin); returns NHWC bf16."""
    N, H, W, Cin = x_nhwc.shape
    Cmid = params['w1'].shape[0]
    Cout = params['w3'].shape[0]
    # TODO(synk): stride>1 / downsample projection branch not implemented.
    assert Cin == Cout, "identity residual requires in_channels == mid_channels*4"

    Cinp = _round_up(Cin, LANE)
    Cmidp = _round_up(Cmid, LANE)
    Coutp = _round_up(Cout, LANE)
    assert Cinp == Coutp

    s1, b1 = fold_bn(*params['bn1'], eps)
    s2, b2 = fold_bn(*params['bn2'], eps)
    s3, b3 = fold_bn(*params['bn3'], eps)

    # conv1 weight as (Cin, Cmid) matmul operand, BN scale folded, lane-padded.
    w1 = params['w1'][:, :, 0, 0].T * s1[None, :]
    w1 = jnp.zeros((Cinp, Cmidp), jnp.float32).at[:Cin, :Cmid].set(w1)
    w1 = w1.astype(jnp.bfloat16)

    # conv2 weights: per dy, the 3 dx taps stacked along the contraction axis
    # -> (3, 3*Cmidp, Cmidp), matching the dx slab order of the scratch.
    rows = []
    for dy in range(3):
        taps = []
        for dx in range(3):
            t = params['w2'][:, :, dy, dx].T * s2[None, :]               # (Cmid, Cmid)
            taps.append(jnp.zeros((Cmidp, Cmidp), jnp.float32).at[:Cmid, :Cmid].set(t))
        rows.append(jnp.concatenate(taps, axis=0))                        # (3*Cmidp, Cmidp)
    w2 = jnp.stack(rows, axis=0).astype(jnp.bfloat16)                     # (3, 3*Cmidp, Cmidp)

    # conv3 weight as (Cmid, Cout), BN scale folded, lane-padded.
    w3 = params['w3'][:, :, 0, 0].T * s3[None, :]
    w3 = jnp.zeros((Cmidp, Coutp), jnp.float32).at[:Cmid, :Cout].set(w3)
    w3 = w3.astype(jnp.bfloat16)

    b1p = jnp.zeros((1, Cmidp), jnp.float32).at[0, :Cmid].set(b1)
    b2p = jnp.zeros((1, Cmidp), jnp.float32).at[0, :Cmid].set(b2)
    b3p = jnp.zeros((1, Coutp), jnp.float32).at[0, :Cout].set(b3)

    # bf16 activations into the kernel; channel pad only when not lane-aligned.
    xp = x_nhwc.astype(jnp.bfloat16)
    if Cinp != Cin:
        xp = jnp.zeros((N, H, W, Cinp), jnp.bfloat16).at[..., :Cin].set(xp)

    B_blk = _pick_batch_block(N, H, W)
    grid = (N // B_blk,)

    def wspec(shape):
        return pl.BlockSpec(shape, lambda n: (0,) * len(shape))

    flops = 2 * N * H * W * (Cinp * Cmidp + 9 * Cmidp * Cmidp + Cmidp * Coutp)
    bytes_accessed = (xp.size * 2 + N * H * W * Coutp * 2
                      + (w1.size + w2.size + w3.size) * 2
                      + (b1p.size + b2p.size + b3p.size) * 4)
    cost = pl.CostEstimate(flops=flops, transcendentals=0,
                           bytes_accessed=bytes_accessed)

    out = pl.pallas_call(
        bottleneck_kernel,
        out_shape=jax.ShapeDtypeStruct((N, H, W, Coutp), jnp.bfloat16),
        grid_spec=pltpu.PrefetchScalarGridSpec(
            num_scalar_prefetch=0,
            grid=grid,
            in_specs=[
                pl.BlockSpec((B_blk, H, W, Cinp), lambda n: (n, 0, 0, 0)),  # x block
                wspec((Cinp, Cmidp)),           # w1
                wspec((1, Cmidp)),              # b1
                wspec((3, 3 * Cmidp, Cmidp)),   # w2
                wspec((1, Cmidp)),              # b2
                wspec((Cmidp, Coutp)),          # w3
                wspec((1, Coutp)),              # b3
            ],
            out_specs=pl.BlockSpec((B_blk, H, W, Coutp), lambda n: (n, 0, 0, 0)),
            scratch_shapes=[pltpu.VMEM((B_blk, H + 2, W, 3 * Cmidp), jnp.bfloat16)],
        ),
        compiler_params=pltpu.CompilerParams(
            dimension_semantics=("parallel",),
            vmem_limit_bytes=_vmem_limit(B_blk, H, W, Cinp, Cmidp, Coutp),
        ),
        cost_estimate=cost,
    )(xp, w1, b1p, w2, b2p, w3, b3p)

    if Coutp != Cout:
        out = out[..., :Cout]
    return out


def bottleneck_pallas(x_nchw, params, eps=1e-5):
    # Interface adapter matching the PyTorch module (NCHW in / NCHW out).  In a
    # full NHWC-resident network, call bottleneck_pallas_nhwc directly and skip
    # these transposes/casts (each is an extra HBM pass over the activations).
    x = jnp.transpose(x_nchw, (0, 2, 3, 1))
    out = bottleneck_pallas_nhwc(x, params, eps)
    return jnp.transpose(out, (0, 3, 1, 2)).astype(x_nchw.dtype)


# ---------------------------------------------------------------------------
# Pure-JAX reference (NCHW, f32) for the correctness check.
# ---------------------------------------------------------------------------
def bottleneck_ref(x, p, eps=1e-5):
    def conv(x, w, stride=1, pad=0):
        return jax.lax.conv_general_dilated(
            x, w, window_strides=(stride, stride),
            padding=[(pad, pad), (pad, pad)],
            dimension_numbers=('NCHW', 'OIHW', 'NCHW'),
            precision=jax.lax.Precision.HIGHEST)

    def bn(x, stats):
        g, b, m, v = (t[None, :, None, None] for t in stats)
        return (x - m) / jnp.sqrt(v + eps) * g + b

    out = jax.nn.relu(bn(conv(x, p['w1']), p['bn1']))
    out = jax.nn.relu(bn(conv(out, p['w2'], stride=1, pad=1), p['bn2']))
    out = bn(conv(out, p['w3']), p['bn3'])
    return jax.nn.relu(out + x)


if __name__ == "__main__":
    key = jax.random.PRNGKey(0)
    k_x, k_p = jax.random.split(key)

    N, in_channels, mid_channels, H, W = 2, 64, 16, 16, 16
    x = jax.random.normal(k_x, (N, in_channels, H, W), jnp.float32)
    params = init_params(k_p, in_channels, mid_channels)

    out = jax.block_until_ready(bottleneck_pallas(x, params))
    ref = jax.block_until_ready(bottleneck_ref(x, params))

    # bf16 matmul operands, bf16 activation I/O (f32 accumulation / residual
    # math inside the kernel) => relaxed tolerance vs the f32 reference.
    np.testing.assert_allclose(np.asarray(out, dtype=np.float32), np.asarray(ref),
                               rtol=5e-2, atol=5e-2)
    print("KERNEL_OK")
</pallas_src>

<mosaic_0001>
module attributes {stable_mosaic.version = 11 : i64} {
  func.func @bottleneck_kernel(%arg0: i32, %arg1: memref<1x16x16x128xbf16, #tpu.memory_space<vmem>>, %arg2: memref<128x128xbf16, #tpu.memory_space<vmem>>, %arg3: memref<1x128xf32, #tpu.memory_space<vmem>>, %arg4: memref<3x384x128xbf16, #tpu.memory_space<vmem>>, %arg5: memref<1x128xf32, #tpu.memory_space<vmem>>, %arg6: memref<128x128xbf16, #tpu.memory_space<vmem>>, %arg7: memref<1x128xf32, #tpu.memory_space<vmem>>, %arg8: memref<1x16x16x128xbf16, #tpu.memory_space<vmem>>, %arg9: memref<1x18x16x384xbf16, #tpu.memory_space<vmem>>) attributes {dimension_semantics = [#tpu.dimension_semantics<parallel>], iteration_bounds = array<i64: 2>, scalar_prefetch = 0 : i64, scratch_operands = 1 : i64, tpu.core_type = #tpu.core_type<tc>, window_params = [{transform_indices = @transform_0, window_bounds = array<i64: 1, 16, 16, 128>}, {pipeline_mode = #tpu.pipeline_mode<synchronous>, transform_indices = @transform_1, window_bounds = array<i64: 128, 128>}, {pipeline_mode = #tpu.pipeline_mode<synchronous>, transform_indices = @transform_2, window_bounds = array<i64: 1, 128>}, {pipeline_mode = #tpu.pipeline_mode<synchronous>, transform_indices = @transform_3, window_bounds = array<i64: 3, 384, 128>}, {pipeline_mode = #tpu.pipeline_mode<synchronous>, transform_indices = @transform_4, window_bounds = array<i64: 1, 128>}, {pipeline_mode = #tpu.pipeline_mode<synchronous>, transform_indices = @transform_5, window_bounds = array<i64: 128, 128>}, {pipeline_mode = #tpu.pipeline_mode<synchronous>, transform_indices = @transform_6, window_bounds = array<i64: 1, 128>}, {transform_indices = @transform_7, window_bounds = array<i64: 1, 16, 16, 128>}]} {
    %c0 = arith.constant 0 : index
    %c0_0 = arith.constant 0 : index
    %c0_1 = arith.constant 0 : index
    %c0_2 = arith.constant 0 : index
    %0 = vector.load %arg1[%c0, %c0_0, %c0_1, %c0_2] : memref<1x16x16x128xbf16, #tpu.memory_space<vmem>>, vector<1x16x16x128xbf16>
    %1 = vector.shape_cast %0 : vector<1x16x16x128xbf16> to vector<256x128xbf16>
    %c0_3 = arith.constant 0 : index
    %c0_4 = arith.constant 0 : index
    %2 = vector.load %arg2[%c0_3, %c0_4] : memref<128x128xbf16, #tpu.memory_space<vmem>>, vector<128x128xbf16>
    %cst = arith.constant dense<0.000000e+00> : vector<256x128xf32>
    %3 = tpu.matmul %1, %2, %cst {dimension_numbers = #tpu.dot_dimension_numbers<[1], [0], [0], [1], [0, 0, 1, 1], [], []>} : vector<256x128xbf16>, vector<128x128xbf16>, vector<256x128xf32> -> vector<256x128xf32>
    %c0_5 = arith.constant 0 : index
    %c0_6 = arith.constant 0 : index
    %4 = vector.load %arg3[%c0_5, %c0_6] : memref<1x128xf32, #tpu.memory_space<vmem>>, vector<1x128xf32>
    %5 = vector.broadcast %4 : vector<1x128xf32> to vector<256x128xf32>
    %6 = arith.addf %3, %5 : vector<256x128xf32>
    %cst_7 = arith.constant 0.000000e+00 : f32
    %7 = vector.broadcast %cst_7 : f32 to vector<256x128xf32>
    %8 = arith.maximumf %6, %7 : vector<256x128xf32>
    %9 = vector.shape_cast %8 : vector<256x128xf32> to vector<1x16x16x128xf32>
    %10 = arith.truncf %9 : vector<1x16x16x128xf32> to vector<1x16x16x128xbf16>
    %cst_8 = arith.constant 0.000000e+00 : bf16
    %11 = vector.broadcast %cst_8 : bf16 to vector<1x1x16x384xbf16>
    %c0_9 = arith.constant 0 : index
    %c0_10 = arith.constant 0 : index
    %c0_11 = arith.constant 0 : index
    %c0_12 = arith.constant 0 : index
    %12 = vector.load %arg9[%c0_9, %c0_10, %c0_11, %c0_12] : memref<1x18x16x384xbf16, #tpu.memory_space<vmem>>, vector<1x1x16x384xbf16>
    tpu.vector_store %arg9[%c0_9, %c0_10, %c0_11, %c0_12], %11 {strides = array<i32>} : memref<1x18x16x384xbf16, #tpu.memory_space<vmem>>, vector<1x1x16x384xbf16>,
    %c0_13 = arith.constant 0 : index
    %c17 = arith.constant 17 : index
    %c0_14 = arith.constant 0 : index
    %c0_15 = arith.constant 0 : index
    %13 = vector.load %arg9[%c0_13, %c17, %c0_14, %c0_15] : memref<1x18x16x384xbf16, #tpu.memory_space<vmem>>, vector<1x1x16x384xbf16>
    tpu.vector_store %arg9[%c0_13, %c17, %c0_14, %c0_15], %11 {strides = array<i32>} : memref<1x18x16x384xbf16, #tpu.memory_space<vmem>>, vector<1x1x16x384xbf16>,
    %cst_16 = arith.constant 0.000000e+00 : bf16
    %14 = vector.broadcast %cst_16 : bf16 to vector<1x16x1x128xbf16>
    %15 = vector.extract_strided_slice %10 {offsets = [0, 0, 0, 0], sizes = [1, 16, 15, 128], strides = [1, 1, 1, 1]} : vector<1x16x16x128xbf16> to vector<1x16x15x128xbf16>
    %16 = tpu.concatenate %14, %15 in 2 : vector<1x16x1x128xbf16>, vector<1x16x15x128xbf16> -> vector<1x16x16x128xbf16>
    %c0_17 = arith.constant 0 : index
    %c1 = arith.constant 1 : index
    %c0_18 = arith.constant 0 : index
    %c0_19 = arith.constant 0 : index
    %17 = vector.load %arg9[%c0_17, %c1, %c0_18, %c0_19] : memref<1x18x16x384xbf16, #tpu.memory_space<vmem>>, vector<1x16x16x128xbf16>
    tpu.vector_store %arg9[%c0_17, %c1, %c0_18, %c0_19], %16 {strides = array<i32>} : memref<1x18x16x384xbf16, #tpu.memory_space<vmem>>, vector<1x16x16x128xbf16>,
    %c0_20 = arith.constant 0 : index
    %c1_21 = arith.constant 1 : index
    %c0_22 = arith.constant 0 : index
    %c128 = arith.constant 128 : index
    %18 = vector.load %arg9[%c0_20, %c1_21, %c0_22, %c128] : memref<1x18x16x384xbf16, #tpu.memory_space<vmem>>, vector<1x16x16x128xbf16>
    tpu.vector_store %arg9[%c0_20, %c1_21, %c0_22, %c128], %10 {strides = array<i32>} : memref<1x18x16x384xbf16, #tpu.memory_space<vmem>>, vector<1x16x16x128xbf16>,
    %19 = vector.extract_strided_slice %10 {offsets = [0, 0, 1, 0], sizes = [1, 16, 15, 128], strides = [1, 1, 1, 1]} : vector<1x16x16x128xbf16> to vector<1x16x15x128xbf16>
    %20 = tpu.concatenate %19, %14 in 2 : vector<1x16x15x128xbf16>, vector<1x16x1x128xbf16> -> vector<1x16x16x128xbf16>
    %c0_23 = arith.constant 0 : index
    %c1_24 = arith.constant 1 : index
    %c0_25 = arith.constant 0 : index
    %c256 = arith.constant 256 : index
    %21 = vector.load %arg9[%c0_23, %c1_24, %c0_25, %c256] : memref<1x18x16x384xbf16, #tpu.memory_space<vmem>>, vector<1x16x16x128xbf16>
    tpu.vector_store %arg9[%c0_23, %c1_24, %c0_25, %c256], %20 {strides = array<i32>} : memref<1x18x16x384xbf16, #tpu.memory_space<vmem>>, vector<1x16x16x128xbf16>,
    %c0_26 = arith.constant 0 : index
    %c0_27 = arith.constant 0 : index
    %c0_28 = arith.constant 0 : index
    %c0_29 = arith.constant 0 : index
    %22 = vector.load %arg9[%c0_26, %c0_27, %c0_28, %c0_29] : memref<1x18x16x384xbf16, #tpu.memory_space<vmem>>, vector<1x16x16x384xbf16>
    %23 = vector.shape_cast %22 : vector<1x16x16x384xbf16> to vector<256x384xbf16>
    %c0_30 = arith.constant 0 : index
    %c0_31 = arith.constant 0 : index
    %c0_32 = arith.constant 0 : index
    %24 = vector.load %arg4[%c0_30, %c0_31, %c0_32] : memref<3x384x128xbf16, #tpu.memory_space<vmem>>, vector<1x384x128xbf16>
    %25 = vector.shape_cast %24 : vector<1x384x128xbf16> to vector<384x128xbf16>
    %cst_33 = arith.constant dense<0.000000e+00> : vector<256x128xf32>
    %26 = tpu.matmul %23, %25, %cst_33 {dimension_numbers = #tpu.dot_dimension_numbers<[1], [0], [0], [1], [0, 0, 1, 1], [], []>} : vector<256x384xbf16>, vector<384x128xbf16>, vector<256x128xf32> -> vector<256x128xf32>
    %c0_34 = arith.constant 0 : index
    %c1_35 = arith.constant 1 : index
    %c0_36 = arith.constant 0 : index
    %c0_37 = arith.constant 0 : index
    %27 = vector.load %arg9[%c0_34, %c1_35, %c0_36, %c0_37] : memref<1x18x16x384xbf16, #tpu.memory_space<vmem>>, vector<1x16x16x384xbf16>
    %28 = vector.shape_cast %27 : vector<1x16x16x384xbf16> to vector<256x384xbf16>
    %c1_38 = arith.constant 1 : index
    %c0_39 = arith.constant 0 : index
    %c0_40 = arith.constant 0 : index
    %29 = vector.load %arg4[%c1_38, %c0_39, %c0_40] : memref<3x384x128xbf16, #tpu.memory_space<vmem>>, vector<1x384x128xbf16>
    %30 = vector.shape_cast %29 : vector<1x384x128xbf16> to vector<384x128xbf16>
    %cst_41 = arith.constant dense<0.000000e+00> : vector<256x128xf32>
    %31 = tpu.matmul %28, %30, %cst_41 {dimension_numbers = #tpu.dot_dimension_numbers<[1], [0], [0], [1], [0, 0, 1, 1], [], []>} : vector<256x384xbf16>, vector<384x128xbf16>, vector<256x128xf32> -> vector<256x128xf32>
    %32 = arith.addf %26, %31 : vector<256x128xf32>
    %c0_42 = arith.constant 0 : index
    %c2 = arith.constant 2 : index
    %c0_43 = arith.constant 0 : index
    %c0_44 = arith.constant 0 : index
    %33 = vector.load %arg9[%c0_42, %c2, %c0_43, %c0_44] : memref<1x18x16x384xbf16, #tpu.memory_space<vmem>>, vector<1x16x16x384xbf16>
    %34 = vector.shape_cast %33 : vector<1x16x16x384xbf16> to vector<256x384xbf16>
    %c2_45 = arith.constant 2 : index
    %c0_46 = arith.constant 0 : index
    %c0_47 = arith.constant 0 : index
    %35 = vector.load %arg4[%c2_45, %c0_46, %c0_47] : memref<3x384x128xbf16, #tpu.memory_space<vmem>>, vector<1x384x128xbf16>
    %36 = vector.shape_cast %35 : vector<1x384x128xbf16> to vector<384x128xbf16>
    %cst_48 = arith.constant dense<0.000000e+00> : vector<256x128xf32>
    %37 = tpu.matmul %34, %36, %cst_48 {dimension_numbers = #tpu.dot_dimension_numbers<[1], [0], [0], [1], [0, 0, 1, 1], [], []>} : vector<256x384xbf16>, vector<384x128xbf16>, vector<256x128xf32> -> vector<256x128xf32>
    %38 = arith.addf %32, %37 : vector<256x128xf32>
    %c0_49 = arith.constant 0 : index
    %c0_50 = arith.constant 0 : index
    %39 = vector.load %arg5[%c0_49, %c0_50] : memref<1x128xf32, #tpu.memory_space<vmem>>, vector<1x128xf32>
    %40 = vector.broadcast %39 : vector<1x128xf32> to vector<256x128xf32>
    %41 = arith.addf %38, %40 : vector<256x128xf32>
    %cst_51 = arith.constant 0.000000e+00 : f32
    %42 = vector.broadcast %cst_51 : f32 to vector<256x128xf32>
    %43 = arith.maximumf %41, %42 : vector<256x128xf32>
    %44 = arith.truncf %43 : vector<256x128xf32> to vector<256x128xbf16>
    %c0_52 = arith.constant 0 : index
    %c0_53 = arith.constant 0 : index
    %45 = vector.load %arg6[%c0_52, %c0_53] : memref<128x128xbf16, #tpu.memory_space<vmem>>, vector<128x128xbf16>
    %cst_54 = arith.constant dense<0.000000e+00> : vector<256x128xf32>
    %46 = tpu.matmul %44, %45, %cst_54 {dimension_numbers = #tpu.dot_dimension_numbers<[1], [0], [0], [1], [0, 0, 1, 1], [], []>} : vector<256x128xbf16>, vector<128x128xbf16>, vector<256x128xf32> -> vector<256x128xf32>
    %c0_55 = arith.constant 0 : index
    %c0_56 = arith.constant 0 : index
    %c0_57 = arith.constant 0 : index
    %c0_58 = arith.constant 0 : index
    %47 = vector.load %arg1[%c0_55, %c0_56, %c0_57, %c0_58] : memref<1x16x16x128xbf16, #tpu.memory_space<vmem>>, vector<1x16x16x128xbf16>
    %48 = vector.shape_cast %47 : vector<1x16x16x128xbf16> to vector<256x128xbf16>
    %49 = arith.extf %48 : vector<256x128xbf16> to vector<256x128xf32>
    %c0_59 = arith.constant 0 : index
    %c0_60 = arith.constant 0 : index
    %50 = vector.load %arg7[%c0_59, %c0_60] : memref<1x128xf32, #tpu.memory_space<vmem>>, vector<1x128xf32>
    %51 = vector.broadcast %50 : vector<1x128xf32> to vector<256x128xf32>
    %52 = arith.addf %46, %51 : vector<256x128xf32>
    %53 = arith.addf %52, %49 : vector<256x128xf32>
    %cst_61 = arith.constant 0.000000e+00 : f32
    %54 = vector.broadcast %cst_61 : f32 to vector<256x128xf32>
    %55 = arith.maximumf %53, %54 : vector<256x128xf32>
    %56 = vector.shape_cast %55 : vector<256x128xf32> to vector<1x16x16x128xf32>
    %57 = arith.truncf %56 : vector<1x16x16x128xf32> to vector<1x16x16x128xbf16>
    %c0_62 = arith.constant 0 : index
    %c0_63 = arith.constant 0 : index
    %c0_64 = arith.constant 0 : index
    %c0_65 = arith.constant 0 : index
    %58 = vector.load %arg8[%c0_62, %c0_63, %c0_64, %c0_65] : memref<1x16x16x128xbf16, #tpu.memory_space<vmem>>, vector<1x16x16x128xbf16>
    tpu.vector_store %arg8[%c0_62, %c0_63, %c0_64, %c0_65], %57 {strides = array<i32>} : memref<1x16x16x128xbf16, #tpu.memory_space<vmem>>, vector<1x16x16x128xbf16>,
    return
  }
  func.func @transform_0(%arg0: i32) -> (i32, i32, i32, i32) {
    %c0_i32 = arith.constant 0 : i32
    %c0_i32_0 = arith.constant 0 : i32
    %c0_i32_1 = arith.constant 0 : i32
    %c0_i32_2 = arith.constant 0 : i32
    return %arg0, %c0_i32, %c0_i32_0, %c0_i32_1 : i32, i32, i32, i32
  }
  func.func @transform_1(%arg0: i32) -> (i32, i32) {
    %c0_i32 = arith.constant 0 : i32
    %c0_i32_0 = arith.constant 0 : i32
    %c0_i32_1 = arith.constant 0 : i32
    return %c0_i32, %c0_i32_0 : i32, i32
  }
  func.func @transform_2(%arg0: i32) -> (i32, i32) {
    %c0_i32 = arith.constant 0 : i32
    %c0_i32_0 = arith.constant 0 : i32
    %c0_i32_1 = arith.constant 0 : i32
    return %c0_i32, %c0_i32_0 : i32, i32
  }
  func.func @transform_3(%arg0: i32) -> (i32, i32, i32) {
    %c0_i32 = arith.constant 0 : i32
    %c0_i32_0 = arith.constant 0 : i32
    %c0_i32_1 = arith.constant 0 : i32
    %c0_i32_2 = arith.constant 0 : i32
    return %c0_i32, %c0_i32_0, %c0_i32_1 : i32, i32, i32
  }
  func.func @transform_4(%arg0: i32) -> (i32, i32) {
    %c0_i32 = arith.constant 0 : i32
    %c0_i32_0 = arith.constant 0 : i32
    %c0_i32_1 = arith.constant 0 : i32
    return %c0_i32, %c0_i32_0 : i32, i32
  }
  func.func @transform_5(%arg0: i32) -> (i32, i32) {
    %c0_i32 = arith.constant 0 : i32
    %c0_i32_0 = arith.constant 0 : i32
    %c0_i32_1 = arith.constant 0 : i32
    return %c0_i32, %c0_i32_0 : i32, i32
  }
  func.func @transform_6(%arg0: i32) -> (i32, i32) {
    %c0_i32 = arith.constant 0 : i32
    %c0_i32_0 = arith.constant 0 : i32
    %c0_i32_1 = arith.constant 0 : i32
    return %c0_i32, %c0_i32_0 : i32, i32
  }
  func.func @transform_7(%arg0: i32) -> (i32, i32, i32, i32) {
    %c0_i32 = arith.constant 0 : i32
    %c0_i32_0 = arith.constant 0 : i32
    %c0_i32_1 = arith.constant 0 : i32
    %c0_i32_2 = arith.constant 0 : i32
    return %arg0, %c0_i32, %c0_i32_0, %c0_i32_1 : i32, i32, i32, i32
  }
}

</mosaic_0001>

<llo_original>
// kernel: tpu_custom_call.1
$region0: #{tpu_custom_call.1}
  #allocation0 [shape = 'u32[]', space=smem, size = 0x4, offset = 0x4, fixed_abs, tag = 'smem constant byte address 0x4 - core index']
  #allocation1 [shape = 'u32[144,128]{1,0:T(1,128)}', space=vmem, size = 0x12000, scoped, tag = 'internal scratch']
  #allocation2 [shape = 'bf16[1,18,16,384]{3,2,1,0:T(8,128)(2,1)}', space=vmem, size = 0x36000, scoped, tag = 'scratch operand']
  %s0 = inlined_call_operand.hbm [shape: bf16[2,16,16,128], index: 0, kind: input, shape index: {}]
  %s1 = inlined_call_operand.hbm [shape: bf16[128,128], index: 1, kind: input, shape index: {}]
  %s2 = inlined_call_operand.vmem [shape: f32[1,128], index: 2, kind: input, shape index: {}]
  %s3 = inlined_call_operand.hbm [shape: bf16[3,384,128], index: 3, kind: input, shape index: {}]
  %s4 = inlined_call_operand.vmem [shape: f32[1,128], index: 4, kind: input, shape index: {}]
  %s5 = inlined_call_operand.hbm [shape: bf16[128,128], index: 5, kind: input, shape index: {}]
  %s6 = inlined_call_operand.vmem [shape: f32[1,128], index: 6, kind: input, shape index: {}]
  %s7 = inlined_call_operand.hbm [shape: bf16[2,16,16,128], index: 7, kind: output, shape index: {}]
  %s8 = sld [smem:[#allocation0]]
  $region77: #{tpu_custom_call.1} parent=0
    _
  %s10 = ssub.s32 1, %s8
  %s11 = scalar_select 0, %s10, %s8
  $region1: #{tpu_custom_call.1} parent=0
    #allocation3 [shape = 'u8[131072]{0}', space=vmem, size = 0x20000, scoped, tag = 'input window, operand 0']
    #allocation4 [shape = 's32[2]{0}', space=sflag, size = 0x8, scoped, tag = 'scoped memory for tpu_custom_call.1']
    #allocation5 [shape = 's32[2]{0}', space=sflag, size = 0x8, scoped, tag = 'scoped memory for tpu_custom_call.1']
    #allocation6 [shape = 'u8[32768]{0}', space=vmem, size = 0x8000, scoped, tag = 'input window, operand 1, single buffered']
    #allocation7 [shape = 's32[1]{0}', space=sflag, size = 0x4, scoped, tag = 'scoped memory for tpu_custom_call.1']
    #allocation8 [shape = 'u8[294912]{0}', space=vmem, size = 0x48000, scoped, tag = 'input window, operand 3, single buffered']
    #allocation9 [shape = 'u8[32768]{0}', space=vmem, size = 0x8000, scoped, tag = 'input window, operand 5, single buffered']
    #allocation10 [shape = 's32[1]{0}', space=sflag, size = 0x4, scoped, tag = 'scoped memory for tpu_custom_call.1']
    #allocation11 [shape = 'u8[131072]{0}', space=vmem, size = 0x20000, scoped, tag = 'output window, operand 0']
    %12 = vsyncpa [#allocation4], 0
    %s13 = scalar_lea.sflag [#allocation4], 1
    %14 = vsyncpa %s13, 0
    %15 = vsyncpa [#allocation7], 0
    %16 = vsyncpa [#allocation10], 0
    %17 = vsyncpa [#allocation5], 0
    %s18 = scalar_lea.sflag [#allocation5], 1
    %19 = vsyncpa %s18, 0
    loop: start=0, step=1, limit=4
    $region2: #{tpu_custom_call.1} parent=1 // loop_pre_header
      _
    $region3: #{tpu_custom_call.1} parent=1 // loop_header
      %s21 = sphi 0, %s25
      %p22 = scmp.ge.s32.totalorder %s21, 4
      %s31 = sphi 0, %s33
      %s34 = sphi 0, %s31
      %s35 = sphi 0, %s34
      %s51 = sphi 0, %s35
      %s55 = sphi 0, %s55
      %s57 = sphi 0, %s55
      %s58 = sphi 0, %s57
      %s72 = sphi 0, %s58
      %s76 = sphi 0, %s76
      %s78 = sphi 0, %s76
      %s79 = sphi 0, %s78
      %s93 = sphi 0, %s79
      %s97 = sphi 0, %s97
      %s99 = sphi 0, %s97
      %s100 = sphi 0, %s99
      %s114 = sphi 0, %s100
      %s118 = sphi 0, %s118
      %s120 = sphi 0, %s118
      %s121 = sphi 0, %s120
      %s135 = sphi 0, %s121
      %s139 = sphi 0, %s139
      %s141 = sphi 0, %s139
      %s142 = sphi 0, %s141
      %s156 = sphi 0, %s142
      %s160 = sphi 0, %s160
      %s162 = sphi 0, %s160
      %s163 = sphi 0, %s162
      %s177 = sphi 0, %s163
      %s183 = sphi 0, %s185
      %s186 = sphi 0, %s183
      %s187 = sphi 0, %s186
      %s203 = sphi 0, %s187
    $region4: #{tpu_custom_call.1} parent=1 // loop_header_branch
      %24 = sbr.rel (%p22) target = $region8
    $region5: #{tpu_custom_call.1} parent=1 // loop_body
      %s26 = ssub.s32 %s21, 1
      %s27 = ssub.s32 %s21, 2
      %s28 = sadd.s32 %s21, 1
      %s29 = ssub.s32 %s21, %s28
      %p30 = scmp.eq.s32.totalorder %s29, 0
      %s32 = sadd.s32 %s31, 1
      %s33 = scalar_select %p30, %s31, %s32
      %p36 = pneg %p30
      %p37 = scmp.eq.s32.totalorder %s21, 1
      %p38 = por %p36, %p37
      %p39 = scmp.ne.s32.totalorder %s31, %s34
      %p40 = scmp.eq.s32.totalorder %s21, 0
      %p41 = por %p39, %p40
      %p42 = scmp.ne.s32.totalorder %s31, %s34
      %p43 = scmp.eq.s32.totalorder %s26, 1
      %p44 = por %p42, %p43
      %p45 = scmp.ne.s32.totalorder %s34, %s35
      %p46 = scmp.eq.s32.totalorder %s26, 0
      %p47 = por %p45, %p46
      %p48 = scmp.ne.s32.totalorder %s34, %s35
      %p49 = scmp.eq.s32.totalorder %s27, 1
      %p50 = por %p48, %p49
      %p52 = scmp.ne.s32.totalorder %s35, %s51
      %p53 = scmp.eq.s32.totalorder %s27, 0
      %p54 = por %p52, %p53
      %s56 = sadd.s32 %s55, 1
      %p59 = scmp.eq.s32.totalorder %s21, 1
      %p60 = scmp.ne.s32.totalorder %s55, %s57
      %p61 = scmp.eq.s32.totalorder %s21, 0
      %p62 = por %p60, %p61
      %p63 = scmp.ne.s32.totalorder %s55, %s57
      %p64 = scmp.eq.s32.totalorder %s26, 1
      %p65 = por %p63, %p64
      %p66 = scmp.ne.s32.totalorder %s57, %s58
      %p67 = scmp.eq.s32.totalorder %s26, 0
      %p68 = por %p66, %p67
      %p69 = scmp.ne.s32.totalorder %s57, %s58
      %p70 = scmp.eq.s32.totalorder %s27, 1
      %p71 = por %p69, %p70
      %p73 = scmp.ne.s32.totalorder %s58, %s72
      %p74 = scmp.eq.s32.totalorder %s27, 0
      %p75 = por %p73, %p74
      %s77 = sadd.s32 %s76, 1
      %p80 = scmp.eq.s32.totalorder %s21, 1
      %p81 = scmp.ne.s32.totalorder %s76, %s78
      %p82 = scmp.eq.s32.totalorder %s21, 0
      %p83 = por %p81, %p82
      %p84 = scmp.ne.s32.totalorder %s76, %s78
      %p85 = scmp.eq.s32.totalorder %s26, 1
      %p86 = por %p84, %p85
      %p87 = scmp.ne.s32.totalorder %s78, %s79
      %p88 = scmp.eq.s32.totalorder %s26, 0
      %p89 = por %p87, %p88
      %p90 = scmp.ne.s32.totalorder %s78, %s79
      %p91 = scmp.eq.s32.totalorder %s27, 1
      %p92 = por %p90, %p91
      %p94 = scmp.ne.s32.totalorder %s79, %s93
      %p95 = scmp.eq.s32.totalorder %s27, 0
      %p96 = por %p94, %p95
      %s98 = sadd.s32 %s97, 1
      %p101 = scmp.eq.s32.totalorder %s21, 1
      %p102 = scmp.ne.s32.totalorder %s97, %s99
      %p103 = scmp.eq.s32.totalorder %s21, 0
      %p104 = por %p102, %p103
      %p105 = scmp.ne.s32.totalorder %s97, %s99
      %p106 = scmp.eq.s32.totalorder %s26, 1
      %p107 = por %p105, %p106
      %p108 = scmp.ne.s32.totalorder %s99, %s100
      %p109 = scmp.eq.s32.totalorder %s26, 0
      %p110 = por %p108, %p109
      %p111 = scmp.ne.s32.totalorder %s99, %s100
      %p112 = scmp.eq.s32.totalorder %s27, 1
      %p113 = por %p111, %p112
      %p115 = scmp.ne.s32.totalorder %s100, %s114
      %p116 = scmp.eq.s32.totalorder %s27, 0
      %p117 = por %p115, %p116
      %s119 = sadd.s32 %s118, 1
      %p122 = scmp.eq.s32.totalorder %s21, 1
      %p123 = scmp.ne.s32.totalorder %s118, %s120
      %p124 = scmp.eq.s32.totalorder %s21, 0
      %p125 = por %p123, %p124
      %p126 = scmp.ne.s32.totalorder %s118, %s120
      %p127 = scmp.eq.s32.totalorder %s26, 1
      %p128 = por %p126, %p127
      %p129 = scmp.ne.s32.totalorder %s120, %s121
      %p130 = scmp.eq.s32.totalorder %s26, 0
      %p131 = por %p129, %p130
      %p132 = scmp.ne.s32.totalorder %s120, %s121
      %p133 = scmp.eq.s32.totalorder %s27, 1
      %p134 = por %p132, %p133
      %p136 = scmp.ne.s32.totalorder %s121, %s135
      %p137 = scmp.eq.s32.totalorder %s27, 0
      %p138 = por %p136, %p137
      %s140 = sadd.s32 %s139, 1
      %p143 = scmp.eq.s32.totalorder %s21, 1
      %p144 = scmp.ne.s32.totalorder %s139, %s141
      %p145 = scmp.eq.s32.totalorder %s21, 0
      %p146 = por %p144, %p145
      %p147 = scmp.ne.s32.totalorder %s139, %s141
      %p148 = scmp.eq.s32.totalorder %s26, 1
      %p149 = por %p147, %p148
      %p150 = scmp.ne.s32.totalorder %s141, %s142
      %p151 = scmp.eq.s32.totalorder %s26, 0
      %p152 = por %p150, %p151
      %p153 = scmp.ne.s32.totalorder %s141, %s142
      %p154 = scmp.eq.s32.totalorder %s27, 1
      %p155 = por %p153, %p154
      %p157 = scmp.ne.s32.totalorder %s142, %s156
      %p158 = scmp.eq.s32.totalorder %s27, 0
      %p159 = por %p157, %p158
      %s161 = sadd.s32 %s160, 1
      %p164 = scmp.eq.s32.totalorder %s21, 1
      %p165 = scmp.ne.s32.totalorder %s160, %s162
      %p166 = scmp.eq.s32.totalorder %s21, 0
      %p167 = por %p165, %p166
      %p168 = scmp.ne.s32.totalorder %s160, %s162
      %p169 = scmp.eq.s32.totalorder %s26, 1
      %p170 = por %p168, %p169
      %p171 = scmp.ne.s32.totalorder %s162, %s163
      %p172 = scmp.eq.s32.totalorder %s26, 0
      %p173 = por %p171, %p172
      %p174 = scmp.ne.s32.totalorder %s162, %s163
      %p175 = scmp.eq.s32.totalorder %s27, 1
      %p176 = por %p174, %p175
      %p178 = scmp.ne.s32.totalorder %s163, %s177
      %p179 = scmp.eq.s32.totalorder %s27, 0
      %p180 = por %p178, %p179
      %s181 = ssub.s32 %s21, %s28
      %p182 = scmp.eq.s32.totalorder %s181, 0
      %s184 = sadd.s32 %s183, 1
      %s185 = scalar_select %p182, %s183, %s184
      %p188 = pneg %p182
      %p189 = scmp.eq.s32.totalorder %s21, 1
      %p190 = por %p188, %p189
      %p191 = scmp.ne.s32.totalorder %s183, %s186
      %p192 = scmp.eq.s32.totalorder %s21, 0
      %p193 = por %p191, %p192
      %p194 = scmp.ne.s32.totalorder %s183, %s186
      %p195 = scmp.eq.s32.totalorder %s26, 1
      %p196 = por %p194, %p195
      %p197 = scmp.ne.s32.totalorder %s186, %s187
      %p198 = scmp.eq.s32.totalorder %s26, 0
      %p199 = por %p197, %p198
      %p200 = scmp.ne.s32.totalorder %s186, %s187
      %p201 = scmp.eq.s32.totalorder %s27, 1
      %p202 = por %p200, %p201
      %p204 = scmp.ne.s32.totalorder %s187, %s203
      %p205 = scmp.eq.s32.totalorder %s27, 0
      %p206 = por %p204, %p205
      %p207 = scmp.le.s32.totalorder 1, %s21
      %p208 = scmp.lt.s32.totalorder %s21, 3
      %p209 = pnand %p207, %p208
      %p210 = pneg %p209
      // Predicated region
      $region9: #{tpu_custom_call.1} parent=5 // pred_check
        _
      $region10: #{tpu_custom_call.1} parent=5 // pred_check_branch
        %212 = sbr.rel (%p209) target = $region12
      $region11: #{tpu_custom_call.1} parent=5 // pred_region
        %s213 = ssub.s32 %s21, 1
        // Predicated region
        $region13: #{tpu_custom_call.1} parent=11 // pred_check
          %p214 = pneg %p68
        $region14: #{tpu_custom_call.1} parent=11 // pred_check_branch
          %216 = sbr.rel (%p214) target = $region16
        $region15: #{tpu_custom_call.1} parent=11 // pred_region
          %s218 = ssub.s32 1024, 1024
          %219 = vsyncadd [#allocation7], %s218
          %s220 = sshll.u32 [#allocation6], 4
          %s221 = int_to_ptr.vmem [resolvable:$true] %s220
          %226 = dma.hbm_to_vmem [thread:$0]  %s1, 1024, %s221, [#allocation7], 64, 64, 4
        $region16: #{tpu_custom_call.1} parent=11 // pred_fallthru
          _
        // Predicated region
        $region17: #{tpu_custom_call.1} parent=11 // pred_check
          %p227 = pneg %p89
        $region18: #{tpu_custom_call.1} parent=11 // pred_check_branch
          %229 = sbr.rel (%p227) target = $region20
        $region19: #{tpu_custom_call.1} parent=11 // pred_region
          _
        $region20: #{tpu_custom_call.1} parent=11 // pred_fallthru
          _
        // Predicated region
        $region21: #{tpu_custom_call.1} parent=11 // pred_check
          %p230 = pneg %p110
        $region22: #{tpu_custom_call.1} parent=11 // pred_check_branch
          %232 = sbr.rel (%p230) target = $region24
        $region23: #{tpu_custom_call.1} parent=11 // pred_region
          %s234 = ssub.s32 9216, 9216
          %235 = vsyncadd [#allocation7], %s234
          %s236 = sshll.u32 [#allocation8], 4
          %s237 = int_to_ptr.vmem [resolvable:$true] %s236
          %242 = dma.hbm_to_vmem [thread:$0]  %s3, 9216, %s237, [#allocation7], 64, 64, 4
        $region24: #{tpu_custom_call.1} parent=11 // pred_fallthru
          _
        // Predicated region
        $region25: #{tpu_custom_call.1} parent=11 // pred_check
          %p243 = pneg %p131
        $region26: #{tpu_custom_call.1} parent=11 // pred_check_branch
          %245 = sbr.rel (%p243) target = $region28
        $region27: #{tpu_custom_call.1} parent=11 // pred_region
          _
        $region28: #{tpu_custom_call.1} parent=11 // pred_fallthru
          _
        // Predicated region
        $region29: #{tpu_custom_call.1} parent=11 // pred_check
          %p246 = pneg %p152
        $region30: #{tpu_custom_call.1} parent=11 // pred_check_branch
          %248 = sbr.rel (%p246) target = $region32
        $region31: #{tpu_custom_call.1} parent=11 // pred_region
          %s250 = ssub.s32 1024, 1024
          %251 = vsyncadd [#allocation10], %s250
          %s252 = sshll.u32 [#allocation9], 4
          %s253 = int_to_ptr.vmem [resolvable:$true] %s252
          %258 = dma.hbm_to_vmem [thread:$0]  %s5, 1024, %s253, [#allocation10], 64, 64, 4
        $region32: #{tpu_custom_call.1} parent=11 // pred_fallthru
          _
        // Predicated region
        $region33: #{tpu_custom_call.1} parent=11 // pred_check
          %p259 = pneg %p173
        $region34: #{tpu_custom_call.1} parent=11 // pred_check_branch
          %261 = sbr.rel (%p259) target = $region36
        $region35: #{tpu_custom_call.1} parent=11 // pred_region
          _
        $region36: #{tpu_custom_call.1} parent=11 // pred_fallthru
          _
      $region12: #{tpu_custom_call.1} parent=5 // pred_fallthru
        _
      %p262 = scmp.lt.s32.totalorder %s21, 2
      // Predicated region
      $region37: #{tpu_custom_call.1} parent=5 // pred_check
        %p263 = pneg %p262
      $region38: #{tpu_custom_call.1} parent=5 // pred_check_branch
        %265 = sbr.rel (%p263) target = $region40
      $region39: #{tpu_custom_call.1} parent=5 // pred_region
        // Predicated region
        $region41: #{tpu_custom_call.1} parent=39 // pred_check
          %p266 = pneg %p41
        $region42: #{tpu_custom_call.1} parent=39 // pred_check_branch
          %268 = sbr.rel (%p266) target = $region44
        $region43: #{tpu_custom_call.1} parent=39 // pred_region
          %s269 = sand.u32 %s31, 1
          %s270 = scalar_lea.sflag [#allocation4], %s269
          %s271 = sand.u32 %s31, 1
          %s272 = smul.addr %s271, 128
          %s273 = scalar_lea.vmem [#allocation3], %s272
          %s275 = ssub.s32 2048, 2048
          %276 = vsyncadd %s270, %s275
          %s277 = smul.addr %s21, 32
          %s278 = smul.addr %s277, 64
          %s279 = scalar_lea.hbm %s0, %s278
          %s280 = sshll.u32 %s273, 4
          %s281 = int_to_ptr.vmem [resolvable:$true] %s280
          %286 = dma.hbm_to_vmem [thread:$0]  %s279, 2048, %s281, %s270, 64, 64, 4
        $region44: #{tpu_custom_call.1} parent=39 // pred_fallthru
          _
      $region40: #{tpu_custom_call.1} parent=5 // pred_fallthru
        _
      %p287 = scmp.le.s32.totalorder 1, %s21
      %p288 = scmp.lt.s32.totalorder %s21, 3
      %p289 = pnand %p287, %p288
      %p290 = pneg %p289
      // Predicated region
      $region45: #{tpu_custom_call.1} parent=5 // pred_check
        _
      $region46: #{tpu_custom_call.1} parent=5 // pred_check_branch
        %292 = sbr.rel (%p289) target = $region48
      $region47: #{tpu_custom_call.1} parent=5 // pred_region
        %s293 = ssub.s32 %s21, 1
        %s294 = sand.u32 %s34, 1
        %s295 = scalar_lea.sflag [#allocation4], %s294
        %s296 = sand.u32 %s34, 1
        %s297 = smul.addr %s296, 128
        %s298 = scalar_lea.vmem [#allocation3], %s297
        // Predicated region
        $region49: #{tpu_custom_call.1} parent=47 // pred_check
          %p299 = pneg %p47
        $region50: #{tpu_custom_call.1} parent=47 // pred_check_branch
          %301 = sbr.rel (%p299) target = $region52
        $region51: #{tpu_custom_call.1} parent=47 // pred_region
          %302 = dma.done %s295, 2048
        $region52: #{tpu_custom_call.1} parent=47 // pred_fallthru
          _
        // Predicated region
        $region53: #{tpu_custom_call.1} parent=47 // pred_check
          %p303 = pneg %p68
        $region54: #{tpu_custom_call.1} parent=47 // pred_check_branch
          %305 = sbr.rel (%p303) target = $region56
        $region55: #{tpu_custom_call.1} parent=47 // pred_region
          %306 = dma.done [#allocation7], 1024
        $region56: #{tpu_custom_call.1} parent=47 // pred_fallthru
          _
        // Predicated region
        $region57: #{tpu_custom_call.1} parent=47 // pred_check
          %p307 = pneg %p110
        $region58: #{tpu_custom_call.1} parent=47 // pred_check_branch
          %309 = sbr.rel (%p307) target = $region60
        $region59: #{tpu_custom_call.1} parent=47 // pred_region
          %310 = dma.done [#allocation7], 9216
        $region60: #{tpu_custom_call.1} parent=47 // pred_fallthru
          _
        // Predicated region
        $region61: #{tpu_custom_call.1} parent=47 // pred_check
          %p311 = pneg %p152
        $region62: #{tpu_custom_call.1} parent=47 // pred_check_branch
          %313 = sbr.rel (%p311) target = $region64
        $region63: #{tpu_custom_call.1} parent=47 // pred_region
          %314 = dma.done [#allocation10], 1024
        $region64: #{tpu_custom_call.1} parent=47 // pred_fallthru
          _
        %s315 = sand.u32 %s34, 1
        %s316 = scalar_lea.sflag [#allocation4], %s315
        %s317 = sand.u32 %s34, 1
        %s318 = smul.addr %s317, 128
        %s319 = scalar_lea.vmem [#allocation3], %s318
        %p320 = pneg %p47
        %p321 = pneg %p44
        %p322 = pneg %p68
        %p323 = pneg %p65
        %p324 = pneg %p89
        %p325 = pneg %p86
        %p326 = pneg %p110
        %p327 = pneg %p107
        %p328 = pneg %p131
        %p329 = pneg %p128
        %p330 = pneg %p152
        %p331 = pneg %p149
        %p332 = pneg %p173
        %p333 = pneg %p170
        %p334 = pneg %p199
        %p335 = pneg %p196
        %s336 = sand.u32 %s186, 1
        %s337 = scalar_lea.sflag [#allocation5], %s336
        %s338 = sand.u32 %s186, 1
        %s339 = smul.addr %s338, 128
        %s340 = scalar_lea.vmem [#allocation11], %s339
        %v342 = vld [vmem:[%s298] sm:$0xf]
        %v343 = vld [vmem:[%s298 + $0x4] sm:$0xf]
        %v344 = vld [vmem:[%s298 + $0x8] sm:$0xf]
        %v345 = vld [vmem:[%s298 + $0xc] sm:$0xf]
        %v346 = vld [vmem:[%s298 + $0x10] sm:$0xf]
        %v347 = vld [vmem:[%s298 + $0x14] sm:$0xf]
        %v348 = vld [vmem:[%s298 + $0x18] sm:$0xf]
        %v349 = vld [vmem:[%s298 + $0x1c] sm:$0xf]
        %v350 = vld [vmem:[%s298 + $0x20] sm:$0xf]
        %v351 = vld [vmem:[%s298 + $0x24] sm:$0xf]
        %v352 = vld [vmem:[%s298 + $0x28] sm:$0xf]
        %v353 = vld [vmem:[%s298 + $0x2c] sm:$0xf]
        %v354 = vld [vmem:[%s298 + $0x30] sm:$0xf]
        %v355 = vld [vmem:[%s298 + $0x34] sm:$0xf]
        %v356 = vld [vmem:[%s298 + $0x38] sm:$0xf]
        %v357 = vld [vmem:[%s298 + $0x3c] sm:$0xf]
        %v358 = vld [vmem:[%s298 + $0x40] sm:$0xf]
        %v359 = vld [vmem:[%s298 + $0x44] sm:$0xf]
        %v360 = vld [vmem:[%s298 + $0x48] sm:$0xf]
        %v361 = vld [vmem:[%s298 + $0x4c] sm:$0xf]
        %v362 = vld [vmem:[%s298 + $0x50] sm:$0xf]
        %v363 = vld [vmem:[%s298 + $0x54] sm:$0xf]
        %v364 = vld [vmem:[%s298 + $0x58] sm:$0xf]
        %v365 = vld [vmem:[%s298 + $0x5c] sm:$0xf]
        %v366 = vld [vmem:[%s298 + $0x60] sm:$0xf]
        %v367 = vld [vmem:[%s298 + $0x64] sm:$0xf]
        %v368 = vld [vmem:[%s298 + $0x68] sm:$0xf]
        %v369 = vld [vmem:[%s298 + $0x6c] sm:$0xf]
        %v370 = vld [vmem:[%s298 + $0x70] sm:$0xf]
        %v371 = vld [vmem:[%s298 + $0x74] sm:$0xf]
        %v372 = vld [vmem:[%s298 + $0x78] sm:$0xf]
        %v373 = vld [vmem:[%s298 + $0x7c] sm:$0xf]
        %v374 = vld [vmem:[#allocation6] sm:$0xf]
        %v375 = vld [vmem:[#allocation6 + $0x4] sm:$0xf]
        %v376 = vld [vmem:[#allocation6 + $0x8] sm:$0xf]
        %v377 = vld [vmem:[#allocation6 + $0xc] sm:$0xf]
        %v378 = vld [vmem:[#allocation6 + $0x10] sm:$0xf]
        %v379 = vld [vmem:[#allocation6 + $0x14] sm:$0xf]
        %v380 = vld [vmem:[#allocation6 + $0x18] sm:$0xf]
        %v381 = vld [vmem:[#allocation6 + $0x1c] sm:$0xf]
        %v382 = vld [vmem:[#allocation6 + $0x20] sm:$0xf]
        %v383 = vld [vmem:[#allocation6 + $0x24] sm:$0xf]
        %v384 = vld [vmem:[#allocation6 + $0x28] sm:$0xf]
        %v385 = vld [vmem:[#allocation6 + $0x2c] sm:$0xf]
        %v386 = vld [vmem:[#allocation6 + $0x30] sm:$0xf]
        %v387 = vld [vmem:[#allocation6 + $0x34] sm:$0xf]
        %v388 = vld [vmem:[#allocation6 + $0x38] sm:$0xf]
        %v389 = vld [vmem:[#allocation6 + $0x3c] sm:$0xf]
        %v390 = vld [vmem:[%s2] sm:$0x1]
        %v392 = vlaneseq
        %v393 = vshrl.u32 %v392, 7
        %v394 = vsub.s32 0, %v393
        %v395 = vrot.slane %v390, %v394
        %v429 = vunpack.c.l.b16 %v342
        %v430 = vunpack.c.l.b16 %v343
        %v431 = vunpack.c.l.b16 %v344
        %v432 = vunpack.c.l.b16 %v345
        %v433 = vunpack.c.l.b16 %v346
        %v434 = vunpack.c.l.b16 %v347
        %v435 = vunpack.c.l.b16 %v348
        %v436 = vunpack.c.l.b16 %v349
        %v437 = vunpack.c.l.b16 %v350
        %v438 = vunpack.c.l.b16 %v351
        %v439 = vunpack.c.l.b16 %v352
        %v440 = vunpack.c.l.b16 %v353
        %v441 = vunpack.c.l.b16 %v354
        %v442 = vunpack.c.l.b16 %v355
        %v443 = vunpack.c.l.b16 %v356
        %v444 = vunpack.c.l.b16 %v357
        %v445 = vunpack.c.l.b16 %v358
        %v446 = vunpack.c.l.b16 %v359
        %v447 = vunpack.c.l.b16 %v360
        %v448 = vunpack.c.l.b16 %v361
        %v449 = vunpack.c.l.b16 %v362
        %v450 = vunpack.c.l.b16 %v363
        %v451 = vunpack.c.l.b16 %v364
        %v452 = vunpack.c.l.b16 %v365
        %v453 = vunpack.c.l.b16 %v366
        %v454 = vunpack.c.l.b16 %v367
        %v455 = vunpack.c.l.b16 %v368
        %v456 = vunpack.c.l.b16 %v369
        %v457 = vunpack.c.l.b16 %v370
        %v458 = vunpack.c.l.b16 %v371
        %v459 = vunpack.c.l.b16 %v372
        %v460 = vunpack.c.l.b16 %v373
        %v461 = vpack.c.b16 %v430, %v429
        %v462 = vpack.c.b16 %v432, %v431
        %v463 = vpack.c.b16 %v434, %v433
        %v464 = vpack.c.b16 %v436, %v435
        %v465 = vpack.c.b16 %v438, %v437
        %v466 = vpack.c.b16 %v440, %v439
        %v467 = vpack.c.b16 %v442, %v441
        %v468 = vpack.c.b16 %v444, %v443
        %v469 = vpack.c.b16 %v446, %v445
        %v470 = vpack.c.b16 %v448, %v447
        %v471 = vpack.c.b16 %v450, %v449
        %v472 = vpack.c.b16 %v452, %v451
        %v473 = vpack.c.b16 %v454, %v453
        %v474 = vpack.c.b16 %v456, %v455
        %v475 = vpack.c.b16 %v458, %v457
        %v476 = vpack.c.b16 %v460, %v459
        %v509 = vunpack.c.l.b16 %v374
        %v510 = vunpack.c.l.b16 %v375
        %v511 = vunpack.c.l.b16 %v376
        %v512 = vunpack.c.l.b16 %v377
        %v513 = vunpack.c.l.b16 %v378
        %v514 = vunpack.c.l.b16 %v379
        %v515 = vunpack.c.l.b16 %v380
        %v516 = vunpack.c.l.b16 %v381
        %v517 = vunpack.c.l.b16 %v382
        %v518 = vunpack.c.l.b16 %v383
        %v519 = vunpack.c.l.b16 %v384
        %v520 = vunpack.c.l.b16 %v385
        %v521 = vunpack.c.l.b16 %v386
        %v522 = vunpack.c.l.b16 %v387
        %v523 = vunpack.c.l.b16 %v388
        %v524 = vunpack.c.l.b16 %v389
        %v525 = vpack.c.b16 %v510, %v509
        %v526 = vpack.c.b16 %v512, %v511
        %v527 = vpack.c.b16 %v514, %v513
        %v528 = vpack.c.b16 %v516, %v515
        %v529 = vpack.c.b16 %v518, %v517
        %v530 = vpack.c.b16 %v520, %v519
        %v531 = vpack.c.b16 %v522, %v521
        %v532 = vpack.c.b16 %v524, %v523
        %541 = vmatprep.subr.bf16.mxu0 0
        %542 = vmatpush1.bf16.msra.mxu0 %v532
        %543 = vmatprep.subr.bf16.mxu0 0
        %544 = vmatpush1.bf16.msra.mxu0 %v531
        %545 = vmatprep.subr.bf16.mxu0 0
        %546 = vmatpush1.bf16.msra.mxu0 %v530
        %547 = vmatprep.subr.bf16.mxu0 0
        %548 = vmatpush1.bf16.msra.mxu0 %v529
        %549 = vmatprep.subr.bf16.mxu0 0
        %550 = vmatpush1.bf16.msra.mxu0 %v528
        %551 = vmatprep.subr.bf16.mxu0 0
        %552 = vmatpush1.bf16.msra.mxu0 %v527
        %553 = vmatprep.subr.bf16.mxu0 0
        %554 = vmatpush1.bf16.msra.mxu0 %v526
        %555 = vmatprep.subr.bf16.mxu0 0
        %556 = vmatpush1.bf16.msra.mxu0 %v525
        %557 = vmatprep.subr.bf16.mxu0 0
        %558 = vmatpush2.bf16.msra.mxu0 0
        %559 = vmatprep.subr.bf16.mxu0 0
        %560 = vmatpush2.bf16.msra.mxu0 0
        %561 = vmatprep.subr.bf16.mxu0 0
        %562 = vmatpush2.bf16.msra.mxu0 0
        %563 = vmatprep.subr.bf16.mxu0 0
        %564 = vmatpush2.bf16.msra.mxu0 0
        %565 = vmatprep.subr.bf16.mxu0 0
        %566 = vmatpush2.bf16.msra.mxu0 0
        %567 = vmatprep.subr.bf16.mxu0 0
        %568 = vmatpush2.bf16.msra.mxu0 0
        %569 = vmatprep.subr.bf16.mxu0 0
        %570 = vmatpush2.bf16.msra.mxu0 0
        %571 = vmatprep.subr.bf16.mxu0 0
        %572 = vmatpush2.bf16.msra.mxu0 0
        %573 = vmatprep.mubr.bf16.mxu0 0
        %574 = vmatmul.mubr.bf16.gmra.mxu0 %v461
        %v575 = vpop.f32.mrf.mxu0
        %v576 = vadd.f32 %v395, %v575
        %v577 = vpop.f32.mrf.mxu0
        %v578 = vpop.f32.mrf.mxu0
        %v579 = vadd.f32 %v395, %v578
        %v580 = vpop.f32.mrf.mxu0
        %581 = vmatprep.mubr.bf16.mxu0 0
        %582 = vmatmul.mubr.bf16.gmra.mxu0 %v462
        %v583 = vpop.f32.mrf.mxu0
        %v584 = vadd.f32 %v395, %v583
        %v585 = vpop.f32.mrf.mxu0
        %v586 = vpop.f32.mrf.mxu0
        %v587 = vadd.f32 %v395, %v586
        %v588 = vpop.f32.mrf.mxu0
        %589 = vmatprep.mubr.bf16.mxu0 0
        %590 = vmatmul.mubr.bf16.gmra.mxu0 %v463
        %v591 = vpop.f32.mrf.mxu0
        %v592 = vadd.f32 %v395, %v591
        %v593 = vpop.f32.mrf.mxu0
        %v594 = vpop.f32.mrf.mxu0
        %v595 = vadd.f32 %v395, %v594
        %v596 = vpop.f32.mrf.mxu0
        %597 = vmatprep.mubr.bf16.mxu0 0
        %598 = vmatmul.mubr.bf16.gmra.mxu0 %v464
        %v599 = vpop.f32.mrf.mxu0
        %v600 = vadd.f32 %v395, %v599
        %v601 = vpop.f32.mrf.mxu0
        %v602 = vpop.f32.mrf.mxu0
        %v603 = vadd.f32 %v395, %v602
        %v604 = vpop.f32.mrf.mxu0
        %605 = vmatprep.mubr.bf16.mxu0 0
        %606 = vmatmul.mubr.bf16.gmra.mxu0 %v465
        %v607 = vpop.f32.mrf.mxu0
        %v608 = vadd.f32 %v395, %v607
        %v609 = vpop.f32.mrf.mxu0
        %v610 = vpop.f32.mrf.mxu0
        %v611 = vadd.f32 %v395, %v610
        %v612 = vpop.f32.mrf.mxu0
        %613 = vmatprep.mubr.bf16.mxu0 0
        %614 = vmatmul.mubr.bf16.gmra.mxu0 %v466
        %v615 = vpop.f32.mrf.mxu0
        %v616 = vadd.f32 %v395, %v615
        %v617 = vpop.f32.mrf.mxu0
        %v618 = vpop.f32.mrf.mxu0
        %v619 = vadd.f32 %v395, %v618
        %v620 = vpop.f32.mrf.mxu0
        %621 = vmatprep.mubr.bf16.mxu0 0
        %622 = vmatmul.mubr.bf16.gmra.mxu0 %v467
        %v623 = vpop.f32.mrf.mxu0
        %v624 = vadd.f32 %v395, %v623
        %v625 = vpop.f32.mrf.mxu0
        %v626 = vpop.f32.mrf.mxu0
        %v627 = vadd.f32 %v395, %v626
        %v628 = vpop.f32.mrf.mxu0
        %629 = vmatprep.mubr.bf16.mxu0 0
        %630 = vmatmul.mubr.bf16.gmra.mxu0 %v468
        %v631 = vpop.f32.mrf.mxu0
        %v632 = vadd.f32 %v395, %v631
        %v633 = vpop.f32.mrf.mxu0
        %v634 = vpop.f32.mrf.mxu0
        %v635 = vadd.f32 %v395, %v634
        %v636 = vpop.f32.mrf.mxu0
        %637 = vmatprep.mubr.bf16.mxu0 0
        %638 = vmatmul.mubr.bf16.gmra.mxu0 %v469
        %v639 = vpop.f32.mrf.mxu0
        %v640 = vadd.f32 %v395, %v639
        %v641 = vpop.f32.mrf.mxu0
        %v642 = vpop.f32.mrf.mxu0
        %v643 = vadd.f32 %v395, %v642
        %v644 = vpop.f32.mrf.mxu0
        %645 = vmatprep.mubr.bf16.mxu0 0
        %646 = vmatmul.mubr.bf16.gmra.mxu0 %v470
        %v647 = vpop.f32.mrf.mxu0
        %v648 = vadd.f32 %v395, %v647
        %v649 = vpop.f32.mrf.mxu0
        %v650 = vpop.f32.mrf.mxu0
        %v651 = vadd.f32 %v395, %v650
        %v652 = vpop.f32.mrf.mxu0
        %653 = vmatprep.mubr.bf16.mxu0 0
        %654 = vmatmul.mubr.bf16.gmra.mxu0 %v471
        %v655 = vpop.f32.mrf.mxu0
        %v656 = vadd.f32 %v395, %v655
        %v657 = vpop.f32.mrf.mxu0
        %v658 = vpop.f32.mrf.mxu0
        %v659 = vadd.f32 %v395, %v658
        %v660 = vpop.f32.mrf.mxu0
        %661 = vmatprep.mubr.bf16.mxu0 0
        %662 = vmatmul.mubr.bf16.gmra.mxu0 %v472
        %v663 = vpop.f32.mrf.mxu0
        %v664 = vadd.f32 %v395, %v663
        %v665 = vpop.f32.mrf.mxu0
        %v666 = vpop.f32.mrf.mxu0
        %v667 = vadd.f32 %v395, %v666
        %v668 = vpop.f32.mrf.mxu0
        %669 = vmatprep.mubr.bf16.mxu0 0
        %670 = vmatmul.mubr.bf16.gmra.mxu0 %v473
        %v671 = vpop.f32.mrf.mxu0
        %v672 = vadd.f32 %v395, %v671
        %v673 = vpop.f32.mrf.mxu0
        %v674 = vpop.f32.mrf.mxu0
        %v675 = vadd.f32 %v395, %v674
        %v676 = vpop.f32.mrf.mxu0
        %677 = vmatprep.mubr.bf16.mxu0 0
        %678 = vmatmul.mubr.bf16.gmra.mxu0 %v474
        %v679 = vpop.f32.mrf.mxu0
        %v680 = vadd.f32 %v395, %v679
        %v681 = vpop.f32.mrf.mxu0
        %v682 = vpop.f32.mrf.mxu0
        %v683 = vadd.f32 %v395, %v682
        %v684 = vpop.f32.mrf.mxu0
        %685 = vmatprep.mubr.bf16.mxu0 0
        %686 = vmatmul.mubr.bf16.gmra.mxu0 %v475
        %v687 = vpop.f32.mrf.mxu0
        %v688 = vadd.f32 %v395, %v687
        %v689 = vpop.f32.mrf.mxu0
        %v690 = vpop.f32.mrf.mxu0
        %v691 = vadd.f32 %v395, %v690
        %v692 = vpop.f32.mrf.mxu0
        %693 = vmatprep.mubr.bf16.mxu0 0
        %694 = vmatmul.mubr.bf16.gmra.mxu0 %v476
        %v695 = vpop.f32.mrf.mxu0
        %v696 = vadd.f32 %v395, %v695
        %v697 = vpop.f32.mrf.mxu0
        %v698 = vpop.f32.mrf.mxu0
        %v699 = vadd.f32 %v395, %v698
        %v700 = vpop.f32.mrf.mxu0
        %701 = vdwg.mxu0
        %v702 = vmax.f32 %v576, 0.0
        %v703 = vmax.f32 %v579, 0.0
        %v704 = vmax.f32 %v584, 0.0
        %v705 = vmax.f32 %v587, 0.0
        %v706 = vmax.f32 %v592, 0.0
        %v707 = vmax.f32 %v595, 0.0
        %v708 = vmax.f32 %v600, 0.0
        %v709 = vmax.f32 %v603, 0.0
        %v710 = vmax.f32 %v608, 0.0
        %v711 = vmax.f32 %v611, 0.0
        %v712 = vmax.f32 %v616, 0.0
        %v713 = vmax.f32 %v619, 0.0
        %v714 = vmax.f32 %v624, 0.0
        %v715 = vmax.f32 %v627, 0.0
        %v716 = vmax.f32 %v632, 0.0
        %v717 = vmax.f32 %v635, 0.0
        %v718 = vmax.f32 %v640, 0.0
        %v719 = vmax.f32 %v643, 0.0
        %v720 = vmax.f32 %v648, 0.0
        %v721 = vmax.f32 %v651, 0.0
        %v722 = vmax.f32 %v656, 0.0
        %v723 = vmax.f32 %v659, 0.0
        %v724 = vmax.f32 %v664, 0.0
        %v725 = vmax.f32 %v667, 0.0
        %v726 = vmax.f32 %v672, 0.0
        %v727 = vmax.f32 %v675, 0.0
        %v728 = vmax.f32 %v680, 0.0
        %v729 = vmax.f32 %v683, 0.0
        %v730 = vmax.f32 %v688, 0.0
        %v731 = vmax.f32 %v691, 0.0
        %v732 = vmax.f32 %v696, 0.0
        %v733 = vmax.f32 %v699, 0.0
        %v734 = vpack.c.bf16 %v703, %v702
        %v735 = vpack.c.bf16 %v705, %v704
        %v736 = vpack.c.bf16 %v707, %v706
        %v737 = vpack.c.bf16 %v709, %v708
        %v738 = vpack.c.bf16 %v711, %v710
        %v739 = vpack.c.bf16 %v713, %v712
        %v740 = vpack.c.bf16 %v715, %v714
        %v741 = vpack.c.bf16 %v717, %v716
        %v742 = vpack.c.bf16 %v719, %v718
        %v743 = vpack.c.bf16 %v721, %v720
        %v744 = vpack.c.bf16 %v723, %v722
        %v745 = vpack.c.bf16 %v725, %v724
        %v746 = vpack.c.bf16 %v727, %v726
        %v747 = vpack.c.bf16 %v729, %v728
        %v748 = vpack.c.bf16 %v731, %v730
        %v749 = vpack.c.bf16 %v733, %v732
        %750 = vst [vmem:[#allocation2] sm:$0xff] 0
        %751 = vst [vmem:[#allocation2 + $0x8] sm:$0xf] 0
        %752 = vst [vmem:[#allocation2 + $0xc] sm:$0xff] 0
        %753 = vst [vmem:[#allocation2 + $0x14] sm:$0xf] 0
        %s754 = scalar_lea.vmem [#allocation2], 408
        %755 = vst [vmem:[%s754] sm:$0xff] 0
        %756 = vst [vmem:[%s754 + $0x8] sm:$0xf] 0
        %757 = vst [vmem:[%s754 + $0xc] sm:$0xff] 0
        %758 = vst [vmem:[%s754 + $0x14] sm:$0xf] 0
        %v760 = vshrl.u32 %v734, 16
        %v762 = vrot.slane %v760, 7
        %v763 = vshll.u32 %v734, 16
        %v765 = vor.u32 %v762, %v763
        %v767 = vshrl.u32 %v735, 16
        %v769 = vrot.slane %v767, 7
        %v770 = vshll.u32 %v735, 16
        %v772 = vor.u32 %v769, %v770
        %v774 = vshrl.u32 %v736, 16
        %v776 = vrot.slane %v774, 7
        %v777 = vshll.u32 %v736, 16
        %v779 = vor.u32 %v776, %v777
        %v781 = vshrl.u32 %v737, 16
        %v783 = vrot.slane %v781, 7
        %v784 = vshll.u32 %v737, 16
        %v786 = vor.u32 %v783, %v784
        %v788 = vshrl.u32 %v738, 16
        %v790 = vrot.slane %v788, 7
        %v791 = vshll.u32 %v738, 16
        %v793 = vor.u32 %v790, %v791
        %v795 = vshrl.u32 %v739, 16
        %v797 = vrot.slane %v795, 7
        %v798 = vshll.u32 %v739, 16
        %v800 = vor.u32 %v797, %v798
        %v802 = vshrl.u32 %v740, 16
        %v804 = vrot.slane %v802, 7
        %v805 = vshll.u32 %v740, 16
        %v807 = vor.u32 %v804, %v805
        %v809 = vshrl.u32 %v741, 16
        %v811 = vrot.slane %v809, 7
        %v812 = vshll.u32 %v741, 16
        %v814 = vor.u32 %v811, %v812
        %v816 = vshrl.u32 %v742, 16
        %v818 = vrot.slane %v816, 7
        %v819 = vshll.u32 %v742, 16
        %v821 = vor.u32 %v818, %v819
        %v823 = vshrl.u32 %v743, 16
        %v825 = vrot.slane %v823, 7
        %v826 = vshll.u32 %v743, 16
        %v828 = vor.u32 %v825, %v826
        %v830 = vshrl.u32 %v744, 16
        %v832 = vrot.slane %v830, 7
        %v833 = vshll.u32 %v744, 16
        %v835 = vor.u32 %v832, %v833
        %v837 = vshrl.u32 %v745, 16
        %v839 = vrot.slane %v837, 7
        %v840 = vshll.u32 %v745, 16
        %v842 = vor.u32 %v839, %v840
        %v844 = vshrl.u32 %v746, 16
        %v846 = vrot.slane %v844, 7
        %v847 = vshll.u32 %v746, 16
        %v849 = vor.u32 %v846, %v847
        %v851 = vshrl.u32 %v747, 16
        %v853 = vrot.slane %v851, 7
        %v854 = vshll.u32 %v747, 16
        %v856 = vor.u32 %v853, %v854
        %v858 = vshrl.u32 %v748, 16
        %v860 = vrot.slane %v858, 7
        %v861 = vshll.u32 %v748, 16
        %v863 = vor.u32 %v860, %v861
        %v865 = vshrl.u32 %v749, 16
        %v867 = vrot.slane %v865, 7
        %v868 = vshll.u32 %v749, 16
        %v870 = vor.u32 %v867, %v868
        %vm887 = vcmask 1040384
        %vm888 = vsmask.f32 256
        %vm889 = vmand %vm887, %vm888
        %v890 = vsel %vm889, 0, %v765
        %v891 = vsel %vm889, 0, %v772
        %v892 = vsel %vm889, 0, %v779
        %v893 = vsel %vm889, 0, %v786
        %v894 = vsel %vm889, 0, %v793
        %v895 = vsel %vm889, 0, %v800
        %v896 = vsel %vm889, 0, %v807
        %v897 = vsel %vm889, 0, %v814
        %v898 = vsel %vm889, 0, %v821
        %v899 = vsel %vm889, 0, %v828
        %v900 = vsel %vm889, 0, %v835
        %v901 = vsel %vm889, 0, %v842
        %v902 = vsel %vm889, 0, %v849
        %v903 = vsel %vm889, 0, %v856
        %v904 = vsel %vm889, 0, %v863
        %v905 = vsel %vm889, 0, %v870
        %v922 = vunpack.c.l.b16 %v890
        %v923 = vunpack.c.h.b16 %v890
        %v924 = vunpack.c.l.b16 %v891
        %v925 = vunpack.c.h.b16 %v891
        %v926 = vunpack.c.l.b16 %v892
        %v927 = vunpack.c.h.b16 %v892
        %v928 = vunpack.c.l.b16 %v893
        %v929 = vunpack.c.h.b16 %v893
        %v930 = vunpack.c.l.b16 %v894
        %v931 = vunpack.c.h.b16 %v894
        %v932 = vunpack.c.l.b16 %v895
        %v933 = vunpack.c.h.b16 %v895
        %v934 = vunpack.c.l.b16 %v896
        %v935 = vunpack.c.h.b16 %v896
        %v936 = vunpack.c.l.b16 %v897
        %v937 = vunpack.c.h.b16 %v897
        %v938 = vunpack.c.l.b16 %v898
        %v939 = vunpack.c.h.b16 %v898
        %v940 = vunpack.c.l.b16 %v899
        %v941 = vunpack.c.h.b16 %v899
        %v942 = vunpack.c.l.b16 %v900
        %v943 = vunpack.c.h.b16 %v900
        %v944 = vunpack.c.l.b16 %v901
        %v945 = vunpack.c.h.b16 %v901
        %v946 = vunpack.c.l.b16 %v902
        %v947 = vunpack.c.h.b16 %v902
        %v948 = vunpack.c.l.b16 %v903
        %v949 = vunpack.c.h.b16 %v903
        %v950 = vunpack.c.l.b16 %v904
        %v951 = vunpack.c.h.b16 %v904
        %v952 = vunpack.c.l.b16 %v905
        %v953 = vunpack.c.h.b16 %v905
        %v954 = vpack.c.b16 %v922, %v922
        %v955 = vpack.c.b16 %v923, %v923
        %v956 = vpack.c.b16 %v924, %v924
        %v957 = vpack.c.b16 %v925, %v925
        %v958 = vpack.c.b16 %v926, %v926
        %v959 = vpack.c.b16 %v927, %v927
        %v960 = vpack.c.b16 %v928, %v928
        %v961 = vpack.c.b16 %v929, %v929
        %v962 = vpack.c.b16 %v930, %v930
        %v963 = vpack.c.b16 %v931, %v931
        %v964 = vpack.c.b16 %v932, %v932
        %v965 = vpack.c.b16 %v933, %v933
        %v966 = vpack.c.b16 %v934, %v934
        %v967 = vpack.c.b16 %v935, %v935
        %v968 = vpack.c.b16 %v936, %v936
        %v969 = vpack.c.b16 %v937, %v937
        %v970 = vpack.c.b16 %v938, %v938
        %v971 = vpack.c.b16 %v939, %v939
        %v972 = vpack.c.b16 %v940, %v940
        %v973 = vpack.c.b16 %v941, %v941
        %v974 = vpack.c.b16 %v942, %v942
        %v975 = vpack.c.b16 %v943, %v943
        %v976 = vpack.c.b16 %v944, %v944
        %v977 = vpack.c.b16 %v945, %v945
        %v978 = vpack.c.b16 %v946, %v946
        %v979 = vpack.c.b16 %v947, %v947
        %v980 = vpack.c.b16 %v948, %v948
        %v981 = vpack.c.b16 %v949, %v949
        %v982 = vpack.c.b16 %v950, %v950
        %v983 = vpack.c.b16 %v951, %v951
        %v984 = vpack.c.b16 %v952, %v952
        %v985 = vpack.c.b16 %v953, %v953
        %s1018 = scalar_lea.vmem [#allocation2], 24
        %1019 = vst [vmem:[%s1018] sm:$0xf] %v954
        %1020 = vst [vmem:[%s1018 + $0xc] sm:$0xf] %v955
        %1021 = vst [vmem:[%s1018 + $0x18] sm:$0xf] %v956
        %1022 = vst [vmem:[%s1018 + $0x24] sm:$0xf] %v957
        %1023 = vst [vmem:[%s1018 + $0x30] sm:$0xf] %v958
        %1024 = vst [vmem:[%s1018 + $0x3c] sm:$0xf] %v959
        %1025 = vst [vmem:[%s1018 + $0x48] sm:$0xf] %v960
        %1026 = vst [vmem:[%s1018 + $0x54] sm:$0xf] %v961
        %1027 = vst [vmem:[%s1018 + $0x60] sm:$0xf] %v962
        %1028 = vst [vmem:[%s1018 + $0x6c] sm:$0xf] %v963
        %1029 = vst [vmem:[%s1018 + $0x78] sm:$0xf] %v964
        %1030 = vst [vmem:[%s1018 + $0x84] sm:$0xf] %v965
        %1031 = vst [vmem:[%s1018 + $0x90] sm:$0xf] %v966
        %1032 = vst [vmem:[%s1018 + $0x9c] sm:$0xf] %v967
        %1033 = vst [vmem:[%s1018 + $0xa8] sm:$0xf] %v968
        %1034 = vst [vmem:[%s1018 + $0xb4] sm:$0xf] %v969
        %1035 = vst [vmem:[%s1018 + $0xc0] sm:$0xf] %v970
        %1036 = vst [vmem:[%s1018 + $0xcc] sm:$0xf] %v971
        %1037 = vst [vmem:[%s1018 + $0xd8] sm:$0xf] %v972
        %1038 = vst [vmem:[%s1018 + $0xe4] sm:$0xf] %v973
        %1039 = vst [vmem:[%s1018 + $0xf0] sm:$0xf] %v974
        %1040 = vst [vmem:[%s1018 + $0xfc] sm:$0xf] %v975
        %1041 = vst [vmem:[%s1018 + $0x108] sm:$0xf] %v976
        %1042 = vst [vmem:[%s1018 + $0x114] sm:$0xf] %v977
        %1043 = vst [vmem:[%s1018 + $0x120] sm:$0xf] %v978
        %1044 = vst [vmem:[%s1018 + $0x12c] sm:$0xf] %v979
        %1045 = vst [vmem:[%s1018 + $0x138] sm:$0xf] %v980
        %1046 = vst [vmem:[%s1018 + $0x144] sm:$0xf] %v981
        %1047 = vst [vmem:[%s1018 + $0x150] sm:$0xf] %v982
        %1048 = vst [vmem:[%s1018 + $0x15c] sm:$0xf] %v983
        %1049 = vst [vmem:[%s1018 + $0x168] sm:$0xf] %v984
        %1050 = vst [vmem:[%s1018 + $0x174] sm:$0xf] %v985
        %v1067 = vunpack.c.l.b16 %v734
        %v1068 = vunpack.c.h.b16 %v734
        %v1069 = vunpack.c.l.b16 %v735
        %v1070 = vunpack.c.h.b16 %v735
        %v1071 = vunpack.c.l.b16 %v736
        %v1072 = vunpack.c.h.b16 %v736
        %v1073 = vunpack.c.l.b16 %v737
        %v1074 = vunpack.c.h.b16 %v737
        %v1075 = vunpack.c.l.b16 %v738
        %v1076 = vunpack.c.h.b16 %v738
        %v1077 = vunpack.c.l.b16 %v739
        %v1078 = vunpack.c.h.b16 %v739
        %v1079 = vunpack.c.l.b16 %v740
        %v1080 = vunpack.c.h.b16 %v740
        %v1081 = vunpack.c.l.b16 %v741
        %v1082 = vunpack.c.h.b16 %v741
        %v1083 = vunpack.c.l.b16 %v742
        %v1084 = vunpack.c.h.b16 %v742
        %v1085 = vunpack.c.l.b16 %v743
        %v1086 = vunpack.c.h.b16 %v743
        %v1087 = vunpack.c.l.b16 %v744
        %v1088 = vunpack.c.h.b16 %v744
        %v1089 = vunpack.c.l.b16 %v745
        %v1090 = vunpack.c.h.b16 %v745
        %v1091 = vunpack.c.l.b16 %v746
        %v1092 = vunpack.c.h.b16 %v746
        %v1093 = vunpack.c.l.b16 %v747
        %v1094 = vunpack.c.h.b16 %v747
        %v1095 = vunpack.c.l.b16 %v748
        %v1096 = vunpack.c.h.b16 %v748
        %v1097 = vunpack.c.l.b16 %v749
        %v1098 = vunpack.c.h.b16 %v749
        %v1099 = vpack.c.b16 %v1067, %v1067
        %v1100 = vpack.c.b16 %v1068, %v1068
        %v1101 = vpack.c.b16 %v1069, %v1069
        %v1102 = vpack.c.b16 %v1070, %v1070
        %v1103 = vpack.c.b16 %v1071, %v1071
        %v1104 = vpack.c.b16 %v1072, %v1072
        %v1105 = vpack.c.b16 %v1073, %v1073
        %v1106 = vpack.c.b16 %v1074, %v1074
        %v1107 = vpack.c.b16 %v1075, %v1075
        %v1108 = vpack.c.b16 %v1076, %v1076
        %v1109 = vpack.c.b16 %v1077, %v1077
        %v1110 = vpack.c.b16 %v1078, %v1078
        %v1111 = vpack.c.b16 %v1079, %v1079
        %v1112 = vpack.c.b16 %v1080, %v1080
        %v1113 = vpack.c.b16 %v1081, %v1081
        %v1114 = vpack.c.b16 %v1082, %v1082
        %v1115 = vpack.c.b16 %v1083, %v1083
        %v1116 = vpack.c.b16 %v1084, %v1084
        %v1117 = vpack.c.b16 %v1085, %v1085
        %v1118 = vpack.c.b16 %v1086, %v1086
        %v1119 = vpack.c.b16 %v1087, %v1087
        %v1120 = vpack.c.b16 %v1088, %v1088
        %v1121 = vpack.c.b16 %v1089, %v1089
        %v1122 = vpack.c.b16 %v1090, %v1090
        %v1123 = vpack.c.b16 %v1091, %v1091
        %v1124 = vpack.c.b16 %v1092, %v1092
        %v1125 = vpack.c.b16 %v1093, %v1093
        %v1126 = vpack.c.b16 %v1094, %v1094
        %v1127 = vpack.c.b16 %v1095, %v1095
        %v1128 = vpack.c.b16 %v1096, %v1096
        %v1129 = vpack.c.b16 %v1097, %v1097
        %v1130 = vpack.c.b16 %v1098, %v1098
        %1163 = vst [vmem:[%s1018 + $0x4] sm:$0xf] %v1099
        %1164 = vst [vmem:[%s1018 + $0x10] sm:$0xf] %v1100
        %1165 = vst [vmem:[%s1018 + $0x1c] sm:$0xf] %v1101
        %1166 = vst [vmem:[%s1018 + $0x28] sm:$0xf] %v1102
        %1167 = vst [vmem:[%s1018 + $0x34] sm:$0xf] %v1103
        %1168 = vst [vmem:[%s1018 + $0x40] sm:$0xf] %v1104
        %1169 = vst [vmem:[%s1018 + $0x4c] sm:$0xf] %v1105
        %1170 = vst [vmem:[%s1018 + $0x58] sm:$0xf] %v1106
        %1171 = vst [vmem:[%s1018 + $0x64] sm:$0xf] %v1107
        %1172 = vst [vmem:[%s1018 + $0x70] sm:$0xf] %v1108
        %1173 = vst [vmem:[%s1018 + $0x7c] sm:$0xf] %v1109
        %1174 = vst [vmem:[%s1018 + $0x88] sm:$0xf] %v1110
        %1175 = vst [vmem:[%s1018 + $0x94] sm:$0xf] %v1111
        %1176 = vst [vmem:[%s1018 + $0xa0] sm:$0xf] %v1112
        %1177 = vst [vmem:[%s1018 + $0xac] sm:$0xf] %v1113
        %1178 = vst [vmem:[%s1018 + $0xb8] sm:$0xf] %v1114
        %1179 = vst [vmem:[%s1018 + $0xc4] sm:$0xf] %v1115
        %1180 = vst [vmem:[%s1018 + $0xd0] sm:$0xf] %v1116
        %1181 = vst [vmem:[%s1018 + $0xdc] sm:$0xf] %v1117
        %1182 = vst [vmem:[%s1018 + $0xe8] sm:$0xf] %v1118
        %1183 = vst [vmem:[%s1018 + $0xf4] sm:$0xf] %v1119
        %1184 = vst [vmem:[%s1018 + $0x100] sm:$0xf] %v1120
        %1185 = vst [vmem:[%s1018 + $0x10c] sm:$0xf] %v1121
        %1186 = vst [vmem:[%s1018 + $0x118] sm:$0xf] %v1122
        %1187 = vst [vmem:[%s1018 + $0x124] sm:$0xf] %v1123
        %1188 = vst [vmem:[%s1018 + $0x130] sm:$0xf] %v1124
        %1189 = vst [vmem:[%s1018 + $0x13c] sm:$0xf] %v1125
        %1190 = vst [vmem:[%s1018 + $0x148] sm:$0xf] %v1126
        %1191 = vst [vmem:[%s1018 + $0x154] sm:$0xf] %v1127
        %1192 = vst [vmem:[%s1018 + $0x160] sm:$0xf] %v1128
        %1193 = vst [vmem:[%s1018 + $0x16c] sm:$0xf] %v1129
        %1194 = vst [vmem:[%s1018 + $0x178] sm:$0xf] %v1130
        %v1195 = vrot.slane %v763, 1
        %v1196 = vor.u32 %v760, %v1195
        %v1197 = vrot.slane %v770, 1
        %v1198 = vor.u32 %v767, %v1197
        %v1199 = vrot.slane %v777, 1
        %v1200 = vor.u32 %v774, %v1199
        %v1201 = vrot.slane %v784, 1
        %v1202 = vor.u32 %v781, %v1201
        %v1203 = vrot.slane %v791, 1
        %v1204 = vor.u32 %v788, %v1203
        %v1205 = vrot.slane %v798, 1
        %v1206 = vor.u32 %v795, %v1205
        %v1207 = vrot.slane %v805, 1
        %v1208 = vor.u32 %v802, %v1207
        %v1209 = vrot.slane %v812, 1
        %v1210 = vor.u32 %v809, %v1209
        %v1211 = vrot.slane %v819, 1
        %v1212 = vor.u32 %v816, %v1211
        %v1213 = vrot.slane %v826, 1
        %v1214 = vor.u32 %v823, %v1213
        %v1215 = vrot.slane %v833, 1
        %v1216 = vor.u32 %v830, %v1215
        %v1217 = vrot.slane %v840, 1
        %v1218 = vor.u32 %v837, %v1217
        %v1219 = vrot.slane %v847, 1
        %v1220 = vor.u32 %v844, %v1219
        %v1221 = vrot.slane %v854, 1
        %v1222 = vor.u32 %v851, %v1221
        %v1223 = vrot.slane %v861, 1
        %v1224 = vor.u32 %v858, %v1223
        %v1225 = vrot.slane %v868, 1
        %v1226 = vor.u32 %v865, %v1225
        %vm1243 = vcmask 1047552
        %vm1244 = vsmask.f32 7424
        %vm1245 = vmand %vm1243, %vm1244
        %v1246 = vsel %vm1245, %v1196, 0
        %v1247 = vsel %vm1245, %v1198, 0
        %v1248 = vsel %vm1245, %v1200, 0
        %v1249 = vsel %vm1245, %v1202, 0
        %v1250 = vsel %vm1245, %v1204, 0
        %v1251 = vsel %vm1245, %v1206, 0
        %v1252 = vsel %vm1245, %v1208, 0
        %v1253 = vsel %vm1245, %v1210, 0
        %v1254 = vsel %vm1245, %v1212, 0
        %v1255 = vsel %vm1245, %v1214, 0
        %v1256 = vsel %vm1245, %v1216, 0
        %v1257 = vsel %vm1245, %v1218, 0
        %v1258 = vsel %vm1245, %v1220, 0
        %v1259 = vsel %vm1245, %v1222, 0
        %v1260 = vsel %vm1245, %v1224, 0
        %v1261 = vsel %vm1245, %v1226, 0
        %v1278 = vunpack.c.l.b16 %v1246
        %v1279 = vunpack.c.h.b16 %v1246
        %v1280 = vunpack.c.l.b16 %v1247
        %v1281 = vunpack.c.h.b16 %v1247
        %v1282 = vunpack.c.l.b16 %v1248
        %v1283 = vunpack.c.h.b16 %v1248
        %v1284 = vunpack.c.l.b16 %v1249
        %v1285 = vunpack.c.h.b16 %v1249
        %v1286 = vunpack.c.l.b16 %v1250
        %v1287 = vunpack.c.h.b16 %v1250
        %v1288 = vunpack.c.l.b16 %v1251
        %v1289 = vunpack.c.h.b16 %v1251
        %v1290 = vunpack.c.l.b16 %v1252
        %v1291 = vunpack.c.h.b16 %v1252
        %v1292 = vunpack.c.l.b16 %v1253
        %v1293 = vunpack.c.h.b16 %v1253
        %v1294 = vunpack.c.l.b16 %v1254
        %v1295 = vunpack.c.h.b16 %v1254
        %v1296 = vunpack.c.l.b16 %v1255
        %v1297 = vunpack.c.h.b16 %v1255
        %v1298 = vunpack.c.l.b16 %v1256
        %v1299 = vunpack.c.h.b16 %v1256
        %v1300 = vunpack.c.l.b16 %v1257
        %v1301 = vunpack.c.h.b16 %v1257
        %v1302 = vunpack.c.l.b16 %v1258
        %v1303 = vunpack.c.h.b16 %v1258
        %v1304 = vunpack.c.l.b16 %v1259
        %v1305 = vunpack.c.h.b16 %v1259
        %v1306 = vunpack.c.l.b16 %v1260
        %v1307 = vunpack.c.h.b16 %v1260
        %v1308 = vunpack.c.l.b16 %v1261
        %v1309 = vunpack.c.h.b16 %v1261
        %v1310 = vpack.c.b16 %v1278, %v1278
        %v1311 = vpack.c.b16 %v1279, %v1279
        %v1312 = vpack.c.b16 %v1280, %v1280
        %v1313 = vpack.c.b16 %v1281, %v1281
        %v1314 = vpack.c.b16 %v1282, %v1282
        %v1315 = vpack.c.b16 %v1283, %v1283
        %v1316 = vpack.c.b16 %v1284, %v1284
        %v1317 = vpack.c.b16 %v1285, %v1285
        %v1318 = vpack.c.b16 %v1286, %v1286
        %v1319 = vpack.c.b16 %v1287, %v1287
        %v1320 = vpack.c.b16 %v1288, %v1288
        %v1321 = vpack.c.b16 %v1289, %v1289
        %v1322 = vpack.c.b16 %v1290, %v1290
        %v1323 = vpack.c.b16 %v1291, %v1291
        %v1324 = vpack.c.b16 %v1292, %v1292
        %v1325 = vpack.c.b16 %v1293, %v1293
        %v1326 = vpack.c.b16 %v1294, %v1294
        %v1327 = vpack.c.b16 %v1295, %v1295
        %v1328 = vpack.c.b16 %v1296, %v1296
        %v1329 = vpack.c.b16 %v1297, %v1297
        %v1330 = vpack.c.b16 %v1298, %v1298
        %v1331 = vpack.c.b16 %v1299, %v1299
        %v1332 = vpack.c.b16 %v1300, %v1300
        %v1333 = vpack.c.b16 %v1301, %v1301
        %v1334 = vpack.c.b16 %v1302, %v1302
        %v1335 = vpack.c.b16 %v1303, %v1303
        %v1336 = vpack.c.b16 %v1304, %v1304
        %v1337 = vpack.c.b16 %v1305, %v1305
        %v1338 = vpack.c.b16 %v1306, %v1306
        %v1339 = vpack.c.b16 %v1307, %v1307
        %v1340 = vpack.c.b16 %v1308, %v1308
        %v1341 = vpack.c.b16 %v1309, %v1309
        %1374 = vst [vmem:[%s1018 + $0x8] sm:$0xf] %v1310
        %1375 = vst [vmem:[%s1018 + $0x14] sm:$0xf] %v1311
        %1376 = vst [vmem:[%s1018 + $0x20] sm:$0xf] %v1312
        %1377 = vst [vmem:[%s1018 + $0x2c] sm:$0xf] %v1313
        %1378 = vst [vmem:[%s1018 + $0x38] sm:$0xf] %v1314
        %1379 = vst [vmem:[%s1018 + $0x44] sm:$0xf] %v1315
        %1380 = vst [vmem:[%s1018 + $0x50] sm:$0xf] %v1316
        %1381 = vst [vmem:[%s1018 + $0x5c] sm:$0xf] %v1317
        %1382 = vst [vmem:[%s1018 + $0x68] sm:$0xf] %v1318
        %1383 = vst [vmem:[%s1018 + $0x74] sm:$0xf] %v1319
        %1384 = vst [vmem:[%s1018 + $0x80] sm:$0xf] %v1320
        %1385 = vst [vmem:[%s1018 + $0x8c] sm:$0xf] %v1321
        %1386 = vst [vmem:[%s1018 + $0x98] sm:$0xf] %v1322
        %1387 = vst [vmem:[%s1018 + $0xa4] sm:$0xf] %v1323
        %1388 = vst [vmem:[%s1018 + $0xb0] sm:$0xf] %v1324
        %1389 = vst [vmem:[%s1018 + $0xbc] sm:$0xf] %v1325
        %1390 = vst [vmem:[%s1018 + $0xc8] sm:$0xf] %v1326
        %1391 = vst [vmem:[%s1018 + $0xd4] sm:$0xf] %v1327
        %1392 = vst [vmem:[%s1018 + $0xe0] sm:$0xf] %v1328
        %1393 = vst [vmem:[%s1018 + $0xec] sm:$0xf] %v1329
        %1394 = vst [vmem:[%s1018 + $0xf8] sm:$0xf] %v1330
        %1395 = vst [vmem:[%s1018 + $0x104] sm:$0xf] %v1331
        %1396 = vst [vmem:[%s1018 + $0x110] sm:$0xf] %v1332
        %1397 = vst [vmem:[%s1018 + $0x11c] sm:$0xf] %v1333
        %1398 = vst [vmem:[%s1018 + $0x128] sm:$0xf] %v1334
        %1399 = vst [vmem:[%s1018 + $0x134] sm:$0xf] %v1335
        %1400 = vst [vmem:[%s1018 + $0x140] sm:$0xf] %v1336
        %1401 = vst [vmem:[%s1018 + $0x14c] sm:$0xf] %v1337
        %1402 = vst [vmem:[%s1018 + $0x158] sm:$0xf] %v1338
        %1403 = vst [vmem:[%s1018 + $0x164] sm:$0xf] %v1339
        %1404 = vst [vmem:[%s1018 + $0x170] sm:$0xf] %v1340
        %1405 = vst [vmem:[%s1018 + $0x17c] sm:$0xf] %v1341
        %v1406 = vld [vmem:[#allocation2] sm:$0xff]
        %v1407 = vld [vmem:[#allocation2 + $0x8] sm:$0xf]
        %v1408 = vld [vmem:[#allocation2 + $0xc] sm:$0xff]
        %v1409 = vld [vmem:[#allocation2 + $0x14] sm:$0xf]
        %v1410 = vld [vmem:[#allocation2 + $0x18] sm:$0xff]
        %v1411 = vld [vmem:[#allocation2 + $0x20] sm:$0xf]
        %v1412 = vld [vmem:[#allocation2 + $0x24] sm:$0xff]
        %v1413 = vld [vmem:[#allocation2 + $0x2c] sm:$0xf]
        %v1414 = vld [vmem:[#allocation2 + $0x30] sm:$0xff]
        %v1415 = vld [vmem:[#allocation2 + $0x38] sm:$0xf]
        %v1416 = vld [vmem:[#allocation2 + $0x3c] sm:$0xff]
        %v1417 = vld [vmem:[#allocation2 + $0x44] sm:$0xf]
        %v1418 = vld [vmem:[#allocation2 + $0x48] sm:$0xff]
        %v1419 = vld [vmem:[#allocation2 + $0x50] sm:$0xf]
        %v1420 = vld [vmem:[#allocation2 + $0x54] sm:$0xff]
        %v1421 = vld [vmem:[#allocation2 + $0x5c] sm:$0xf]
        %v1422 = vld [vmem:[#allocation2 + $0x60] sm:$0xff]
        %v1423 = vld [vmem:[#allocation2 + $0x68] sm:$0xf]
        %v1424 = vld [vmem:[#allocation2 + $0x6c] sm:$0xff]
        %v1425 = vld [vmem:[#allocation2 + $0x74] sm:$0xf]
        %v1426 = vld [vmem:[#allocation2 + $0x78] sm:$0xff]
        %v1427 = vld [vmem:[#allocation2 + $0x80] sm:$0xf]
        %v1428 = vld [vmem:[#allocation2 + $0x84] sm:$0xff]
        %v1429 = vld [vmem:[#allocation2 + $0x8c] sm:$0xf]
        %v1430 = vld [vmem:[#allocation2 + $0x90] sm:$0xff]
        %v1431 = vld [vmem:[#allocation2 + $0x98] sm:$0xf]
        %v1432 = vld [vmem:[#allocation2 + $0x9c] sm:$0xff]
        %v1433 = vld [vmem:[#allocation2 + $0xa4] sm:$0xf]
        %v1434 = vld [vmem:[#allocation2 + $0xa8] sm:$0xff]
        %v1435 = vld [vmem:[#allocation2 + $0xb0] sm:$0xf]
        %v1436 = vld [vmem:[#allocation2 + $0xb4] sm:$0xff]
        %v1437 = vld [vmem:[#allocation2 + $0xbc] sm:$0xf]
        %v1438 = vld [vmem:[#allocation2 + $0xc0] sm:$0xff]
        %v1439 = vld [vmem:[#allocation2 + $0xc8] sm:$0xf]
        %v1440 = vld [vmem:[#allocation2 + $0xcc] sm:$0xff]
        %v1441 = vld [vmem:[#allocation2 + $0xd4] sm:$0xf]
        %v1442 = vld [vmem:[#allocation2 + $0xd8] sm:$0xff]
        %v1443 = vld [vmem:[#allocation2 + $0xe0] sm:$0xf]
        %v1444 = vld [vmem:[#allocation2 + $0xe4] sm:$0xff]
        %v1445 = vld [vmem:[#allocation2 + $0xec] sm:$0xf]
        %v1446 = vld [vmem:[#allocation2 + $0xf0] sm:$0xff]
        %v1447 = vld [vmem:[#allocation2 + $0xf8] sm:$0xf]
        %v1448 = vld [vmem:[#allocation2 + $0xfc] sm:$0xff]
        %v1449 = vld [vmem:[#allocation2 + $0x104] sm:$0xf]
        %v1450 = vld [vmem:[#allocation2 + $0x108] sm:$0xff]
        %v1451 = vld [vmem:[#allocation2 + $0x110] sm:$0xf]
        %v1452 = vld [vmem:[#allocation2 + $0x114] sm:$0xff]
        %v1453 = vld [vmem:[#allocation2 + $0x11c] sm:$0xf]
        %v1454 = vld [vmem:[#allocation2 + $0x120] sm:$0xff]
        %v1455 = vld [vmem:[#allocation2 + $0x128] sm:$0xf]
        %v1456 = vld [vmem:[#allocation2 + $0x12c] sm:$0xff]
        %v1457 = vld [vmem:[#allocation2 + $0x134] sm:$0xf]
        %v1458 = vld [vmem:[#allocation2 + $0x138] sm:$0xff]
        %v1459 = vld [vmem:[#allocation2 + $0x140] sm:$0xf]
        %v1460 = vld [vmem:[#allocation2 + $0x144] sm:$0xff]
        %v1461 = vld [vmem:[#allocation2 + $0x14c] sm:$0xf]
        %v1462 = vld [vmem:[#allocation2 + $0x150] sm:$0xff]
        %v1463 = vld [vmem:[#allocation2 + $0x158] sm:$0xf]
        %v1464 = vld [vmem:[#allocation2 + $0x15c] sm:$0xff]
        %v1465 = vld [vmem:[#allocation2 + $0x164] sm:$0xf]
        %v1466 = vld [vmem:[#allocation2 + $0x168] sm:$0xff]
        %v1467 = vld [vmem:[#allocation2 + $0x170] sm:$0xf]
        %v1468 = vld [vmem:[#allocation2 + $0x174] sm:$0xff]
        %v1469 = vld [vmem:[#allocation2 + $0x17c] sm:$0xf]
        %v1470 = vld [vmem:[#allocation8] sm:$0xf]
        %v1471 = vld [vmem:[#allocation8 + $0x4] sm:$0xf]
        %v1472 = vld [vmem:[#allocation8 + $0x8] sm:$0xf]
        %v1473 = vld [vmem:[#allocation8 + $0xc] sm:$0xf]
        %v1474 = vld [vmem:[#allocation8 + $0x10] sm:$0xf]
        %v1475 = vld [vmem:[#allocation8 + $0x14] sm:$0xf]
        %v1476 = vld [vmem:[#allocation8 + $0x18] sm:$0xf]
        %v1477 = vld [vmem:[#allocation8 + $0x1c] sm:$0xf]
        %v1478 = vld [vmem:[#allocation8 + $0x20] sm:$0xf]
        %v1479 = vld [vmem:[#allocation8 + $0x24] sm:$0xf]
        %v1480 = vld [vmem:[#allocation8 + $0x28] sm:$0xf]
        %v1481 = vld [vmem:[#allocation8 + $0x2c] sm:$0xf]
        %v1482 = vld [vmem:[#allocation8 + $0x30] sm:$0xf]
        %v1483 = vld [vmem:[#allocation8 + $0x34] sm:$0xf]
        %v1484 = vld [vmem:[#allocation8 + $0x38] sm:$0xf]
        %v1485 = vld [vmem:[#allocation8 + $0x3c] sm:$0xf]
        %v1486 = vld [vmem:[#allocation8 + $0x40] sm:$0xf]
        %v1487 = vld [vmem:[#allocation8 + $0x44] sm:$0xf]
        %v1488 = vld [vmem:[#allocation8 + $0x48] sm:$0xf]
        %v1489 = vld [vmem:[#allocation8 + $0x4c] sm:$0xf]
        %v1490 = vld [vmem:[#allocation8 + $0x50] sm:$0xf]
        %v1491 = vld [vmem:[#allocation8 + $0x54] sm:$0xf]
        %v1492 = vld [vmem:[#allocation8 + $0x58] sm:$0xf]
        %v1493 = vld [vmem:[#allocation8 + $0x5c] sm:$0xf]
        %v1494 = vld [vmem:[#allocation8 + $0x60] sm:$0xf]
        %v1495 = vld [vmem:[#allocation8 + $0x64] sm:$0xf]
        %v1496 = vld [vmem:[#allocation8 + $0x68] sm:$0xf]
        %v1497 = vld [vmem:[#allocation8 + $0x6c] sm:$0xf]
        %v1498 = vld [vmem:[#allocation8 + $0x70] sm:$0xf]
        %v1499 = vld [vmem:[#allocation8 + $0x74] sm:$0xf]
        %v1500 = vld [vmem:[#allocation8 + $0x78] sm:$0xf]
        %v1501 = vld [vmem:[#allocation8 + $0x7c] sm:$0xf]
        %v1502 = vld [vmem:[#allocation8 + $0x80] sm:$0xf]
        %v1503 = vld [vmem:[#allocation8 + $0x84] sm:$0xf]
        %v1504 = vld [vmem:[#allocation8 + $0x88] sm:$0xf]
        %v1505 = vld [vmem:[#allocation8 + $0x8c] sm:$0xf]
        %v1506 = vld [vmem:[#allocation8 + $0x90] sm:$0xf]
        %v1507 = vld [vmem:[#allocation8 + $0x94] sm:$0xf]
        %v1508 = vld [vmem:[#allocation8 + $0x98] sm:$0xf]
        %v1509 = vld [vmem:[#allocation8 + $0x9c] sm:$0xf]
        %v1510 = vld [vmem:[#allocation8 + $0xa0] sm:$0xf]
        %v1511 = vld [vmem:[#allocation8 + $0xa4] sm:$0xf]
        %v1512 = vld [vmem:[#allocation8 + $0xa8] sm:$0xf]
        %v1513 = vld [vmem:[#allocation8 + $0xac] sm:$0xf]
        %v1514 = vld [vmem:[#allocation8 + $0xb0] sm:$0xf]
        %v1515 = vld [vmem:[#allocation8 + $0xb4] sm:$0xf]
        %v1516 = vld [vmem:[#allocation8 + $0xb8] sm:$0xf]
        %v1517 = vld [vmem:[#allocation8 + $0xbc] sm:$0xf]
        %v1518 = vld [vmem:[%s1018] sm:$0xff]
        %v1519 = vld [vmem:[%s1018 + $0x8] sm:$0xf]
        %v1520 = vld [vmem:[%s1018 + $0xc] sm:$0xff]
        %v1521 = vld [vmem:[%s1018 + $0x14] sm:$0xf]
        %v1522 = vld [vmem:[%s1018 + $0x18] sm:$0xff]
        %v1523 = vld [vmem:[%s1018 + $0x20] sm:$0xf]
        %v1524 = vld [vmem:[%s1018 + $0x24] sm:$0xff]
        %v1525 = vld [vmem:[%s1018 + $0x2c] sm:$0xf]
        %v1526 = vld [vmem:[%s1018 + $0x30] sm:$0xff]
        %v1527 = vld [vmem:[%s1018 + $0x38] sm:$0xf]
        %v1528 = vld [vmem:[%s1018 + $0x3c] sm:$0xff]
        %v1529 = vld [vmem:[%s1018 + $0x44] sm:$0xf]
        %v1530 = vld [vmem:[%s1018 + $0x48] sm:$0xff]
        %v1531 = vld [vmem:[%s1018 + $0x50] sm:$0xf]
        %v1532 = vld [vmem:[%s1018 + $0x54] sm:$0xff]
        %v1533 = vld [vmem:[%s1018 + $0x5c] sm:$0xf]
        %v1534 = vld [vmem:[%s1018 + $0x60] sm:$0xff]
        %v1535 = vld [vmem:[%s1018 + $0x68] sm:$0xf]
        %v1536 = vld [vmem:[%s1018 + $0x6c] sm:$0xff]
        %v1537 = vld [vmem:[%s1018 + $0x74] sm:$0xf]
        %v1538 = vld [vmem:[%s1018 + $0x78] sm:$0xff]
        %v1539 = vld [vmem:[%s1018 + $0x80] sm:$0xf]
        %v1540 = vld [vmem:[%s1018 + $0x84] sm:$0xff]
        %v1541 = vld [vmem:[%s1018 + $0x8c] sm:$0xf]
        %v1542 = vld [vmem:[%s1018 + $0x90] sm:$0xff]
        %v1543 = vld [vmem:[%s1018 + $0x98] sm:$0xf]
        %v1544 = vld [vmem:[%s1018 + $0x9c] sm:$0xff]
        %v1545 = vld [vmem:[%s1018 + $0xa4] sm:$0xf]
        %v1546 = vld [vmem:[%s1018 + $0xa8] sm:$0xff]
        %v1547 = vld [vmem:[%s1018 + $0xb0] sm:$0xf]
        %v1548 = vld [vmem:[%s1018 + $0xb4] sm:$0xff]
        %v1549 = vld [vmem:[%s1018 + $0xbc] sm:$0xf]
        %v1550 = vld [vmem:[%s1018 + $0xc0] sm:$0xff]
        %v1551 = vld [vmem:[%s1018 + $0xc8] sm:$0xf]
        %v1552 = vld [vmem:[%s1018 + $0xcc] sm:$0xff]
        %v1553 = vld [vmem:[%s1018 + $0xd4] sm:$0xf]
        %v1554 = vld [vmem:[%s1018 + $0xd8] sm:$0xff]
        %v1555 = vld [vmem:[%s1018 + $0xe0] sm:$0xf]
        %v1556 = vld [vmem:[%s1018 + $0xe4] sm:$0xff]
        %v1557 = vld [vmem:[%s1018 + $0xec] sm:$0xf]
        %v1558 = vld [vmem:[%s1018 + $0xf0] sm:$0xff]
        %v1559 = vld [vmem:[%s1018 + $0xf8] sm:$0xf]
        %v1560 = vld [vmem:[%s1018 + $0xfc] sm:$0xff]
        %v1561 = vld [vmem:[%s1018 + $0x104] sm:$0xf]
        %v1562 = vld [vmem:[%s1018 + $0x108] sm:$0xff]
        %v1563 = vld [vmem:[%s1018 + $0x110] sm:$0xf]
        %v1564 = vld [vmem:[%s1018 + $0x114] sm:$0xff]
        %v1565 = vld [vmem:[%s1018 + $0x11c] sm:$0xf]
        %v1566 = vld [vmem:[%s1018 + $0x120] sm:$0xff]
        %v1567 = vld [vmem:[%s1018 + $0x128] sm:$0xf]
        %v1568 = vld [vmem:[%s1018 + $0x12c] sm:$0xff]
        %v1569 = vld [vmem:[%s1018 + $0x134] sm:$0xf]
        %v1570 = vld [vmem:[%s1018 + $0x138] sm:$0xff]
        %v1571 = vld [vmem:[%s1018 + $0x140] sm:$0xf]
        %v1572 = vld [vmem:[%s1018 + $0x144] sm:$0xff]
        %v1573 = vld [vmem:[%s1018 + $0x14c] sm:$0xf]
        %v1574 = vld [vmem:[%s1018 + $0x150] sm:$0xff]
        %v1575 = vld [vmem:[%s1018 + $0x158] sm:$0xf]
        %v1576 = vld [vmem:[%s1018 + $0x15c] sm:$0xff]
        %v1577 = vld [vmem:[%s1018 + $0x164] sm:$0xf]
        %v1578 = vld [vmem:[%s1018 + $0x168] sm:$0xff]
        %v1579 = vld [vmem:[%s1018 + $0x170] sm:$0xf]
        %v1580 = vld [vmem:[%s1018 + $0x174] sm:$0xff]
        %v1581 = vld [vmem:[%s1018 + $0x17c] sm:$0xf]
        %s1582 = scalar_lea.vmem [#allocation8], 192
        %v1583 = vld [vmem:[%s1582] sm:$0xf]
        %v1584 = vld [vmem:[%s1582 + $0x4] sm:$0xf]
        %v1585 = vld [vmem:[%s1582 + $0x8] sm:$0xf]
        %v1586 = vld [vmem:[%s1582 + $0xc] sm:$0xf]
        %v1587 = vld [vmem:[%s1582 + $0x10] sm:$0xf]
        %v1588 = vld [vmem:[%s1582 + $0x14] sm:$0xf]
        %v1589 = vld [vmem:[%s1582 + $0x18] sm:$0xf]
        %v1590 = vld [vmem:[%s1582 + $0x1c] sm:$0xf]
        %v1591 = vld [vmem:[%s1582 + $0x20] sm:$0xf]
        %v1592 = vld [vmem:[%s1582 + $0x24] sm:$0xf]
        %v1593 = vld [vmem:[%s1582 + $0x28] sm:$0xf]
        %v1594 = vld [vmem:[%s1582 + $0x2c] sm:$0xf]
        %v1595 = vld [vmem:[%s1582 + $0x30] sm:$0xf]
        %v1596 = vld [vmem:[%s1582 + $0x34] sm:$0xf]
        %v1597 = vld [vmem:[%s1582 + $0x38] sm:$0xf]
        %v1598 = vld [vmem:[%s1582 + $0x3c] sm:$0xf]
        %v1599 = vld [vmem:[%s1582 + $0x40] sm:$0xf]
        %v1600 = vld [vmem:[%s1582 + $0x44] sm:$0xf]
        %v1601 = vld [vmem:[%s1582 + $0x48] sm:$0xf]
        %v1602 = vld [vmem:[%s1582 + $0x4c] sm:$0xf]
        %v1603 = vld [vmem:[%s1582 + $0x50] sm:$0xf]
        %v1604 = vld [vmem:[%s1582 + $0x54] sm:$0xf]
        %v1605 = vld [vmem:[%s1582 + $0x58] sm:$0xf]
        %v1606 = vld [vmem:[%s1582 + $0x5c] sm:$0xf]
        %v1607 = vld [vmem:[%s1582 + $0x60] sm:$0xf]
        %v1608 = vld [vmem:[%s1582 + $0x64] sm:$0xf]
        %v1609 = vld [vmem:[%s1582 + $0x68] sm:$0xf]
        %v1610 = vld [vmem:[%s1582 + $0x6c] sm:$0xf]
        %v1611 = vld [vmem:[%s1582 + $0x70] sm:$0xf]
        %v1612 = vld [vmem:[%s1582 + $0x74] sm:$0xf]
        %v1613 = vld [vmem:[%s1582 + $0x78] sm:$0xf]
        %v1614 = vld [vmem:[%s1582 + $0x7c] sm:$0xf]
        %v1615 = vld [vmem:[%s1582 + $0x80] sm:$0xf]
        %v1616 = vld [vmem:[%s1582 + $0x84] sm:$0xf]
        %v1617 = vld [vmem:[%s1582 + $0x88] sm:$0xf]
        %v1618 = vld [vmem:[%s1582 + $0x8c] sm:$0xf]
        %v1619 = vld [vmem:[%s1582 + $0x90] sm:$0xf]
        %v1620 = vld [vmem:[%s1582 + $0x94] sm:$0xf]
        %v1621 = vld [vmem:[%s1582 + $0x98] sm:$0xf]
        %v1622 = vld [vmem:[%s1582 + $0x9c] sm:$0xf]
        %v1623 = vld [vmem:[%s1582 + $0xa0] sm:$0xf]
        %v1624 = vld [vmem:[%s1582 + $0xa4] sm:$0xf]
        %v1625 = vld [vmem:[%s1582 + $0xa8] sm:$0xf]
        %v1626 = vld [vmem:[%s1582 + $0xac] sm:$0xf]
        %v1627 = vld [vmem:[%s1582 + $0xb0] sm:$0xf]
        %v1628 = vld [vmem:[%s1582 + $0xb4] sm:$0xf]
        %v1629 = vld [vmem:[%s1582 + $0xb8] sm:$0xf]
        %v1630 = vld [vmem:[%s1582 + $0xbc] sm:$0xf]
        %v1695 = vunpack.c.l.b16 %v1518
        %v1696 = vunpack.c.h.b16 %v1518
        %v1697 = vunpack.c.l.b16 %v1519
        %v1698 = vunpack.c.l.b16 %v1520
        %v1699 = vunpack.c.h.b16 %v1520
        %v1700 = vunpack.c.l.b16 %v1521
        %v1701 = vunpack.c.l.b16 %v1522
        %v1702 = vunpack.c.h.b16 %v1522
        %v1703 = vunpack.c.l.b16 %v1523
        %v1704 = vunpack.c.l.b16 %v1524
        %v1705 = vunpack.c.h.b16 %v1524
        %v1706 = vunpack.c.l.b16 %v1525
        %v1707 = vunpack.c.l.b16 %v1526
        %v1708 = vunpack.c.h.b16 %v1526
        %v1709 = vunpack.c.l.b16 %v1527
        %v1710 = vunpack.c.l.b16 %v1528
        %v1711 = vunpack.c.h.b16 %v1528
        %v1712 = vunpack.c.l.b16 %v1529
        %v1713 = vunpack.c.l.b16 %v1530
        %v1714 = vunpack.c.h.b16 %v1530
        %v1715 = vunpack.c.l.b16 %v1531
        %v1716 = vunpack.c.l.b16 %v1532
        %v1717 = vunpack.c.h.b16 %v1532
        %v1718 = vunpack.c.l.b16 %v1533
        %v1719 = vunpack.c.l.b16 %v1534
        %v1720 = vunpack.c.h.b16 %v1534
        %v1721 = vunpack.c.l.b16 %v1535
        %v1722 = vunpack.c.l.b16 %v1536
        %v1723 = vunpack.c.h.b16 %v1536
        %v1724 = vunpack.c.l.b16 %v1537
        %v1725 = vunpack.c.l.b16 %v1538
        %v1726 = vunpack.c.h.b16 %v1538
        %v1727 = vunpack.c.l.b16 %v1539
        %v1728 = vunpack.c.l.b16 %v1540
        %v1729 = vunpack.c.h.b16 %v1540
        %v1730 = vunpack.c.l.b16 %v1541
        %v1731 = vunpack.c.l.b16 %v1542
        %v1732 = vunpack.c.h.b16 %v1542
        %v1733 = vunpack.c.l.b16 %v1543
        %v1734 = vunpack.c.l.b16 %v1544
        %v1735 = vunpack.c.h.b16 %v1544
        %v1736 = vunpack.c.l.b16 %v1545
        %v1737 = vunpack.c.l.b16 %v1546
        %v1738 = vunpack.c.h.b16 %v1546
        %v1739 = vunpack.c.l.b16 %v1547
        %v1740 = vunpack.c.l.b16 %v1548
        %v1741 = vunpack.c.h.b16 %v1548
        %v1742 = vunpack.c.l.b16 %v1549
        %v1743 = vunpack.c.l.b16 %v1550
        %v1744 = vunpack.c.h.b16 %v1550
        %v1745 = vunpack.c.l.b16 %v1551
        %v1746 = vunpack.c.l.b16 %v1552
        %v1747 = vunpack.c.h.b16 %v1552
        %v1748 = vunpack.c.l.b16 %v1553
        %v1749 = vunpack.c.l.b16 %v1554
        %v1750 = vunpack.c.h.b16 %v1554
        %v1751 = vunpack.c.l.b16 %v1555
        %v1752 = vunpack.c.l.b16 %v1556
        %v1753 = vunpack.c.h.b16 %v1556
        %v1754 = vunpack.c.l.b16 %v1557
        %v1755 = vunpack.c.l.b16 %v1558
        %v1756 = vunpack.c.h.b16 %v1558
        %v1757 = vunpack.c.l.b16 %v1559
        %v1758 = vunpack.c.l.b16 %v1560
        %v1759 = vunpack.c.h.b16 %v1560
        %v1760 = vunpack.c.l.b16 %v1561
        %v1761 = vunpack.c.l.b16 %v1562
        %v1762 = vunpack.c.h.b16 %v1562
        %v1763 = vunpack.c.l.b16 %v1563
        %v1764 = vunpack.c.l.b16 %v1564
        %v1765 = vunpack.c.h.b16 %v1564
        %v1766 = vunpack.c.l.b16 %v1565
        %v1767 = vunpack.c.l.b16 %v1566
        %v1768 = vunpack.c.h.b16 %v1566
        %v1769 = vunpack.c.l.b16 %v1567
        %v1770 = vunpack.c.l.b16 %v1568
        %v1771 = vunpack.c.h.b16 %v1568
        %v1772 = vunpack.c.l.b16 %v1569
        %v1773 = vunpack.c.l.b16 %v1570
        %v1774 = vunpack.c.h.b16 %v1570
        %v1775 = vunpack.c.l.b16 %v1571
        %v1776 = vunpack.c.l.b16 %v1572
        %v1777 = vunpack.c.h.b16 %v1572
        %v1778 = vunpack.c.l.b16 %v1573
        %v1779 = vunpack.c.l.b16 %v1574
        %v1780 = vunpack.c.h.b16 %v1574
        %v1781 = vunpack.c.l.b16 %v1575
        %v1782 = vunpack.c.l.b16 %v1576
        %v1783 = vunpack.c.h.b16 %v1576
        %v1784 = vunpack.c.l.b16 %v1577
        %v1785 = vunpack.c.l.b16 %v1578
        %v1786 = vunpack.c.h.b16 %v1578
        %v1787 = vunpack.c.l.b16 %v1579
        %v1788 = vunpack.c.l.b16 %v1580
        %v1789 = vunpack.c.h.b16 %v1580
        %v1790 = vunpack.c.l.b16 %v1581
        %v1791 = vpack.c.b16 %v1698, %v1695
        %v1792 = vpack.c.b16 %v1699, %v1696
        %v1793 = vpack.c.b16 %v1700, %v1697
        %v1794 = vpack.c.b16 %v1704, %v1701
        %v1795 = vpack.c.b16 %v1705, %v1702
        %v1796 = vpack.c.b16 %v1706, %v1703
        %v1797 = vpack.c.b16 %v1710, %v1707
        %v1798 = vpack.c.b16 %v1711, %v1708
        %v1799 = vpack.c.b16 %v1712, %v1709
        %v1800 = vpack.c.b16 %v1716, %v1713
        %v1801 = vpack.c.b16 %v1717, %v1714
        %v1802 = vpack.c.b16 %v1718, %v1715
        %v1803 = vpack.c.b16 %v1722, %v1719
        %v1804 = vpack.c.b16 %v1723, %v1720
        %v1805 = vpack.c.b16 %v1724, %v1721
        %v1806 = vpack.c.b16 %v1728, %v1725
        %v1807 = vpack.c.b16 %v1729, %v1726
        %v1808 = vpack.c.b16 %v1730, %v1727
        %v1809 = vpack.c.b16 %v1734, %v1731
        %v1810 = vpack.c.b16 %v1735, %v1732
        %v1811 = vpack.c.b16 %v1736, %v1733
        %v1812 = vpack.c.b16 %v1740, %v1737
        %v1813 = vpack.c.b16 %v1741, %v1738
        %v1814 = vpack.c.b16 %v1742, %v1739
        %v1815 = vpack.c.b16 %v1746, %v1743
        %v1816 = vpack.c.b16 %v1747, %v1744
        %v1817 = vpack.c.b16 %v1748, %v1745
        %v1818 = vpack.c.b16 %v1752, %v1749
        %v1819 = vpack.c.b16 %v1753, %v1750
        %v1820 = vpack.c.b16 %v1754, %v1751
        %v1821 = vpack.c.b16 %v1758, %v1755
        %v1822 = vpack.c.b16 %v1759, %v1756
        %v1823 = vpack.c.b16 %v1760, %v1757
        %v1824 = vpack.c.b16 %v1764, %v1761
        %v1825 = vpack.c.b16 %v1765, %v1762
        %v1826 = vpack.c.b16 %v1766, %v1763
        %v1827 = vpack.c.b16 %v1770, %v1767
        %v1828 = vpack.c.b16 %v1771, %v1768
        %v1829 = vpack.c.b16 %v1772, %v1769
        %v1830 = vpack.c.b16 %v1776, %v1773
        %v1831 = vpack.c.b16 %v1777, %v1774
        %v1832 = vpack.c.b16 %v1778, %v1775
        %v1833 = vpack.c.b16 %v1782, %v1779
        %v1834 = vpack.c.b16 %v1783, %v1780
        %v1835 = vpack.c.b16 %v1784, %v1781
        %v1836 = vpack.c.b16 %v1788, %v1785
        %v1837 = vpack.c.b16 %v1789, %v1786
        %v1838 = vpack.c.b16 %v1790, %v1787
        %v1935 = vunpack.c.l.b16 %v1583
        %v1936 = vunpack.c.l.b16 %v1584
        %v1937 = vunpack.c.l.b16 %v1585
        %v1938 = vunpack.c.l.b16 %v1586
        %v1939 = vunpack.c.l.b16 %v1587
        %v1940 = vunpack.c.l.b16 %v1588
        %v1941 = vunpack.c.l.b16 %v1589
        %v1942 = vunpack.c.l.b16 %v1590
        %v1943 = vunpack.c.l.b16 %v1591
        %v1944 = vunpack.c.l.b16 %v1592
        %v1945 = vunpack.c.l.b16 %v1593
        %v1946 = vunpack.c.l.b16 %v1594
        %v1947 = vunpack.c.l.b16 %v1595
        %v1948 = vunpack.c.l.b16 %v1596
        %v1949 = vunpack.c.l.b16 %v1597
        %v1950 = vunpack.c.l.b16 %v1598
        %v1951 = vunpack.c.l.b16 %v1599
        %v1952 = vunpack.c.l.b16 %v1600
        %v1953 = vunpack.c.l.b16 %v1601
        %v1954 = vunpack.c.l.b16 %v1602
        %v1955 = vunpack.c.l.b16 %v1603
        %v1956 = vunpack.c.l.b16 %v1604
        %v1957 = vunpack.c.l.b16 %v1605
        %v1958 = vunpack.c.l.b16 %v1606
        %v1959 = vunpack.c.l.b16 %v1607
        %v1960 = vunpack.c.l.b16 %v1608
        %v1961 = vunpack.c.l.b16 %v1609
        %v1962 = vunpack.c.l.b16 %v1610
        %v1963 = vunpack.c.l.b16 %v1611
        %v1964 = vunpack.c.l.b16 %v1612
        %v1965 = vunpack.c.l.b16 %v1613
        %v1966 = vunpack.c.l.b16 %v1614
        %v1967 = vunpack.c.l.b16 %v1615
        %v1968 = vunpack.c.l.b16 %v1616
        %v1969 = vunpack.c.l.b16 %v1617
        %v1970 = vunpack.c.l.b16 %v1618
        %v1971 = vunpack.c.l.b16 %v1619
        %v1972 = vunpack.c.l.b16 %v1620
        %v1973 = vunpack.c.l.b16 %v1621
        %v1974 = vunpack.c.l.b16 %v1622
        %v1975 = vunpack.c.l.b16 %v1623
        %v1976 = vunpack.c.l.b16 %v1624
        %v1977 = vunpack.c.l.b16 %v1625
        %v1978 = vunpack.c.l.b16 %v1626
        %v1979 = vunpack.c.l.b16 %v1627
        %v1980 = vunpack.c.l.b16 %v1628
        %v1981 = vunpack.c.l.b16 %v1629
        %v1982 = vunpack.c.l.b16 %v1630
        %v1983 = vpack.c.b16 %v1936, %v1935
        %v1984 = vpack.c.b16 %v1938, %v1937
        %v1985 = vpack.c.b16 %v1940, %v1939
        %v1986 = vpack.c.b16 %v1942, %v1941
        %v1987 = vpack.c.b16 %v1944, %v1943
        %v1988 = vpack.c.b16 %v1946, %v1945
        %v1989 = vpack.c.b16 %v1948, %v1947
        %v1990 = vpack.c.b16 %v1950, %v1949
        %v1991 = vpack.c.b16 %v1952, %v1951
        %v1992 = vpack.c.b16 %v1954, %v1953
        %v1993 = vpack.c.b16 %v1956, %v1955
        %v1994 = vpack.c.b16 %v1958, %v1957
        %v1995 = vpack.c.b16 %v1960, %v1959
        %v1996 = vpack.c.b16 %v1962, %v1961
        %v1997 = vpack.c.b16 %v1964, %v1963
        %v1998 = vpack.c.b16 %v1966, %v1965
        %v1999 = vpack.c.b16 %v1968, %v1967
        %v2000 = vpack.c.b16 %v1970, %v1969
        %v2001 = vpack.c.b16 %v1972, %v1971
        %v2002 = vpack.c.b16 %v1974, %v1973
        %v2003 = vpack.c.b16 %v1976, %v1975
        %v2004 = vpack.c.b16 %v1978, %v1977
        %v2005 = vpack.c.b16 %v1980, %v1979
        %v2006 = vpack.c.b16 %v1982, %v1981
        %2031 = vmatprep.subr.bf16.mxu0 0
        %2032 = vmatpush1.bf16.msra.mxu0 %v1990
        %2033 = vmatprep.subr.bf16.mxu0 0
        %2034 = vmatpush1.bf16.msra.mxu0 %v1989
        %2035 = vmatprep.subr.bf16.mxu0 0
        %2036 = vmatpush1.bf16.msra.mxu0 %v1988
        %2037 = vmatprep.subr.bf16.mxu0 0
        %2038 = vmatpush1.bf16.msra.mxu0 %v1987
        %2039 = vmatprep.subr.bf16.mxu0 0
        %2040 = vmatpush1.bf16.msra.mxu0 %v1986
        %2041 = vmatprep.subr.bf16.mxu0 0
        %2042 = vmatpush1.bf16.msra.mxu0 %v1985
        %2043 = vmatprep.subr.bf16.mxu0 0
        %2044 = vmatpush1.bf16.msra.mxu0 %v1984
        %2045 = vmatprep.subr.bf16.mxu0 0
        %2046 = vmatpush1.bf16.msra.mxu0 %v1983
        %2047 = vmatprep.subr.bf16.mxu0 0
        %2048 = vmatpush2.bf16.msra.mxu0 %v1998
        %2049 = vmatprep.subr.bf16.mxu0 0
        %2050 = vmatpush2.bf16.msra.mxu0 %v1997
        %2051 = vmatprep.subr.bf16.mxu0 0
        %2052 = vmatpush2.bf16.msra.mxu0 %v1996
        %2053 = vmatprep.subr.bf16.mxu0 0
        %2054 = vmatpush2.bf16.msra.mxu0 %v1995
        %2055 = vmatprep.subr.bf16.mxu0 0
        %2056 = vmatpush2.bf16.msra.mxu0 %v1994
        %2057 = vmatprep.subr.bf16.mxu0 0
        %2058 = vmatpush2.bf16.msra.mxu0 %v1993
        %2059 = vmatprep.subr.bf16.mxu0 0
        %2060 = vmatpush2.bf16.msra.mxu0 %v1992
        %2061 = vmatprep.subr.bf16.mxu0 0
        %2062 = vmatpush2.bf16.msra.mxu0 %v1991
        %2063 = vmatprep.mubr.bf16.mxu0 %v1792
        %2064 = vmatmul.mubr.bf16.gmra.mxu0 %v1791
        %v2065 = vpop.f32.mrf.mxu0
        %v2066 = vadd.f32 0.0, %v2065
        %v2067 = vpop.f32.mrf.mxu0
        %v2068 = vpop.f32.mrf.mxu0
        %v2069 = vadd.f32 0.0, %v2068
        %v2070 = vpop.f32.mrf.mxu0
        %2071 = vmatprep.mubr.bf16.mxu0 %v1795
        %2072 = vmatmul.mubr.bf16.gmra.mxu0 %v1794
        %v2073 = vpop.f32.mrf.mxu0
        %v2074 = vadd.f32 0.0, %v2073
        %v2075 = vpop.f32.mrf.mxu0
        %v2076 = vpop.f32.mrf.mxu0
        %v2077 = vadd.f32 0.0, %v2076
        %v2078 = vpop.f32.mrf.mxu0
        %2079 = vmatprep.mubr.bf16.mxu0 %v1798
        %2080 = vmatmul.mubr.bf16.gmra.mxu0 %v1797
        %v2081 = vpop.f32.mrf.mxu0
        %v2082 = vadd.f32 0.0, %v2081
        %v2083 = vpop.f32.mrf.mxu0
        %v2084 = vpop.f32.mrf.mxu0
        %v2085 = vadd.f32 0.0, %v2084
        %v2086 = vpop.f32.mrf.mxu0
        %2087 = vmatprep.mubr.bf16.mxu0 %v1801
        %2088 = vmatmul.mubr.bf16.gmra.mxu0 %v1800
        %v2089 = vpop.f32.mrf.mxu0
        %v2090 = vadd.f32 0.0, %v2089
        %v2091 = vpop.f32.mrf.mxu0
        %v2092 = vpop.f32.mrf.mxu0
        %v2093 = vadd.f32 0.0, %v2092
        %v2094 = vpop.f32.mrf.mxu0
        %2095 = vmatprep.mubr.bf16.mxu0 %v1804
        %2096 = vmatmul.mubr.bf16.gmra.mxu0 %v1803
        %v2097 = vpop.f32.mrf.mxu0
        %v2098 = vadd.f32 0.0, %v2097
        %v2099 = vpop.f32.mrf.mxu0
        %v2100 = vpop.f32.mrf.mxu0
        %v2101 = vadd.f32 0.0, %v2100
        %v2102 = vpop.f32.mrf.mxu0
        %2103 = vmatprep.mubr.bf16.mxu0 %v1807
        %2104 = vmatmul.mubr.bf16.gmra.mxu0 %v1806
        %v2105 = vpop.f32.mrf.mxu0
        %v2106 = vadd.f32 0.0, %v2105
        %v2107 = vpop.f32.mrf.mxu0
        %v2108 = vpop.f32.mrf.mxu0
        %v2109 = vadd.f32 0.0, %v2108
        %v2110 = vpop.f32.mrf.mxu0
        %2111 = vmatprep.mubr.bf16.mxu0 %v1810
        %2112 = vmatmul.mubr.bf16.gmra.mxu0 %v1809
        %v2113 = vpop.f32.mrf.mxu0
        %v2114 = vadd.f32 0.0, %v2113
        %v2115 = vpop.f32.mrf.mxu0
        %v2116 = vpop.f32.mrf.mxu0
        %v2117 = vadd.f32 0.0, %v2116
        %v2118 = vpop.f32.mrf.mxu0
        %2119 = vmatprep.mubr.bf16.mxu0 %v1813
        %2120 = vmatmul.mubr.bf16.gmra.mxu0 %v1812
        %v2121 = vpop.f32.mrf.mxu0
        %v2122 = vadd.f32 0.0, %v2121
        %v2123 = vpop.f32.mrf.mxu0
        %v2124 = vpop.f32.mrf.mxu0
        %v2125 = vadd.f32 0.0, %v2124
        %v2126 = vpop.f32.mrf.mxu0
        %2127 = vmatprep.mubr.bf16.mxu0 %v1816
        %2128 = vmatmul.mubr.bf16.gmra.mxu0 %v1815
        %v2129 = vpop.f32.mrf.mxu0
        %v2130 = vadd.f32 0.0, %v2129
        %v2131 = vpop.f32.mrf.mxu0
        %v2132 = vpop.f32.mrf.mxu0
        %v2133 = vadd.f32 0.0, %v2132
        %v2134 = vpop.f32.mrf.mxu0
        %2135 = vmatprep.mubr.bf16.mxu0 %v1819
        %2136 = vmatmul.mubr.bf16.gmra.mxu0 %v1818
        %v2137 = vpop.f32.mrf.mxu0
        %v2138 = vadd.f32 0.0, %v2137
        %v2139 = vpop.f32.mrf.mxu0
        %v2140 = vpop.f32.mrf.mxu0
        %v2141 = vadd.f32 0.0, %v2140
        %v2142 = vpop.f32.mrf.mxu0
        %2143 = vmatprep.mubr.bf16.mxu0 %v1822
        %2144 = vmatmul.mubr.bf16.gmra.mxu0 %v1821
        %v2145 = vpop.f32.mrf.mxu0
        %v2146 = vadd.f32 0.0, %v2145
        %v2147 = vpop.f32.mrf.mxu0
        %v2148 = vpop.f32.mrf.mxu0
        %v2149 = vadd.f32 0.0, %v2148
        %v2150 = vpop.f32.mrf.mxu0
        %2151 = vmatprep.mubr.bf16.mxu0 %v1825
        %2152 = vmatmul.mubr.bf16.gmra.mxu0 %v1824
        %v2153 = vpop.f32.mrf.mxu0
        %v2154 = vadd.f32 0.0, %v2153
        %v2155 = vpop.f32.mrf.mxu0
        %v2156 = vpop.f32.mrf.mxu0
        %v2157 = vadd.f32 0.0, %v2156
        %v2158 = vpop.f32.mrf.mxu0
        %2159 = vmatprep.mubr.bf16.mxu0 %v1828
        %2160 = vmatmul.mubr.bf16.gmra.mxu0 %v1827
        %v2161 = vpop.f32.mrf.mxu0
        %v2162 = vadd.f32 0.0, %v2161
        %v2163 = vpop.f32.mrf.mxu0
        %v2164 = vpop.f32.mrf.mxu0
        %v2165 = vadd.f32 0.0, %v2164
        %v2166 = vpop.f32.mrf.mxu0
        %2167 = vmatprep.mubr.bf16.mxu0 %v1831
        %2168 = vmatmul.mubr.bf16.gmra.mxu0 %v1830
        %v2169 = vpop.f32.mrf.mxu0
        %v2170 = vadd.f32 0.0, %v2169
        %v2171 = vpop.f32.mrf.mxu0
        %v2172 = vpop.f32.mrf.mxu0
        %v2173 = vadd.f32 0.0, %v2172
        %v2174 = vpop.f32.mrf.mxu0
        %2175 = vmatprep.mubr.bf16.mxu0 %v1834
        %2176 = vmatmul.mubr.bf16.gmra.mxu0 %v1833
        %v2177 = vpop.f32.mrf.mxu0
        %v2178 = vadd.f32 0.0, %v2177
        %v2179 = vpop.f32.mrf.mxu0
        %v2180 = vpop.f32.mrf.mxu0
        %v2181 = vadd.f32 0.0, %v2180
        %v2182 = vpop.f32.mrf.mxu0
        %2183 = vmatprep.mubr.bf16.mxu0 %v1837
        %2184 = vmatmul.mubr.bf16.gmra.mxu0 %v1836
        %v2185 = vpop.f32.mrf.mxu0
        %v2186 = vadd.f32 0.0, %v2185
        %v2187 = vpop.f32.mrf.mxu0
        %v2188 = vpop.f32.mrf.mxu0
        %v2189 = vadd.f32 0.0, %v2188
        %v2190 = vpop.f32.mrf.mxu0
        %2191 = vdwg.mxu0
        %2192 = vmatprep.subr.bf16.mxu0 0
        %2193 = vmatpush1.bf16.msra.mxu0 %v2006
        %2194 = vmatprep.subr.bf16.mxu0 0
        %2195 = vmatpush1.bf16.msra.mxu0 %v2005
        %2196 = vmatprep.subr.bf16.mxu0 0
        %2197 = vmatpush1.bf16.msra.mxu0 %v2004
        %2198 = vmatprep.subr.bf16.mxu0 0
        %2199 = vmatpush1.bf16.msra.mxu0 %v2003
        %2200 = vmatprep.subr.bf16.mxu0 0
        %2201 = vmatpush1.bf16.msra.mxu0 %v2002
        %2202 = vmatprep.subr.bf16.mxu0 0
        %2203 = vmatpush1.bf16.msra.mxu0 %v2001
        %2204 = vmatprep.subr.bf16.mxu0 0
        %2205 = vmatpush1.bf16.msra.mxu0 %v2000
        %2206 = vmatprep.subr.bf16.mxu0 0
        %2207 = vmatpush1.bf16.msra.mxu0 %v1999
        %2208 = vmatprep.subr.bf16.mxu0 0
        %2209 = vmatpush2.bf16.msra.mxu0 0
        %2210 = vmatprep.subr.bf16.mxu0 0
        %2211 = vmatpush2.bf16.msra.mxu0 0
        %2212 = vmatprep.subr.bf16.mxu0 0
        %2213 = vmatpush2.bf16.msra.mxu0 0
        %2214 = vmatprep.subr.bf16.mxu0 0
        %2215 = vmatpush2.bf16.msra.mxu0 0
        %2216 = vmatprep.subr.bf16.mxu0 0
        %2217 = vmatpush2.bf16.msra.mxu0 0
        %2218 = vmatprep.subr.bf16.mxu0 0
        %2219 = vmatpush2.bf16.msra.mxu0 0
        %2220 = vmatprep.subr.bf16.mxu0 0
        %2221 = vmatpush2.bf16.msra.mxu0 0
        %2222 = vmatprep.subr.bf16.mxu0 0
        %2223 = vmatpush2.bf16.msra.mxu0 0
        %2224 = vmatprep.mubr.bf16.mxu0 0
        %2225 = vmatmul.mubr.bf16.gmra.mxu0 %v1793
        %v2226 = vpop.f32.mrf.mxu0
        %v2227 = vadd.f32 %v2066, %v2226
        %v2228 = vpop.f32.mrf.mxu0
        %v2229 = vpop.f32.mrf.mxu0
        %v2230 = vadd.f32 %v2069, %v2229
        %v2231 = vpop.f32.mrf.mxu0
        %2232 = vmatprep.mubr.bf16.mxu0 0
        %2233 = vmatmul.mubr.bf16.gmra.mxu0 %v1796
        %v2234 = vpop.f32.mrf.mxu0
        %v2235 = vadd.f32 %v2074, %v2234
        %v2236 = vpop.f32.mrf.mxu0
        %v2237 = vpop.f32.mrf.mxu0
        %v2238 = vadd.f32 %v2077, %v2237
        %v2239 = vpop.f32.mrf.mxu0
        %2240 = vmatprep.mubr.bf16.mxu0 0
        %2241 = vmatmul.mubr.bf16.gmra.mxu0 %v1799
        %v2242 = vpop.f32.mrf.mxu0
        %v2243 = vadd.f32 %v2082, %v2242
        %v2244 = vpop.f32.mrf.mxu0
        %v2245 = vpop.f32.mrf.mxu0
        %v2246 = vadd.f32 %v2085, %v2245
        %v2247 = vpop.f32.mrf.mxu0
        %2248 = vmatprep.mubr.bf16.mxu0 0
        %2249 = vmatmul.mubr.bf16.gmra.mxu0 %v1802
        %v2250 = vpop.f32.mrf.mxu0
        %v2251 = vadd.f32 %v2090, %v2250
        %v2252 = vpop.f32.mrf.mxu0
        %v2253 = vpop.f32.mrf.mxu0
        %v2254 = vadd.f32 %v2093, %v2253
        %v2255 = vpop.f32.mrf.mxu0
        %2256 = vmatprep.mubr.bf16.mxu0 0
        %2257 = vmatmul.mubr.bf16.gmra.mxu0 %v1805
        %v2258 = vpop.f32.mrf.mxu0
        %v2259 = vadd.f32 %v2098, %v2258
        %v2260 = vpop.f32.mrf.mxu0
        %v2261 = vpop.f32.mrf.mxu0
        %v2262 = vadd.f32 %v2101, %v2261
        %v2263 = vpop.f32.mrf.mxu0
        %2264 = vmatprep.mubr.bf16.mxu0 0
        %2265 = vmatmul.mubr.bf16.gmra.mxu0 %v1808
        %v2266 = vpop.f32.mrf.mxu0
        %v2267 = vadd.f32 %v2106, %v2266
        %v2268 = vpop.f32.mrf.mxu0
        %v2269 = vpop.f32.mrf.mxu0
        %v2270 = vadd.f32 %v2109, %v2269
        %v2271 = vpop.f32.mrf.mxu0
        %2272 = vmatprep.mubr.bf16.mxu0 0
        %2273 = vmatmul.mubr.bf16.gmra.mxu0 %v1811
        %v2274 = vpop.f32.mrf.mxu0
        %v2275 = vadd.f32 %v2114, %v2274
        %v2276 = vpop.f32.mrf.mxu0
        %v2277 = vpop.f32.mrf.mxu0
        %v2278 = vadd.f32 %v2117, %v2277
        %v2279 = vpop.f32.mrf.mxu0
        %2280 = vmatprep.mubr.bf16.mxu0 0
        %2281 = vmatmul.mubr.bf16.gmra.mxu0 %v1814
        %v2282 = vpop.f32.mrf.mxu0
        %v2283 = vadd.f32 %v2122, %v2282
        %v2284 = vpop.f32.mrf.mxu0
        %v2285 = vpop.f32.mrf.mxu0
        %v2286 = vadd.f32 %v2125, %v2285
        %v2287 = vpop.f32.mrf.mxu0
        %2288 = vmatprep.mubr.bf16.mxu0 0
        %2289 = vmatmul.mubr.bf16.gmra.mxu0 %v1817
        %v2290 = vpop.f32.mrf.mxu0
        %v2291 = vadd.f32 %v2130, %v2290
        %v2292 = vpop.f32.mrf.mxu0
        %v2293 = vpop.f32.mrf.mxu0
        %v2294 = vadd.f32 %v2133, %v2293
        %v2295 = vpop.f32.mrf.mxu0
        %2296 = vmatprep.mubr.bf16.mxu0 0
        %2297 = vmatmul.mubr.bf16.gmra.mxu0 %v1820
        %v2298 = vpop.f32.mrf.mxu0
        %v2299 = vadd.f32 %v2138, %v2298
        %v2300 = vpop.f32.mrf.mxu0
        %v2301 = vpop.f32.mrf.mxu0
        %v2302 = vadd.f32 %v2141, %v2301
        %v2303 = vpop.f32.mrf.mxu0
        %2304 = vmatprep.mubr.bf16.mxu0 0
        %2305 = vmatmul.mubr.bf16.gmra.mxu0 %v1823
        %v2306 = vpop.f32.mrf.mxu0
        %v2307 = vadd.f32 %v2146, %v2306
        %v2308 = vpop.f32.mrf.mxu0
        %v2309 = vpop.f32.mrf.mxu0
        %v2310 = vadd.f32 %v2149, %v2309
        %v2311 = vpop.f32.mrf.mxu0
        %2312 = vmatprep.mubr.bf16.mxu0 0
        %2313 = vmatmul.mubr.bf16.gmra.mxu0 %v1826
        %v2314 = vpop.f32.mrf.mxu0
        %v2315 = vadd.f32 %v2154, %v2314
        %v2316 = vpop.f32.mrf.mxu0
        %v2317 = vpop.f32.mrf.mxu0
        %v2318 = vadd.f32 %v2157, %v2317
        %v2319 = vpop.f32.mrf.mxu0
        %2320 = vmatprep.mubr.bf16.mxu0 0
        %2321 = vmatmul.mubr.bf16.gmra.mxu0 %v1829
        %v2322 = vpop.f32.mrf.mxu0
        %v2323 = vadd.f32 %v2162, %v2322
        %v2324 = vpop.f32.mrf.mxu0
        %v2325 = vpop.f32.mrf.mxu0
        %v2326 = vadd.f32 %v2165, %v2325
        %v2327 = vpop.f32.mrf.mxu0
        %2328 = vmatprep.mubr.bf16.mxu0 0
        %2329 = vmatmul.mubr.bf16.gmra.mxu0 %v1832
        %v2330 = vpop.f32.mrf.mxu0
        %v2331 = vadd.f32 %v2170, %v2330
        %v2332 = vpop.f32.mrf.mxu0
        %v2333 = vpop.f32.mrf.mxu0
        %v2334 = vadd.f32 %v2173, %v2333
        %v2335 = vpop.f32.mrf.mxu0
        %2336 = vmatprep.mubr.bf16.mxu0 0
        %2337 = vmatmul.mubr.bf16.gmra.mxu0 %v1835
        %v2338 = vpop.f32.mrf.mxu0
        %v2339 = vadd.f32 %v2178, %v2338
        %v2340 = vpop.f32.mrf.mxu0
        %v2341 = vpop.f32.mrf.mxu0
        %v2342 = vadd.f32 %v2181, %v2341
        %v2343 = vpop.f32.mrf.mxu0
        %2344 = vmatprep.mubr.bf16.mxu0 0
        %2345 = vmatmul.mubr.bf16.gmra.mxu0 %v1838
        %v2346 = vpop.f32.mrf.mxu0
        %v2347 = vadd.f32 %v2186, %v2346
        %v2348 = vpop.f32.mrf.mxu0
        %v2349 = vpop.f32.mrf.mxu0
        %v2350 = vadd.f32 %v2189, %v2349
        %v2351 = vpop.f32.mrf.mxu0
        %2352 = vdwg.mxu0
        %v2417 = vunpack.c.l.b16 %v1406
        %v2418 = vunpack.c.h.b16 %v1406
        %v2419 = vunpack.c.l.b16 %v1407
        %v2420 = vunpack.c.l.b16 %v1408
        %v2421 = vunpack.c.h.b16 %v1408
        %v2422 = vunpack.c.l.b16 %v1409
        %v2423 = vunpack.c.l.b16 %v1410
        %v2424 = vunpack.c.h.b16 %v1410
        %v2425 = vunpack.c.l.b16 %v1411
        %v2426 = vunpack.c.l.b16 %v1412
        %v2427 = vunpack.c.h.b16 %v1412
        %v2428 = vunpack.c.l.b16 %v1413
        %v2429 = vunpack.c.l.b16 %v1414
        %v2430 = vunpack.c.h.b16 %v1414
        %v2431 = vunpack.c.l.b16 %v1415
        %v2432 = vunpack.c.l.b16 %v1416
        %v2433 = vunpack.c.h.b16 %v1416
        %v2434 = vunpack.c.l.b16 %v1417
        %v2435 = vunpack.c.l.b16 %v1418
        %v2436 = vunpack.c.h.b16 %v1418
        %v2437 = vunpack.c.l.b16 %v1419
        %v2438 = vunpack.c.l.b16 %v1420
        %v2439 = vunpack.c.h.b16 %v1420
        %v2440 = vunpack.c.l.b16 %v1421
        %v2441 = vunpack.c.l.b16 %v1422
        %v2442 = vunpack.c.h.b16 %v1422
        %v2443 = vunpack.c.l.b16 %v1423
        %v2444 = vunpack.c.l.b16 %v1424
        %v2445 = vunpack.c.h.b16 %v1424
        %v2446 = vunpack.c.l.b16 %v1425
        %v2447 = vunpack.c.l.b16 %v1426
        %v2448 = vunpack.c.h.b16 %v1426
        %v2449 = vunpack.c.l.b16 %v1427
        %v2450 = vunpack.c.l.b16 %v1428
        %v2451 = vunpack.c.h.b16 %v1428
        %v2452 = vunpack.c.l.b16 %v1429
        %v2453 = vunpack.c.l.b16 %v1430
        %v2454 = vunpack.c.h.b16 %v1430
        %v2455 = vunpack.c.l.b16 %v1431
        %v2456 = vunpack.c.l.b16 %v1432
        %v2457 = vunpack.c.h.b16 %v1432
        %v2458 = vunpack.c.l.b16 %v1433
        %v2459 = vunpack.c.l.b16 %v1434
        %v2460 = vunpack.c.h.b16 %v1434
        %v2461 = vunpack.c.l.b16 %v1435
        %v2462 = vunpack.c.l.b16 %v1436
        %v2463 = vunpack.c.h.b16 %v1436
        %v2464 = vunpack.c.l.b16 %v1437
        %v2465 = vunpack.c.l.b16 %v1438
        %v2466 = vunpack.c.h.b16 %v1438
        %v2467 = vunpack.c.l.b16 %v1439
        %v2468 = vunpack.c.l.b16 %v1440
        %v2469 = vunpack.c.h.b16 %v1440
        %v2470 = vunpack.c.l.b16 %v1441
        %v2471 = vunpack.c.l.b16 %v1442
        %v2472 = vunpack.c.h.b16 %v1442
        %v2473 = vunpack.c.l.b16 %v1443
        %v2474 = vunpack.c.l.b16 %v1444
        %v2475 = vunpack.c.h.b16 %v1444
        %v2476 = vunpack.c.l.b16 %v1445
        %v2477 = vunpack.c.l.b16 %v1446
        %v2478 = vunpack.c.h.b16 %v1446
        %v2479 = vunpack.c.l.b16 %v1447
        %v2480 = vunpack.c.l.b16 %v1448
        %v2481 = vunpack.c.h.b16 %v1448
        %v2482 = vunpack.c.l.b16 %v1449
        %v2483 = vunpack.c.l.b16 %v1450
        %v2484 = vunpack.c.h.b16 %v1450
        %v2485 = vunpack.c.l.b16 %v1451
        %v2486 = vunpack.c.l.b16 %v1452
        %v2487 = vunpack.c.h.b16 %v1452
        %v2488 = vunpack.c.l.b16 %v1453
        %v2489 = vunpack.c.l.b16 %v1454
        %v2490 = vunpack.c.h.b16 %v1454
        %v2491 = vunpack.c.l.b16 %v1455
        %v2492 = vunpack.c.l.b16 %v1456
        %v2493 = vunpack.c.h.b16 %v1456
        %v2494 = vunpack.c.l.b16 %v1457
        %v2495 = vunpack.c.l.b16 %v1458
        %v2496 = vunpack.c.h.b16 %v1458
        %v2497 = vunpack.c.l.b16 %v1459
        %v2498 = vunpack.c.l.b16 %v1460
        %v2499 = vunpack.c.h.b16 %v1460
        %v2500 = vunpack.c.l.b16 %v1461
        %v2501 = vunpack.c.l.b16 %v1462
        %v2502 = vunpack.c.h.b16 %v1462
        %v2503 = vunpack.c.l.b16 %v1463
        %v2504 = vunpack.c.l.b16 %v1464
        %v2505 = vunpack.c.h.b16 %v1464
        %v2506 = vunpack.c.l.b16 %v1465
        %v2507 = vunpack.c.l.b16 %v1466
        %v2508 = vunpack.c.h.b16 %v1466
        %v2509 = vunpack.c.l.b16 %v1467
        %v2510 = vunpack.c.l.b16 %v1468
        %v2511 = vunpack.c.h.b16 %v1468
        %v2512 = vunpack.c.l.b16 %v1469
        %v2513 = vpack.c.b16 %v2420, %v2417
        %v2514 = vpack.c.b16 %v2421, %v2418
        %v2515 = vpack.c.b16 %v2422, %v2419
        %v2516 = vpack.c.b16 %v2426, %v2423
        %v2517 = vpack.c.b16 %v2427, %v2424
        %v2518 = vpack.c.b16 %v2428, %v2425
        %v2519 = vpack.c.b16 %v2432, %v2429
        %v2520 = vpack.c.b16 %v2433, %v2430
        %v2521 = vpack.c.b16 %v2434, %v2431
        %v2522 = vpack.c.b16 %v2438, %v2435
        %v2523 = vpack.c.b16 %v2439, %v2436
        %v2524 = vpack.c.b16 %v2440, %v2437
        %v2525 = vpack.c.b16 %v2444, %v2441
        %v2526 = vpack.c.b16 %v2445, %v2442
        %v2527 = vpack.c.b16 %v2446, %v2443
        %v2528 = vpack.c.b16 %v2450, %v2447
        %v2529 = vpack.c.b16 %v2451, %v2448
        %v2530 = vpack.c.b16 %v2452, %v2449
        %v2531 = vpack.c.b16 %v2456, %v2453
        %v2532 = vpack.c.b16 %v2457, %v2454
        %v2533 = vpack.c.b16 %v2458, %v2455
        %v2534 = vpack.c.b16 %v2462, %v2459
        %v2535 = vpack.c.b16 %v2463, %v2460
        %v2536 = vpack.c.b16 %v2464, %v2461
        %v2537 = vpack.c.b16 %v2468, %v2465
        %v2538 = vpack.c.b16 %v2469, %v2466
        %v2539 = vpack.c.b16 %v2470, %v2467
        %v2540 = vpack.c.b16 %v2474, %v2471
        %v2541 = vpack.c.b16 %v2475, %v2472
        %v2542 = vpack.c.b16 %v2476, %v2473
        %v2543 = vpack.c.b16 %v2480, %v2477
        %v2544 = vpack.c.b16 %v2481, %v2478
        %v2545 = vpack.c.b16 %v2482, %v2479
        %v2546 = vpack.c.b16 %v2486, %v2483
        %v2547 = vpack.c.b16 %v2487, %v2484
        %v2548 = vpack.c.b16 %v2488, %v2485
        %v2549 = vpack.c.b16 %v2492, %v2489
        %v2550 = vpack.c.b16 %v2493, %v2490
        %v2551 = vpack.c.b16 %v2494, %v2491
        %v2552 = vpack.c.b16 %v2498, %v2495
        %v2553 = vpack.c.b16 %v2499, %v2496
        %v2554 = vpack.c.b16 %v2500, %v2497
        %v2555 = vpack.c.b16 %v2504, %v2501
        %v2556 = vpack.c.b16 %v2505, %v2502
        %v2557 = vpack.c.b16 %v2506, %v2503
        %v2558 = vpack.c.b16 %v2510, %v2507
        %v2559 = vpack.c.b16 %v2511, %v2508
        %v2560 = vpack.c.b16 %v2512, %v2509
        %v2657 = vunpack.c.l.b16 %v1470
        %v2658 = vunpack.c.l.b16 %v1471
        %v2659 = vunpack.c.l.b16 %v1472
        %v2660 = vunpack.c.l.b16 %v1473
        %v2661 = vunpack.c.l.b16 %v1474
        %v2662 = vunpack.c.l.b16 %v1475
        %v2663 = vunpack.c.l.b16 %v1476
        %v2664 = vunpack.c.l.b16 %v1477
        %v2665 = vunpack.c.l.b16 %v1478
        %v2666 = vunpack.c.l.b16 %v1479
        %v2667 = vunpack.c.l.b16 %v1480
        %v2668 = vunpack.c.l.b16 %v1481
        %v2669 = vunpack.c.l.b16 %v1482
        %v2670 = vunpack.c.l.b16 %v1483
        %v2671 = vunpack.c.l.b16 %v1484
        %v2672 = vunpack.c.l.b16 %v1485
        %v2673 = vunpack.c.l.b16 %v1486
        %v2674 = vunpack.c.l.b16 %v1487
        %v2675 = vunpack.c.l.b16 %v1488
        %v2676 = vunpack.c.l.b16 %v1489
        %v2677 = vunpack.c.l.b16 %v1490
        %v2678 = vunpack.c.l.b16 %v1491
        %v2679 = vunpack.c.l.b16 %v1492
        %v2680 = vunpack.c.l.b16 %v1493
        %v2681 = vunpack.c.l.b16 %v1494
        %v2682 = vunpack.c.l.b16 %v1495
        %v2683 = vunpack.c.l.b16 %v1496
        %v2684 = vunpack.c.l.b16 %v1497
        %v2685 = vunpack.c.l.b16 %v1498
        %v2686 = vunpack.c.l.b16 %v1499
        %v2687 = vunpack.c.l.b16 %v1500
        %v2688 = vunpack.c.l.b16 %v1501
        %v2689 = vunpack.c.l.b16 %v1502
        %v2690 = vunpack.c.l.b16 %v1503
        %v2691 = vunpack.c.l.b16 %v1504
        %v2692 = vunpack.c.l.b16 %v1505
        %v2693 = vunpack.c.l.b16 %v1506
        %v2694 = vunpack.c.l.b16 %v1507
        %v2695 = vunpack.c.l.b16 %v1508
        %v2696 = vunpack.c.l.b16 %v1509
        %v2697 = vunpack.c.l.b16 %v1510
        %v2698 = vunpack.c.l.b16 %v1511
        %v2699 = vunpack.c.l.b16 %v1512
        %v2700 = vunpack.c.l.b16 %v1513
        %v2701 = vunpack.c.l.b16 %v1514
        %v2702 = vunpack.c.l.b16 %v1515
        %v2703 = vunpack.c.l.b16 %v1516
        %v2704 = vunpack.c.l.b16 %v1517
        %v2705 = vpack.c.b16 %v2658, %v2657
        %v2706 = vpack.c.b16 %v2660, %v2659
        %v2707 = vpack.c.b16 %v2662, %v2661
        %v2708 = vpack.c.b16 %v2664, %v2663
        %v2709 = vpack.c.b16 %v2666, %v2665
        %v2710 = vpack.c.b16 %v2668, %v2667
        %v2711 = vpack.c.b16 %v2670, %v2669
        %v2712 = vpack.c.b16 %v2672, %v2671
        %v2713 = vpack.c.b16 %v2674, %v2673
        %v2714 = vpack.c.b16 %v2676, %v2675
        %v2715 = vpack.c.b16 %v2678, %v2677
        %v2716 = vpack.c.b16 %v2680, %v2679
        %v2717 = vpack.c.b16 %v2682, %v2681
        %v2718 = vpack.c.b16 %v2684, %v2683
        %v2719 = vpack.c.b16 %v2686, %v2685
        %v2720 = vpack.c.b16 %v2688, %v2687
        %v2721 = vpack.c.b16 %v2690, %v2689
        %v2722 = vpack.c.b16 %v2692, %v2691
        %v2723 = vpack.c.b16 %v2694, %v2693
        %v2724 = vpack.c.b16 %v2696, %v2695
        %v2725 = vpack.c.b16 %v2698, %v2697
        %v2726 = vpack.c.b16 %v2700, %v2699
        %v2727 = vpack.c.b16 %v2702, %v2701
        %v2728 = vpack.c.b16 %v2704, %v2703
        %2753 = vmatprep.subr.bf16.mxu0 0
        %2754 = vmatpush1.bf16.msra.mxu0 %v2712
        %2755 = vmatprep.subr.bf16.mxu0 0
        %2756 = vmatpush1.bf16.msra.mxu0 %v2711
        %2757 = vmatprep.subr.bf16.mxu0 0
        %2758 = vmatpush1.bf16.msra.mxu0 %v2710
        %2759 = vmatprep.subr.bf16.mxu0 0
        %2760 = vmatpush1.bf16.msra.mxu0 %v2709
        %2761 = vmatprep.subr.bf16.mxu0 0
        %2762 = vmatpush1.bf16.msra.mxu0 %v2708
        %2763 = vmatprep.subr.bf16.mxu0 0
        %2764 = vmatpush1.bf16.msra.mxu0 %v2707
        %2765 = vmatprep.subr.bf16.mxu0 0
        %2766 = vmatpush1.bf16.msra.mxu0 %v2706
        %2767 = vmatprep.subr.bf16.mxu0 0
        %2768 = vmatpush1.bf16.msra.mxu0 %v2705
        %2769 = vmatprep.subr.bf16.mxu0 0
        %2770 = vmatpush2.bf16.msra.mxu0 %v2720
        %2771 = vmatprep.subr.bf16.mxu0 0
        %2772 = vmatpush2.bf16.msra.mxu0 %v2719
        %2773 = vmatprep.subr.bf16.mxu0 0
        %2774 = vmatpush2.bf16.msra.mxu0 %v2718
        %2775 = vmatprep.subr.bf16.mxu0 0
        %2776 = vmatpush2.bf16.msra.mxu0 %v2717
        %2777 = vmatprep.subr.bf16.mxu0 0
        %2778 = vmatpush2.bf16.msra.mxu0 %v2716
        %2779 = vmatprep.subr.bf16.mxu0 0
        %2780 = vmatpush2.bf16.msra.mxu0 %v2715
        %2781 = vmatprep.subr.bf16.mxu0 0
        %2782 = vmatpush2.bf16.msra.mxu0 %v2714
        %2783 = vmatprep.subr.bf16.mxu0 0
        %2784 = vmatpush2.bf16.msra.mxu0 %v2713
        %2785 = vmatprep.mubr.bf16.mxu0 %v2514
        %2786 = vmatmul.mubr.bf16.gmra.mxu0 %v2513
        %v2787 = vpop.f32.mrf.mxu0
        %v2788 = vadd.f32 %v2227, %v2787
        %v2789 = vpop.f32.mrf.mxu0
        %v2790 = vpop.f32.mrf.mxu0
        %v2791 = vadd.f32 %v2230, %v2790
        %v2792 = vpop.f32.mrf.mxu0
        %2793 = vmatprep.mubr.bf16.mxu0 %v2517
        %2794 = vmatmul.mubr.bf16.gmra.mxu0 %v2516
        %v2795 = vpop.f32.mrf.mxu0
        %v2796 = vadd.f32 %v2235, %v2795
        %v2797 = vpop.f32.mrf.mxu0
        %v2798 = vpop.f32.mrf.mxu0
        %v2799 = vadd.f32 %v2238, %v2798
        %v2800 = vpop.f32.mrf.mxu0
        %2801 = vmatprep.mubr.bf16.mxu0 %v2520
        %2802 = vmatmul.mubr.bf16.gmra.mxu0 %v2519
        %v2803 = vpop.f32.mrf.mxu0
        %v2804 = vadd.f32 %v2243, %v2803
        %v2805 = vpop.f32.mrf.mxu0
        %v2806 = vpop.f32.mrf.mxu0
        %v2807 = vadd.f32 %v2246, %v2806
        %v2808 = vpop.f32.mrf.mxu0
        %2809 = vmatprep.mubr.bf16.mxu0 %v2523
        %2810 = vmatmul.mubr.bf16.gmra.mxu0 %v2522
        %v2811 = vpop.f32.mrf.mxu0
        %v2812 = vadd.f32 %v2251, %v2811
        %v2813 = vpop.f32.mrf.mxu0
        %v2814 = vpop.f32.mrf.mxu0
        %v2815 = vadd.f32 %v2254, %v2814
        %v2816 = vpop.f32.mrf.mxu0
        %2817 = vmatprep.mubr.bf16.mxu0 %v2526
        %2818 = vmatmul.mubr.bf16.gmra.mxu0 %v2525
        %v2819 = vpop.f32.mrf.mxu0
        %v2820 = vadd.f32 %v2259, %v2819
        %v2821 = vpop.f32.mrf.mxu0
        %v2822 = vpop.f32.mrf.mxu0
        %v2823 = vadd.f32 %v2262, %v2822
        %v2824 = vpop.f32.mrf.mxu0
        %2825 = vmatprep.mubr.bf16.mxu0 %v2529
        %2826 = vmatmul.mubr.bf16.gmra.mxu0 %v2528
        %v2827 = vpop.f32.mrf.mxu0
        %v2828 = vadd.f32 %v2267, %v2827
        %v2829 = vpop.f32.mrf.mxu0
        %v2830 = vpop.f32.mrf.mxu0
        %v2831 = vadd.f32 %v2270, %v2830
        %v2832 = vpop.f32.mrf.mxu0
        %2833 = vmatprep.mubr.bf16.mxu0 %v2532
        %2834 = vmatmul.mubr.bf16.gmra.mxu0 %v2531
        %v2835 = vpop.f32.mrf.mxu0
        %v2836 = vadd.f32 %v2275, %v2835
        %v2837 = vpop.f32.mrf.mxu0
        %v2838 = vpop.f32.mrf.mxu0
        %v2839 = vadd.f32 %v2278, %v2838
        %v2840 = vpop.f32.mrf.mxu0
        %2841 = vmatprep.mubr.bf16.mxu0 %v2535
        %2842 = vmatmul.mubr.bf16.gmra.mxu0 %v2534
        %v2843 = vpop.f32.mrf.mxu0
        %v2844 = vadd.f32 %v2283, %v2843
        %v2845 = vpop.f32.mrf.mxu0
        %v2846 = vpop.f32.mrf.mxu0
        %v2847 = vadd.f32 %v2286, %v2846
        %v2848 = vpop.f32.mrf.mxu0
        %2849 = vmatprep.mubr.bf16.mxu0 %v2538
        %2850 = vmatmul.mubr.bf16.gmra.mxu0 %v2537
        %v2851 = vpop.f32.mrf.mxu0
        %v2852 = vadd.f32 %v2291, %v2851
        %v2853 = vpop.f32.mrf.mxu0
        %v2854 = vpop.f32.mrf.mxu0
        %v2855 = vadd.f32 %v2294, %v2854
        %v2856 = vpop.f32.mrf.mxu0
        %2857 = vmatprep.mubr.bf16.mxu0 %v2541
        %2858 = vmatmul.mubr.bf16.gmra.mxu0 %v2540
        %v2859 = vpop.f32.mrf.mxu0
        %v2860 = vadd.f32 %v2299, %v2859
        %v2861 = vpop.f32.mrf.mxu0
        %v2862 = vpop.f32.mrf.mxu0
        %v2863 = vadd.f32 %v2302, %v2862
        %v2864 = vpop.f32.mrf.mxu0
        %2865 = vmatprep.mubr.bf16.mxu0 %v2544
        %2866 = vmatmul.mubr.bf16.gmra.mxu0 %v2543
        %v2867 = vpop.f32.mrf.mxu0
        %v2868 = vadd.f32 %v2307, %v2867
        %v2869 = vpop.f32.mrf.mxu0
        %v2870 = vpop.f32.mrf.mxu0
        %v2871 = vadd.f32 %v2310, %v2870
        %v2872 = vpop.f32.mrf.mxu0
        %2873 = vmatprep.mubr.bf16.mxu0 %v2547
        %2874 = vmatmul.mubr.bf16.gmra.mxu0 %v2546
        %v2875 = vpop.f32.mrf.mxu0
        %v2876 = vadd.f32 %v2315, %v2875
        %v2877 = vpop.f32.mrf.mxu0
        %v2878 = vpop.f32.mrf.mxu0
        %v2879 = vadd.f32 %v2318, %v2878
        %v2880 = vpop.f32.mrf.mxu0
        %2881 = vmatprep.mubr.bf16.mxu0 %v2550
        %2882 = vmatmul.mubr.bf16.gmra.mxu0 %v2549
        %v2883 = vpop.f32.mrf.mxu0
        %v2884 = vadd.f32 %v2323, %v2883
        %v2885 = vpop.f32.mrf.mxu0
        %v2886 = vpop.f32.mrf.mxu0
        %v2887 = vadd.f32 %v2326, %v2886
        %v2888 = vpop.f32.mrf.mxu0
        %2889 = vmatprep.mubr.bf16.mxu0 %v2553
        %2890 = vmatmul.mubr.bf16.gmra.mxu0 %v2552
        %v2891 = vpop.f32.mrf.mxu0
        %v2892 = vadd.f32 %v2331, %v2891
        %v2893 = vpop.f32.mrf.mxu0
        %v2894 = vpop.f32.mrf.mxu0
        %v2895 = vadd.f32 %v2334, %v2894
        %v2896 = vpop.f32.mrf.mxu0
        %2897 = vmatprep.mubr.bf16.mxu0 %v2556
        %2898 = vmatmul.mubr.bf16.gmra.mxu0 %v2555
        %v2899 = vpop.f32.mrf.mxu0
        %v2900 = vadd.f32 %v2339, %v2899
        %v2901 = vpop.f32.mrf.mxu0
        %v2902 = vpop.f32.mrf.mxu0
        %v2903 = vadd.f32 %v2342, %v2902
        %v2904 = vpop.f32.mrf.mxu0
        %2905 = vmatprep.mubr.bf16.mxu0 %v2559
        %2906 = vmatmul.mubr.bf16.gmra.mxu0 %v2558
        %v2907 = vpop.f32.mrf.mxu0
        %v2908 = vadd.f32 %v2347, %v2907
        %v2909 = vpop.f32.mrf.mxu0
        %v2910 = vpop.f32.mrf.mxu0
        %v2911 = vadd.f32 %v2350, %v2910
        %v2912 = vpop.f32.mrf.mxu0
        %2913 = vdwg.mxu0
        %2914 = vmatprep.subr.bf16.mxu0 0
        %2915 = vmatpush1.bf16.msra.mxu0 %v2728
        %2916 = vmatprep.subr.bf16.mxu0 0
        %2917 = vmatpush1.bf16.msra.mxu0 %v2727
        %2918 = vmatprep.subr.bf16.mxu0 0
        %2919 = vmatpush1.bf16.msra.mxu0 %v2726
        %2920 = vmatprep.subr.bf16.mxu0 0
        %2921 = vmatpush1.bf16.msra.mxu0 %v2725
        %2922 = vmatprep.subr.bf16.mxu0 0
        %2923 = vmatpush1.bf16.msra.mxu0 %v2724
        %2924 = vmatprep.subr.bf16.mxu0 0
        %2925 = vmatpush1.bf16.msra.mxu0 %v2723
        %2926 = vmatprep.subr.bf16.mxu0 0
        %2927 = vmatpush1.bf16.msra.mxu0 %v2722
        %2928 = vmatprep.subr.bf16.mxu0 0
        %2929 = vmatpush1.bf16.msra.mxu0 %v2721
        %2930 = vmatprep.subr.bf16.mxu0 0
        %2931 = vmatpush2.bf16.msra.mxu0 0
        %2932 = vmatprep.subr.bf16.mxu0 0
        %2933 = vmatpush2.bf16.msra.mxu0 0
        %2934 = vmatprep.subr.bf16.mxu0 0
        %2935 = vmatpush2.bf16.msra.mxu0 0
        %2936 = vmatprep.subr.bf16.mxu0 0
        %2937 = vmatpush2.bf16.msra.mxu0 0
        %2938 = vmatprep.subr.bf16.mxu0 0
        %2939 = vmatpush2.bf16.msra.mxu0 0
        %2940 = vmatprep.subr.bf16.mxu0 0
        %2941 = vmatpush2.bf16.msra.mxu0 0
        %2942 = vmatprep.subr.bf16.mxu0 0
        %2943 = vmatpush2.bf16.msra.mxu0 0
        %2944 = vmatprep.subr.bf16.mxu0 0
        %2945 = vmatpush2.bf16.msra.mxu0 0
        %2946 = vmatprep.mubr.bf16.mxu0 0
        %2947 = vmatmul.mubr.bf16.gmra.mxu0 %v2515
        %v2948 = vpop.f32.mrf.mxu0
        %v2949 = vadd.f32 %v2788, %v2948
        %v2950 = vpop.f32.mrf.mxu0
        %v2951 = vpop.f32.mrf.mxu0
        %v2952 = vadd.f32 %v2791, %v2951
        %v2953 = vpop.f32.mrf.mxu0
        %2954 = vmatprep.mubr.bf16.mxu0 0
        %2955 = vmatmul.mubr.bf16.gmra.mxu0 %v2518
        %v2956 = vpop.f32.mrf.mxu0
        %v2957 = vadd.f32 %v2796, %v2956
        %v2958 = vpop.f32.mrf.mxu0
        %v2959 = vpop.f32.mrf.mxu0
        %v2960 = vadd.f32 %v2799, %v2959
        %v2961 = vpop.f32.mrf.mxu0
        %2962 = vmatprep.mubr.bf16.mxu0 0
        %2963 = vmatmul.mubr.bf16.gmra.mxu0 %v2521
        %v2964 = vpop.f32.mrf.mxu0
        %v2965 = vadd.f32 %v2804, %v2964
        %v2966 = vpop.f32.mrf.mxu0
        %v2967 = vpop.f32.mrf.mxu0
        %v2968 = vadd.f32 %v2807, %v2967
        %v2969 = vpop.f32.mrf.mxu0
        %2970 = vmatprep.mubr.bf16.mxu0 0
        %2971 = vmatmul.mubr.bf16.gmra.mxu0 %v2524
        %v2972 = vpop.f32.mrf.mxu0
        %v2973 = vadd.f32 %v2812, %v2972
        %v2974 = vpop.f32.mrf.mxu0
        %v2975 = vpop.f32.mrf.mxu0
        %v2976 = vadd.f32 %v2815, %v2975
        %v2977 = vpop.f32.mrf.mxu0
        %2978 = vmatprep.mubr.bf16.mxu0 0
        %2979 = vmatmul.mubr.bf16.gmra.mxu0 %v2527
        %v2980 = vpop.f32.mrf.mxu0
        %v2981 = vadd.f32 %v2820, %v2980
        %v2982 = vpop.f32.mrf.mxu0
        %v2983 = vpop.f32.mrf.mxu0
        %v2984 = vadd.f32 %v2823, %v2983
        %v2985 = vpop.f32.mrf.mxu0
        %2986 = vmatprep.mubr.bf16.mxu0 0
        %2987 = vmatmul.mubr.bf16.gmra.mxu0 %v2530
        %v2988 = vpop.f32.mrf.mxu0
        %v2989 = vadd.f32 %v2828, %v2988
        %v2990 = vpop.f32.mrf.mxu0
        %v2991 = vpop.f32.mrf.mxu0
        %v2992 = vadd.f32 %v2831, %v2991
        %v2993 = vpop.f32.mrf.mxu0
        %2994 = vmatprep.mubr.bf16.mxu0 0
        %2995 = vmatmul.mubr.bf16.gmra.mxu0 %v2533
        %v2996 = vpop.f32.mrf.mxu0
        %v2997 = vadd.f32 %v2836, %v2996
        %v2998 = vpop.f32.mrf.mxu0
        %v2999 = vpop.f32.mrf.mxu0
        %v3000 = vadd.f32 %v2839, %v2999
        %v3001 = vpop.f32.mrf.mxu0
        %3002 = vmatprep.mubr.bf16.mxu0 0
        %3003 = vmatmul.mubr.bf16.gmra.mxu0 %v2536
        %v3004 = vpop.f32.mrf.mxu0
        %v3005 = vadd.f32 %v2844, %v3004
        %v3006 = vpop.f32.mrf.mxu0
        %v3007 = vpop.f32.mrf.mxu0
        %v3008 = vadd.f32 %v2847, %v3007
        %v3009 = vpop.f32.mrf.mxu0
        %3010 = vmatprep.mubr.bf16.mxu0 0
        %3011 = vmatmul.mubr.bf16.gmra.mxu0 %v2539
        %v3012 = vpop.f32.mrf.mxu0
        %v3013 = vadd.f32 %v2852, %v3012
        %v3014 = vpop.f32.mrf.mxu0
        %v3015 = vpop.f32.mrf.mxu0
        %v3016 = vadd.f32 %v2855, %v3015
        %v3017 = vpop.f32.mrf.mxu0
        %3018 = vmatprep.mubr.bf16.mxu0 0
        %3019 = vmatmul.mubr.bf16.gmra.mxu0 %v2542
        %v3020 = vpop.f32.mrf.mxu0
        %v3021 = vadd.f32 %v2860, %v3020
        %v3022 = vpop.f32.mrf.mxu0
        %v3023 = vpop.f32.mrf.mxu0
        %v3024 = vadd.f32 %v2863, %v3023
        %v3025 = vpop.f32.mrf.mxu0
        %3026 = vmatprep.mubr.bf16.mxu0 0
        %3027 = vmatmul.mubr.bf16.gmra.mxu0 %v2545
        %v3028 = vpop.f32.mrf.mxu0
        %v3029 = vadd.f32 %v2868, %v3028
        %v3030 = vpop.f32.mrf.mxu0
        %v3031 = vpop.f32.mrf.mxu0
        %v3032 = vadd.f32 %v2871, %v3031
        %v3033 = vpop.f32.mrf.mxu0
        %3034 = vmatprep.mubr.bf16.mxu0 0
        %3035 = vmatmul.mubr.bf16.gmra.mxu0 %v2548
        %v3036 = vpop.f32.mrf.mxu0
        %v3037 = vadd.f32 %v2876, %v3036
        %v3038 = vpop.f32.mrf.mxu0
        %v3039 = vpop.f32.mrf.mxu0
        %v3040 = vadd.f32 %v2879, %v3039
        %v3041 = vpop.f32.mrf.mxu0
        %3042 = vmatprep.mubr.bf16.mxu0 0
        %3043 = vmatmul.mubr.bf16.gmra.mxu0 %v2551
        %v3044 = vpop.f32.mrf.mxu0
        %v3045 = vadd.f32 %v2884, %v3044
        %v3046 = vpop.f32.mrf.mxu0
        %v3047 = vpop.f32.mrf.mxu0
        %v3048 = vadd.f32 %v2887, %v3047
        %v3049 = vpop.f32.mrf.mxu0
        %3050 = vmatprep.mubr.bf16.mxu0 0
        %3051 = vmatmul.mubr.bf16.gmra.mxu0 %v2554
        %v3052 = vpop.f32.mrf.mxu0
        %v3053 = vadd.f32 %v2892, %v3052
        %v3054 = vpop.f32.mrf.mxu0
        %v3055 = vpop.f32.mrf.mxu0
        %v3056 = vadd.f32 %v2895, %v3055
        %v3057 = vpop.f32.mrf.mxu0
        %3058 = vmatprep.mubr.bf16.mxu0 0
        %3059 = vmatmul.mubr.bf16.gmra.mxu0 %v2557
        %v3060 = vpop.f32.mrf.mxu0
        %v3061 = vadd.f32 %v2900, %v3060
        %v3062 = vpop.f32.mrf.mxu0
        %v3063 = vpop.f32.mrf.mxu0
        %v3064 = vadd.f32 %v2903, %v3063
        %v3065 = vpop.f32.mrf.mxu0
        %3066 = vmatprep.mubr.bf16.mxu0 0
        %3067 = vmatmul.mubr.bf16.gmra.mxu0 %v2560
        %v3068 = vpop.f32.mrf.mxu0
        %v3069 = vadd.f32 %v2908, %v3068
        %v3070 = vpop.f32.mrf.mxu0
        %v3071 = vpop.f32.mrf.mxu0
        %v3072 = vadd.f32 %v2911, %v3071
        %v3073 = vpop.f32.mrf.mxu0
        %3074 = vdwg.mxu0
        %s3075 = scalar_lea.vmem [#allocation2], 48
        %v3076 = vld [vmem:[%s3075] sm:$0xff]
        %v3077 = vld [vmem:[%s3075 + $0x8] sm:$0xf]
        %v3078 = vld [vmem:[%s3075 + $0xc] sm:$0xff]
        %v3079 = vld [vmem:[%s3075 + $0x14] sm:$0xf]
        %v3080 = vld [vmem:[%s3075 + $0x18] sm:$0xff]
        %v3081 = vld [vmem:[%s3075 + $0x20] sm:$0xf]
        %v3082 = vld [vmem:[%s3075 + $0x24] sm:$0xff]
        %v3083 = vld [vmem:[%s3075 + $0x2c] sm:$0xf]
        %v3084 = vld [vmem:[%s3075 + $0x30] sm:$0xff]
        %v3085 = vld [vmem:[%s3075 + $0x38] sm:$0xf]
        %v3086 = vld [vmem:[%s3075 + $0x3c] sm:$0xff]
        %v3087 = vld [vmem:[%s3075 + $0x44] sm:$0xf]
        %v3088 = vld [vmem:[%s3075 + $0x48] sm:$0xff]
        %v3089 = vld [vmem:[%s3075 + $0x50] sm:$0xf]
        %v3090 = vld [vmem:[%s3075 + $0x54] sm:$0xff]
        %v3091 = vld [vmem:[%s3075 + $0x5c] sm:$0xf]
        %v3092 = vld [vmem:[%s3075 + $0x60] sm:$0xff]
        %v3093 = vld [vmem:[%s3075 + $0x68] sm:$0xf]
        %v3094 = vld [vmem:[%s3075 + $0x6c] sm:$0xff]
        %v3095 = vld [vmem:[%s3075 + $0x74] sm:$0xf]
        %v3096 = vld [vmem:[%s3075 + $0x78] sm:$0xff]
        %v3097 = vld [vmem:[%s3075 + $0x80] sm:$0xf]
        %v3098 = vld [vmem:[%s3075 + $0x84] sm:$0xff]
        %v3099 = vld [vmem:[%s3075 + $0x8c] sm:$0xf]
        %v3100 = vld [vmem:[%s3075 + $0x90] sm:$0xff]
        %v3101 = vld [vmem:[%s3075 + $0x98] sm:$0xf]
        %v3102 = vld [vmem:[%s3075 + $0x9c] sm:$0xff]
        %v3103 = vld [vmem:[%s3075 + $0xa4] sm:$0xf]
        %v3104 = vld [vmem:[%s3075 + $0xa8] sm:$0xff]
        %v3105 = vld [vmem:[%s3075 + $0xb0] sm:$0xf]
        %v3106 = vld [vmem:[%s3075 + $0xb4] sm:$0xff]
        %v3107 = vld [vmem:[%s3075 + $0xbc] sm:$0xf]
        %v3108 = vld [vmem:[%s3075 + $0xc0] sm:$0xff]
        %v3109 = vld [vmem:[%s3075 + $0xc8] sm:$0xf]
        %v3110 = vld [vmem:[%s3075 + $0xcc] sm:$0xff]
        %v3111 = vld [vmem:[%s3075 + $0xd4] sm:$0xf]
        %v3112 = vld [vmem:[%s3075 + $0xd8] sm:$0xff]
        %v3113 = vld [vmem:[%s3075 + $0xe0] sm:$0xf]
        %v3114 = vld [vmem:[%s3075 + $0xe4] sm:$0xff]
        %v3115 = vld [vmem:[%s3075 + $0xec] sm:$0xf]
        %v3116 = vld [vmem:[%s3075 + $0xf0] sm:$0xff]
        %v3117 = vld [vmem:[%s3075 + $0xf8] sm:$0xf]
        %v3118 = vld [vmem:[%s3075 + $0xfc] sm:$0xff]
        %v3119 = vld [vmem:[%s3075 + $0x104] sm:$0xf]
        %v3120 = vld [vmem:[%s3075 + $0x108] sm:$0xff]
        %v3121 = vld [vmem:[%s3075 + $0x110] sm:$0xf]
        %v3122 = vld [vmem:[%s3075 + $0x114] sm:$0xff]
        %v3123 = vld [vmem:[%s3075 + $0x11c] sm:$0xf]
        %v3124 = vld [vmem:[%s3075 + $0x120] sm:$0xff]
        %v3125 = vld [vmem:[%s3075 + $0x128] sm:$0xf]
        %v3126 = vld [vmem:[%s3075 + $0x12c] sm:$0xff]
        %v3127 = vld [vmem:[%s3075 + $0x134] sm:$0xf]
        %v3128 = vld [vmem:[%s3075 + $0x138] sm:$0xff]
        %v3129 = vld [vmem:[%s3075 + $0x140] sm:$0xf]
        %v3130 = vld [vmem:[%s3075 + $0x144] sm:$0xff]
        %v3131 = vld [vmem:[%s3075 + $0x14c] sm:$0xf]
        %v3132 = vld [vmem:[%s3075 + $0x150] sm:$0xff]
        %v3133 = vld [vmem:[%s3075 + $0x158] sm:$0xf]
        %v3134 = vld [vmem:[%s3075 + $0x15c] sm:$0xff]
        %v3135 = vld [vmem:[%s3075 + $0x164] sm:$0xf]
        %v3136 = vld [vmem:[%s3075 + $0x168] sm:$0xff]
        %v3137 = vld [vmem:[%s3075 + $0x170] sm:$0xf]
        %v3138 = vld [vmem:[%s3075 + $0x174] sm:$0xff]
        %v3139 = vld [vmem:[%s3075 + $0x17c] sm:$0xf]
        %s3140 = scalar_lea.vmem [#allocation8], 384
        %v3141 = vld [vmem:[%s3140] sm:$0xf]
        %v3142 = vld [vmem:[%s3140 + $0x4] sm:$0xf]
        %v3143 = vld [vmem:[%s3140 + $0x8] sm:$0xf]
        %v3144 = vld [vmem:[%s3140 + $0xc] sm:$0xf]
        %v3145 = vld [vmem:[%s3140 + $0x10] sm:$0xf]
        %v3146 = vld [vmem:[%s3140 + $0x14] sm:$0xf]
        %v3147 = vld [vmem:[%s3140 + $0x18] sm:$0xf]
        %v3148 = vld [vmem:[%s3140 + $0x1c] sm:$0xf]
        %v3149 = vld [vmem:[%s3140 + $0x20] sm:$0xf]
        %v3150 = vld [vmem:[%s3140 + $0x24] sm:$0xf]
        %v3151 = vld [vmem:[%s3140 + $0x28] sm:$0xf]
        %v3152 = vld [vmem:[%s3140 + $0x2c] sm:$0xf]
        %v3153 = vld [vmem:[%s3140 + $0x30] sm:$0xf]
        %v3154 = vld [vmem:[%s3140 + $0x34] sm:$0xf]
        %v3155 = vld [vmem:[%s3140 + $0x38] sm:$0xf]
        %v3156 = vld [vmem:[%s3140 + $0x3c] sm:$0xf]
        %v3157 = vld [vmem:[%s3140 + $0x40] sm:$0xf]
        %v3158 = vld [vmem:[%s3140 + $0x44] sm:$0xf]
        %v3159 = vld [vmem:[%s3140 + $0x48] sm:$0xf]
        %v3160 = vld [vmem:[%s3140 + $0x4c] sm:$0xf]
        %v3161 = vld [vmem:[%s3140 + $0x50] sm:$0xf]
        %v3162 = vld [vmem:[%s3140 + $0x54] sm:$0xf]
        %v3163 = vld [vmem:[%s3140 + $0x58] sm:$0xf]
        %v3164 = vld [vmem:[%s3140 + $0x5c] sm:$0xf]
        %v3165 = vld [vmem:[%s3140 + $0x60] sm:$0xf]
        %v3166 = vld [vmem:[%s3140 + $0x64] sm:$0xf]
        %v3167 = vld [vmem:[%s3140 + $0x68] sm:$0xf]
        %v3168 = vld [vmem:[%s3140 + $0x6c] sm:$0xf]
        %v3169 = vld [vmem:[%s3140 + $0x70] sm:$0xf]
        %v3170 = vld [vmem:[%s3140 + $0x74] sm:$0xf]
        %v3171 = vld [vmem:[%s3140 + $0x78] sm:$0xf]
        %v3172 = vld [vmem:[%s3140 + $0x7c] sm:$0xf]
        %v3173 = vld [vmem:[%s3140 + $0x80] sm:$0xf]
        %v3174 = vld [vmem:[%s3140 + $0x84] sm:$0xf]
        %v3175 = vld [vmem:[%s3140 + $0x88] sm:$0xf]
        %v3176 = vld [vmem:[%s3140 + $0x8c] sm:$0xf]
        %v3177 = vld [vmem:[%s3140 + $0x90] sm:$0xf]
        %v3178 = vld [vmem:[%s3140 + $0x94] sm:$0xf]
        %v3179 = vld [vmem:[%s3140 + $0x98] sm:$0xf]
        %v3180 = vld [vmem:[%s3140 + $0x9c] sm:$0xf]
        %v3181 = vld [vmem:[%s3140 + $0xa0] sm:$0xf]
        %v3182 = vld [vmem:[%s3140 + $0xa4] sm:$0xf]
        %v3183 = vld [vmem:[%s3140 + $0xa8] sm:$0xf]
        %v3184 = vld [vmem:[%s3140 + $0xac] sm:$0xf]
        %v3185 = vld [vmem:[%s3140 + $0xb0] sm:$0xf]
        %v3186 = vld [vmem:[%s3140 + $0xb4] sm:$0xf]
        %v3187 = vld [vmem:[%s3140 + $0xb8] sm:$0xf]
        %v3188 = vld [vmem:[%s3140 + $0xbc] sm:$0xf]
        %v3253 = vunpack.c.l.b16 %v3076
        %v3254 = vunpack.c.h.b16 %v3076
        %v3255 = vunpack.c.l.b16 %v3077
        %v3256 = vunpack.c.l.b16 %v3078
        %v3257 = vunpack.c.h.b16 %v3078
        %v3258 = vunpack.c.l.b16 %v3079
        %v3259 = vunpack.c.l.b16 %v3080
        %v3260 = vunpack.c.h.b16 %v3080
        %v3261 = vunpack.c.l.b16 %v3081
        %v3262 = vunpack.c.l.b16 %v3082
        %v3263 = vunpack.c.h.b16 %v3082
        %v3264 = vunpack.c.l.b16 %v3083
        %v3265 = vunpack.c.l.b16 %v3084
        %v3266 = vunpack.c.h.b16 %v3084
        %v3267 = vunpack.c.l.b16 %v3085
        %v3268 = vunpack.c.l.b16 %v3086
        %v3269 = vunpack.c.h.b16 %v3086
        %v3270 = vunpack.c.l.b16 %v3087
        %v3271 = vunpack.c.l.b16 %v3088
        %v3272 = vunpack.c.h.b16 %v3088
        %v3273 = vunpack.c.l.b16 %v3089
        %v3274 = vunpack.c.l.b16 %v3090
        %v3275 = vunpack.c.h.b16 %v3090
        %v3276 = vunpack.c.l.b16 %v3091
        %v3277 = vunpack.c.l.b16 %v3092
        %v3278 = vunpack.c.h.b16 %v3092
        %v3279 = vunpack.c.l.b16 %v3093
        %v3280 = vunpack.c.l.b16 %v3094
        %v3281 = vunpack.c.h.b16 %v3094
        %v3282 = vunpack.c.l.b16 %v3095
        %v3283 = vunpack.c.l.b16 %v3096
        %v3284 = vunpack.c.h.b16 %v3096
        %v3285 = vunpack.c.l.b16 %v3097
        %v3286 = vunpack.c.l.b16 %v3098
        %v3287 = vunpack.c.h.b16 %v3098
        %v3288 = vunpack.c.l.b16 %v3099
        %v3289 = vunpack.c.l.b16 %v3100
        %v3290 = vunpack.c.h.b16 %v3100
        %v3291 = vunpack.c.l.b16 %v3101
        %v3292 = vunpack.c.l.b16 %v3102
        %v3293 = vunpack.c.h.b16 %v3102
        %v3294 = vunpack.c.l.b16 %v3103
        %v3295 = vunpack.c.l.b16 %v3104
        %v3296 = vunpack.c.h.b16 %v3104
        %v3297 = vunpack.c.l.b16 %v3105
        %v3298 = vunpack.c.l.b16 %v3106
        %v3299 = vunpack.c.h.b16 %v3106
        %v3300 = vunpack.c.l.b16 %v3107
        %v3301 = vunpack.c.l.b16 %v3108
        %v3302 = vunpack.c.h.b16 %v3108
        %v3303 = vunpack.c.l.b16 %v3109
        %v3304 = vunpack.c.l.b16 %v3110
        %v3305 = vunpack.c.h.b16 %v3110
        %v3306 = vunpack.c.l.b16 %v3111
        %v3307 = vunpack.c.l.b16 %v3112
        %v3308 = vunpack.c.h.b16 %v3112
        %v3309 = vunpack.c.l.b16 %v3113
        %v3310 = vunpack.c.l.b16 %v3114
        %v3311 = vunpack.c.h.b16 %v3114
        %v3312 = vunpack.c.l.b16 %v3115
        %v3313 = vunpack.c.l.b16 %v3116
        %v3314 = vunpack.c.h.b16 %v3116
        %v3315 = vunpack.c.l.b16 %v3117
        %v3316 = vunpack.c.l.b16 %v3118
        %v3317 = vunpack.c.h.b16 %v3118
        %v3318 = vunpack.c.l.b16 %v3119
        %v3319 = vunpack.c.l.b16 %v3120
        %v3320 = vunpack.c.h.b16 %v3120
        %v3321 = vunpack.c.l.b16 %v3121
        %v3322 = vunpack.c.l.b16 %v3122
        %v3323 = vunpack.c.h.b16 %v3122
        %v3324 = vunpack.c.l.b16 %v3123
        %v3325 = vunpack.c.l.b16 %v3124
        %v3326 = vunpack.c.h.b16 %v3124
        %v3327 = vunpack.c.l.b16 %v3125
        %v3328 = vunpack.c.l.b16 %v3126
        %v3329 = vunpack.c.h.b16 %v3126
        %v3330 = vunpack.c.l.b16 %v3127
        %v3331 = vunpack.c.l.b16 %v3128
        %v3332 = vunpack.c.h.b16 %v3128
        %v3333 = vunpack.c.l.b16 %v3129
        %v3334 = vunpack.c.l.b16 %v3130
        %v3335 = vunpack.c.h.b16 %v3130
        %v3336 = vunpack.c.l.b16 %v3131
        %v3337 = vunpack.c.l.b16 %v3132
        %v3338 = vunpack.c.h.b16 %v3132
        %v3339 = vunpack.c.l.b16 %v3133
        %v3340 = vunpack.c.l.b16 %v3134
        %v3341 = vunpack.c.h.b16 %v3134
        %v3342 = vunpack.c.l.b16 %v3135
        %v3343 = vunpack.c.l.b16 %v3136
        %v3344 = vunpack.c.h.b16 %v3136
        %v3345 = vunpack.c.l.b16 %v3137
        %v3346 = vunpack.c.l.b16 %v3138
        %v3347 = vunpack.c.h.b16 %v3138
        %v3348 = vunpack.c.l.b16 %v3139
        %v3349 = vpack.c.b16 %v3256, %v3253
        %v3350 = vpack.c.b16 %v3257, %v3254
        %v3351 = vpack.c.b16 %v3258, %v3255
        %v3352 = vpack.c.b16 %v3262, %v3259
        %v3353 = vpack.c.b16 %v3263, %v3260
        %v3354 = vpack.c.b16 %v3264, %v3261
        %v3355 = vpack.c.b16 %v3268, %v3265
        %v3356 = vpack.c.b16 %v3269, %v3266
        %v3357 = vpack.c.b16 %v3270, %v3267
        %v3358 = vpack.c.b16 %v3274, %v3271
        %v3359 = vpack.c.b16 %v3275, %v3272
        %v3360 = vpack.c.b16 %v3276, %v3273
        %v3361 = vpack.c.b16 %v3280, %v3277
        %v3362 = vpack.c.b16 %v3281, %v3278
        %v3363 = vpack.c.b16 %v3282, %v3279
        %v3364 = vpack.c.b16 %v3286, %v3283
        %v3365 = vpack.c.b16 %v3287, %v3284
        %v3366 = vpack.c.b16 %v3288, %v3285
        %v3367 = vpack.c.b16 %v3292, %v3289
        %v3368 = vpack.c.b16 %v3293, %v3290
        %v3369 = vpack.c.b16 %v3294, %v3291
        %v3370 = vpack.c.b16 %v3298, %v3295
        %v3371 = vpack.c.b16 %v3299, %v3296
        %v3372 = vpack.c.b16 %v3300, %v3297
        %v3373 = vpack.c.b16 %v3304, %v3301
        %v3374 = vpack.c.b16 %v3305, %v3302
        %v3375 = vpack.c.b16 %v3306, %v3303
        %v3376 = vpack.c.b16 %v3310, %v3307
        %v3377 = vpack.c.b16 %v3311, %v3308
        %v3378 = vpack.c.b16 %v3312, %v3309
        %v3379 = vpack.c.b16 %v3316, %v3313
        %v3380 = vpack.c.b16 %v3317, %v3314
        %v3381 = vpack.c.b16 %v3318, %v3315
        %v3382 = vpack.c.b16 %v3322, %v3319
        %v3383 = vpack.c.b16 %v3323, %v3320
        %v3384 = vpack.c.b16 %v3324, %v3321
        %v3385 = vpack.c.b16 %v3328, %v3325
        %v3386 = vpack.c.b16 %v3329, %v3326
        %v3387 = vpack.c.b16 %v3330, %v3327
        %v3388 = vpack.c.b16 %v3334, %v3331
        %v3389 = vpack.c.b16 %v3335, %v3332
        %v3390 = vpack.c.b16 %v3336, %v3333
        %v3391 = vpack.c.b16 %v3340, %v3337
        %v3392 = vpack.c.b16 %v3341, %v3338
        %v3393 = vpack.c.b16 %v3342, %v3339
        %v3394 = vpack.c.b16 %v3346, %v3343
        %v3395 = vpack.c.b16 %v3347, %v3344
        %v3396 = vpack.c.b16 %v3348, %v3345
        %v3493 = vunpack.c.l.b16 %v3141
        %v3494 = vunpack.c.l.b16 %v3142
        %v3495 = vunpack.c.l.b16 %v3143
        %v3496 = vunpack.c.l.b16 %v3144
        %v3497 = vunpack.c.l.b16 %v3145
        %v3498 = vunpack.c.l.b16 %v3146
        %v3499 = vunpack.c.l.b16 %v3147
        %v3500 = vunpack.c.l.b16 %v3148
        %v3501 = vunpack.c.l.b16 %v3149
        %v3502 = vunpack.c.l.b16 %v3150
        %v3503 = vunpack.c.l.b16 %v3151
        %v3504 = vunpack.c.l.b16 %v3152
        %v3505 = vunpack.c.l.b16 %v3153
        %v3506 = vunpack.c.l.b16 %v3154
        %v3507 = vunpack.c.l.b16 %v3155
        %v3508 = vunpack.c.l.b16 %v3156
        %v3509 = vunpack.c.l.b16 %v3157
        %v3510 = vunpack.c.l.b16 %v3158
        %v3511 = vunpack.c.l.b16 %v3159
        %v3512 = vunpack.c.l.b16 %v3160
        %v3513 = vunpack.c.l.b16 %v3161
        %v3514 = vunpack.c.l.b16 %v3162
        %v3515 = vunpack.c.l.b16 %v3163
        %v3516 = vunpack.c.l.b16 %v3164
        %v3517 = vunpack.c.l.b16 %v3165
        %v3518 = vunpack.c.l.b16 %v3166
        %v3519 = vunpack.c.l.b16 %v3167
        %v3520 = vunpack.c.l.b16 %v3168
        %v3521 = vunpack.c.l.b16 %v3169
        %v3522 = vunpack.c.l.b16 %v3170
        %v3523 = vunpack.c.l.b16 %v3171
        %v3524 = vunpack.c.l.b16 %v3172
        %v3525 = vunpack.c.l.b16 %v3173
        %v3526 = vunpack.c.l.b16 %v3174
        %v3527 = vunpack.c.l.b16 %v3175
        %v3528 = vunpack.c.l.b16 %v3176
        %v3529 = vunpack.c.l.b16 %v3177
        %v3530 = vunpack.c.l.b16 %v3178
        %v3531 = vunpack.c.l.b16 %v3179
        %v3532 = vunpack.c.l.b16 %v3180
        %v3533 = vunpack.c.l.b16 %v3181
        %v3534 = vunpack.c.l.b16 %v3182
        %v3535 = vunpack.c.l.b16 %v3183
        %v3536 = vunpack.c.l.b16 %v3184
        %v3537 = vunpack.c.l.b16 %v3185
        %v3538 = vunpack.c.l.b16 %v3186
        %v3539 = vunpack.c.l.b16 %v3187
        %v3540 = vunpack.c.l.b16 %v3188
        %v3541 = vpack.c.b16 %v3494, %v3493
        %v3542 = vpack.c.b16 %v3496, %v3495
        %v3543 = vpack.c.b16 %v3498, %v3497
        %v3544 = vpack.c.b16 %v3500, %v3499
        %v3545 = vpack.c.b16 %v3502, %v3501
        %v3546 = vpack.c.b16 %v3504, %v3503
        %v3547 = vpack.c.b16 %v3506, %v3505
        %v3548 = vpack.c.b16 %v3508, %v3507
        %v3549 = vpack.c.b16 %v3510, %v3509
        %v3550 = vpack.c.b16 %v3512, %v3511
        %v3551 = vpack.c.b16 %v3514, %v3513
        %v3552 = vpack.c.b16 %v3516, %v3515
        %v3553 = vpack.c.b16 %v3518, %v3517
        %v3554 = vpack.c.b16 %v3520, %v3519
        %v3555 = vpack.c.b16 %v3522, %v3521
        %v3556 = vpack.c.b16 %v3524, %v3523
        %v3557 = vpack.c.b16 %v3526, %v3525
        %v3558 = vpack.c.b16 %v3528, %v3527
        %v3559 = vpack.c.b16 %v3530, %v3529
        %v3560 = vpack.c.b16 %v3532, %v3531
        %v3561 = vpack.c.b16 %v3534, %v3533
        %v3562 = vpack.c.b16 %v3536, %v3535
        %v3563 = vpack.c.b16 %v3538, %v3537
        %v3564 = vpack.c.b16 %v3540, %v3539
        %3589 = vmatprep.subr.bf16.mxu0 0
        %3590 = vmatpush1.bf16.msra.mxu0 %v3548
        %3591 = vmatprep.subr.bf16.mxu0 0
        %3592 = vmatpush1.bf16.msra.mxu0 %v3547
        %3593 = vmatprep.subr.bf16.mxu0 0
        %3594 = vmatpush1.bf16.msra.mxu0 %v3546
        %3595 = vmatprep.subr.bf16.mxu0 0
        %3596 = vmatpush1.bf16.msra.mxu0 %v3545
        %3597 = vmatprep.subr.bf16.mxu0 0
        %3598 = vmatpush1.bf16.msra.mxu0 %v3544
        %3599 = vmatprep.subr.bf16.mxu0 0
        %3600 = vmatpush1.bf16.msra.mxu0 %v3543
        %3601 = vmatprep.subr.bf16.mxu0 0
        %3602 = vmatpush1.bf16.msra.mxu0 %v3542
        %3603 = vmatprep.subr.bf16.mxu0 0
        %3604 = vmatpush1.bf16.msra.mxu0 %v3541
        %3605 = vmatprep.subr.bf16.mxu0 0
        %3606 = vmatpush2.bf16.msra.mxu0 %v3556
        %3607 = vmatprep.subr.bf16.mxu0 0
        %3608 = vmatpush2.bf16.msra.mxu0 %v3555
        %3609 = vmatprep.subr.bf16.mxu0 0
        %3610 = vmatpush2.bf16.msra.mxu0 %v3554
        %3611 = vmatprep.subr.bf16.mxu0 0
        %3612 = vmatpush2.bf16.msra.mxu0 %v3553
        %3613 = vmatprep.subr.bf16.mxu0 0
        %3614 = vmatpush2.bf16.msra.mxu0 %v3552
        %3615 = vmatprep.subr.bf16.mxu0 0
        %3616 = vmatpush2.bf16.msra.mxu0 %v3551
        %3617 = vmatprep.subr.bf16.mxu0 0
        %3618 = vmatpush2.bf16.msra.mxu0 %v3550
        %3619 = vmatprep.subr.bf16.mxu0 0
        %3620 = vmatpush2.bf16.msra.mxu0 %v3549
        %3621 = vmatprep.mubr.bf16.mxu0 %v3350
        %3622 = vmatmul.mubr.bf16.gmra.mxu0 %v3349
        %v3623 = vpop.f32.mrf.mxu0
        %v3624 = vadd.f32 0.0, %v3623
        %v3625 = vpop.f32.mrf.mxu0
        %v3626 = vpop.f32.mrf.mxu0
        %v3627 = vadd.f32 0.0, %v3626
        %v3628 = vpop.f32.mrf.mxu0
        %3629 = vmatprep.mubr.bf16.mxu0 %v3353
        %3630 = vmatmul.mubr.bf16.gmra.mxu0 %v3352
        %v3631 = vpop.f32.mrf.mxu0
        %v3632 = vadd.f32 0.0, %v3631
        %v3633 = vpop.f32.mrf.mxu0
        %v3634 = vpop.f32.mrf.mxu0
        %v3635 = vadd.f32 0.0, %v3634
        %v3636 = vpop.f32.mrf.mxu0
        %3637 = vmatprep.mubr.bf16.mxu0 %v3356
        %3638 = vmatmul.mubr.bf16.gmra.mxu0 %v3355
        %v3639 = vpop.f32.mrf.mxu0
        %v3640 = vadd.f32 0.0, %v3639
        %v3641 = vpop.f32.mrf.mxu0
        %v3642 = vpop.f32.mrf.mxu0
        %v3643 = vadd.f32 0.0, %v3642
        %v3644 = vpop.f32.mrf.mxu0
        %3645 = vmatprep.mubr.bf16.mxu0 %v3359
        %3646 = vmatmul.mubr.bf16.gmra.mxu0 %v3358
        %v3647 = vpop.f32.mrf.mxu0
        %v3648 = vadd.f32 0.0, %v3647
        %v3649 = vpop.f32.mrf.mxu0
        %v3650 = vpop.f32.mrf.mxu0
        %v3651 = vadd.f32 0.0, %v3650
        %v3652 = vpop.f32.mrf.mxu0
        %3653 = vmatprep.mubr.bf16.mxu0 %v3362
        %3654 = vmatmul.mubr.bf16.gmra.mxu0 %v3361
        %v3655 = vpop.f32.mrf.mxu0
        %v3656 = vadd.f32 0.0, %v3655
        %v3657 = vpop.f32.mrf.mxu0
        %v3658 = vpop.f32.mrf.mxu0
        %v3659 = vadd.f32 0.0, %v3658
        %v3660 = vpop.f32.mrf.mxu0
        %3661 = vmatprep.mubr.bf16.mxu0 %v3365
        %3662 = vmatmul.mubr.bf16.gmra.mxu0 %v3364
        %v3663 = vpop.f32.mrf.mxu0
        %v3664 = vadd.f32 0.0, %v3663
        %v3665 = vpop.f32.mrf.mxu0
        %v3666 = vpop.f32.mrf.mxu0
        %v3667 = vadd.f32 0.0, %v3666
        %v3668 = vpop.f32.mrf.mxu0
        %3669 = vmatprep.mubr.bf16.mxu0 %v3368
        %3670 = vmatmul.mubr.bf16.gmra.mxu0 %v3367
        %v3671 = vpop.f32.mrf.mxu0
        %v3672 = vadd.f32 0.0, %v3671
        %v3673 = vpop.f32.mrf.mxu0
        %v3674 = vpop.f32.mrf.mxu0
        %v3675 = vadd.f32 0.0, %v3674
        %v3676 = vpop.f32.mrf.mxu0
        %3677 = vmatprep.mubr.bf16.mxu0 %v3371
        %3678 = vmatmul.mubr.bf16.gmra.mxu0 %v3370
        %v3679 = vpop.f32.mrf.mxu0
        %v3680 = vadd.f32 0.0, %v3679
        %v3681 = vpop.f32.mrf.mxu0
        %v3682 = vpop.f32.mrf.mxu0
        %v3683 = vadd.f32 0.0, %v3682
        %v3684 = vpop.f32.mrf.mxu0
        %3685 = vmatprep.mubr.bf16.mxu0 %v3374
        %3686 = vmatmul.mubr.bf16.gmra.mxu0 %v3373
        %v3687 = vpop.f32.mrf.mxu0
        %v3688 = vadd.f32 0.0, %v3687
        %v3689 = vpop.f32.mrf.mxu0
        %v3690 = vpop.f32.mrf.mxu0
        %v3691 = vadd.f32 0.0, %v3690
        %v3692 = vpop.f32.mrf.mxu0
        %3693 = vmatprep.mubr.bf16.mxu0 %v3377
        %3694 = vmatmul.mubr.bf16.gmra.mxu0 %v3376
        %v3695 = vpop.f32.mrf.mxu0
        %v3696 = vadd.f32 0.0, %v3695
        %v3697 = vpop.f32.mrf.mxu0
        %v3698 = vpop.f32.mrf.mxu0
        %v3699 = vadd.f32 0.0, %v3698
        %v3700 = vpop.f32.mrf.mxu0
        %3701 = vmatprep.mubr.bf16.mxu0 %v3380
        %3702 = vmatmul.mubr.bf16.gmra.mxu0 %v3379
        %v3703 = vpop.f32.mrf.mxu0
        %v3704 = vadd.f32 0.0, %v3703
        %v3705 = vpop.f32.mrf.mxu0
        %v3706 = vpop.f32.mrf.mxu0
        %v3707 = vadd.f32 0.0, %v3706
        %v3708 = vpop.f32.mrf.mxu0
        %3709 = vmatprep.mubr.bf16.mxu0 %v3383
        %3710 = vmatmul.mubr.bf16.gmra.mxu0 %v3382
        %v3711 = vpop.f32.mrf.mxu0
        %v3712 = vadd.f32 0.0, %v3711
        %v3713 = vpop.f32.mrf.mxu0
        %v3714 = vpop.f32.mrf.mxu0
        %v3715 = vadd.f32 0.0, %v3714
        %v3716 = vpop.f32.mrf.mxu0
        %3717 = vmatprep.mubr.bf16.mxu0 %v3386
        %3718 = vmatmul.mubr.bf16.gmra.mxu0 %v3385
        %v3719 = vpop.f32.mrf.mxu0
        %v3720 = vadd.f32 0.0, %v3719
        %v3721 = vpop.f32.mrf.mxu0
        %v3722 = vpop.f32.mrf.mxu0
        %v3723 = vadd.f32 0.0, %v3722
        %v3724 = vpop.f32.mrf.mxu0
        %3725 = vmatprep.mubr.bf16.mxu0 %v3389
        %3726 = vmatmul.mubr.bf16.gmra.mxu0 %v3388
        %v3727 = vpop.f32.mrf.mxu0
        %v3728 = vadd.f32 0.0, %v3727
        %v3729 = vpop.f32.mrf.mxu0
        %v3730 = vpop.f32.mrf.mxu0
        %v3731 = vadd.f32 0.0, %v3730
        %v3732 = vpop.f32.mrf.mxu0
        %3733 = vmatprep.mubr.bf16.mxu0 %v3392
        %3734 = vmatmul.mubr.bf16.gmra.mxu0 %v3391
        %v3735 = vpop.f32.mrf.mxu0
        %v3736 = vadd.f32 0.0, %v3735
        %v3737 = vpop.f32.mrf.mxu0
        %v3738 = vpop.f32.mrf.mxu0
        %v3739 = vadd.f32 0.0, %v3738
        %v3740 = vpop.f32.mrf.mxu0
        %3741 = vmatprep.mubr.bf16.mxu0 %v3395
        %3742 = vmatmul.mubr.bf16.gmra.mxu0 %v3394
        %v3743 = vpop.f32.mrf.mxu0
        %v3744 = vadd.f32 0.0, %v3743
        %v3745 = vpop.f32.mrf.mxu0
        %v3746 = vpop.f32.mrf.mxu0
        %v3747 = vadd.f32 0.0, %v3746
        %v3748 = vpop.f32.mrf.mxu0
        %3749 = vdwg.mxu0
        %3750 = vmatprep.subr.bf16.mxu0 0
        %3751 = vmatpush1.bf16.msra.mxu0 %v3564
        %3752 = vmatprep.subr.bf16.mxu0 0
        %3753 = vmatpush1.bf16.msra.mxu0 %v3563
        %3754 = vmatprep.subr.bf16.mxu0 0
        %3755 = vmatpush1.bf16.msra.mxu0 %v3562
        %3756 = vmatprep.subr.bf16.mxu0 0
        %3757 = vmatpush1.bf16.msra.mxu0 %v3561
        %3758 = vmatprep.subr.bf16.mxu0 0
        %3759 = vmatpush1.bf16.msra.mxu0 %v3560
        %3760 = vmatprep.subr.bf16.mxu0 0
        %3761 = vmatpush1.bf16.msra.mxu0 %v3559
        %3762 = vmatprep.subr.bf16.mxu0 0
        %3763 = vmatpush1.bf16.msra.mxu0 %v3558
        %3764 = vmatprep.subr.bf16.mxu0 0
        %3765 = vmatpush1.bf16.msra.mxu0 %v3557
        %3766 = vmatprep.subr.bf16.mxu0 0
        %3767 = vmatpush2.bf16.msra.mxu0 0
        %3768 = vmatprep.subr.bf16.mxu0 0
        %3769 = vmatpush2.bf16.msra.mxu0 0
        %3770 = vmatprep.subr.bf16.mxu0 0
        %3771 = vmatpush2.bf16.msra.mxu0 0
        %3772 = vmatprep.subr.bf16.mxu0 0
        %3773 = vmatpush2.bf16.msra.mxu0 0
        %3774 = vmatprep.subr.bf16.mxu0 0
        %3775 = vmatpush2.bf16.msra.mxu0 0
        %3776 = vmatprep.subr.bf16.mxu0 0
        %3777 = vmatpush2.bf16.msra.mxu0 0
        %3778 = vmatprep.subr.bf16.mxu0 0
        %3779 = vmatpush2.bf16.msra.mxu0 0
        %3780 = vmatprep.subr.bf16.mxu0 0
        %3781 = vmatpush2.bf16.msra.mxu0 0
        %3782 = vmatprep.mubr.bf16.mxu0 0
        %3783 = vmatmul.mubr.bf16.gmra.mxu0 %v3351
        %v3784 = vpop.f32.mrf.mxu0
        %v3785 = vadd.f32 %v3624, %v3784
        %v3786 = vpop.f32.mrf.mxu0
        %v3787 = vpop.f32.mrf.mxu0
        %v3788 = vadd.f32 %v3627, %v3787
        %v3789 = vpop.f32.mrf.mxu0
        %3790 = vmatprep.mubr.bf16.mxu0 0
        %3791 = vmatmul.mubr.bf16.gmra.mxu0 %v3354
        %v3792 = vpop.f32.mrf.mxu0
        %v3793 = vadd.f32 %v3632, %v3792
        %v3794 = vpop.f32.mrf.mxu0
        %v3795 = vpop.f32.mrf.mxu0
        %v3796 = vadd.f32 %v3635, %v3795
        %v3797 = vpop.f32.mrf.mxu0
        %3798 = vmatprep.mubr.bf16.mxu0 0
        %3799 = vmatmul.mubr.bf16.gmra.mxu0 %v3357
        %v3800 = vpop.f32.mrf.mxu0
        %v3801 = vadd.f32 %v3640, %v3800
        %v3802 = vpop.f32.mrf.mxu0
        %v3803 = vpop.f32.mrf.mxu0
        %v3804 = vadd.f32 %v3643, %v3803
        %v3805 = vpop.f32.mrf.mxu0
        %3806 = vmatprep.mubr.bf16.mxu0 0
        %3807 = vmatmul.mubr.bf16.gmra.mxu0 %v3360
        %v3808 = vpop.f32.mrf.mxu0
        %v3809 = vadd.f32 %v3648, %v3808
        %v3810 = vpop.f32.mrf.mxu0
        %v3811 = vpop.f32.mrf.mxu0
        %v3812 = vadd.f32 %v3651, %v3811
        %v3813 = vpop.f32.mrf.mxu0
        %3814 = vmatprep.mubr.bf16.mxu0 0
        %3815 = vmatmul.mubr.bf16.gmra.mxu0 %v3363
        %v3816 = vpop.f32.mrf.mxu0
        %v3817 = vadd.f32 %v3656, %v3816
        %v3818 = vpop.f32.mrf.mxu0
        %v3819 = vpop.f32.mrf.mxu0
        %v3820 = vadd.f32 %v3659, %v3819
        %v3821 = vpop.f32.mrf.mxu0
        %3822 = vmatprep.mubr.bf16.mxu0 0
        %3823 = vmatmul.mubr.bf16.gmra.mxu0 %v3366
        %v3824 = vpop.f32.mrf.mxu0
        %v3825 = vadd.f32 %v3664, %v3824
        %v3826 = vpop.f32.mrf.mxu0
        %v3827 = vpop.f32.mrf.mxu0
        %v3828 = vadd.f32 %v3667, %v3827
        %v3829 = vpop.f32.mrf.mxu0
        %3830 = vmatprep.mubr.bf16.mxu0 0
        %3831 = vmatmul.mubr.bf16.gmra.mxu0 %v3369
        %v3832 = vpop.f32.mrf.mxu0
        %v3833 = vadd.f32 %v3672, %v3832
        %v3834 = vpop.f32.mrf.mxu0
        %v3835 = vpop.f32.mrf.mxu0
        %v3836 = vadd.f32 %v3675, %v3835
        %v3837 = vpop.f32.mrf.mxu0
        %3838 = vmatprep.mubr.bf16.mxu0 0
        %3839 = vmatmul.mubr.bf16.gmra.mxu0 %v3372
        %v3840 = vpop.f32.mrf.mxu0
        %v3841 = vadd.f32 %v3680, %v3840
        %v3842 = vpop.f32.mrf.mxu0
        %v3843 = vpop.f32.mrf.mxu0
        %v3844 = vadd.f32 %v3683, %v3843
        %v3845 = vpop.f32.mrf.mxu0
        %3846 = vmatprep.mubr.bf16.mxu0 0
        %3847 = vmatmul.mubr.bf16.gmra.mxu0 %v3375
        %v3848 = vpop.f32.mrf.mxu0
        %v3849 = vadd.f32 %v3688, %v3848
        %v3850 = vpop.f32.mrf.mxu0
        %v3851 = vpop.f32.mrf.mxu0
        %v3852 = vadd.f32 %v3691, %v3851
        %v3853 = vpop.f32.mrf.mxu0
        %3854 = vmatprep.mubr.bf16.mxu0 0
        %3855 = vmatmul.mubr.bf16.gmra.mxu0 %v3378
        %v3856 = vpop.f32.mrf.mxu0
        %v3857 = vadd.f32 %v3696, %v3856
        %v3858 = vpop.f32.mrf.mxu0
        %v3859 = vpop.f32.mrf.mxu0
        %v3860 = vadd.f32 %v3699, %v3859
        %v3861 = vpop.f32.mrf.mxu0
        %3862 = vmatprep.mubr.bf16.mxu0 0
        %3863 = vmatmul.mubr.bf16.gmra.mxu0 %v3381
        %v3864 = vpop.f32.mrf.mxu0
        %v3865 = vadd.f32 %v3704, %v3864
        %v3866 = vpop.f32.mrf.mxu0
        %v3867 = vpop.f32.mrf.mxu0
        %v3868 = vadd.f32 %v3707, %v3867
        %v3869 = vpop.f32.mrf.mxu0
        %3870 = vmatprep.mubr.bf16.mxu0 0
        %3871 = vmatmul.mubr.bf16.gmra.mxu0 %v3384
        %v3872 = vpop.f32.mrf.mxu0
        %v3873 = vadd.f32 %v3712, %v3872
        %v3874 = vpop.f32.mrf.mxu0
        %v3875 = vpop.f32.mrf.mxu0
        %v3876 = vadd.f32 %v3715, %v3875
        %v3877 = vpop.f32.mrf.mxu0
        %3878 = vmatprep.mubr.bf16.mxu0 0
        %3879 = vmatmul.mubr.bf16.gmra.mxu0 %v3387
        %v3880 = vpop.f32.mrf.mxu0
        %v3881 = vadd.f32 %v3720, %v3880
        %v3882 = vpop.f32.mrf.mxu0
        %v3883 = vpop.f32.mrf.mxu0
        %v3884 = vadd.f32 %v3723, %v3883
        %v3885 = vpop.f32.mrf.mxu0
        %3886 = vmatprep.mubr.bf16.mxu0 0
        %3887 = vmatmul.mubr.bf16.gmra.mxu0 %v3390
        %v3888 = vpop.f32.mrf.mxu0
        %v3889 = vadd.f32 %v3728, %v3888
        %v3890 = vpop.f32.mrf.mxu0
        %v3891 = vpop.f32.mrf.mxu0
        %v3892 = vadd.f32 %v3731, %v3891
        %v3893 = vpop.f32.mrf.mxu0
        %3894 = vmatprep.mubr.bf16.mxu0 0
        %3895 = vmatmul.mubr.bf16.gmra.mxu0 %v3393
        %v3896 = vpop.f32.mrf.mxu0
        %v3897 = vadd.f32 %v3736, %v3896
        %v3898 = vpop.f32.mrf.mxu0
        %v3899 = vpop.f32.mrf.mxu0
        %v3900 = vadd.f32 %v3739, %v3899
        %v3901 = vpop.f32.mrf.mxu0
        %3902 = vmatprep.mubr.bf16.mxu0 0
        %3903 = vmatmul.mubr.bf16.gmra.mxu0 %v3396
        %v3904 = vpop.f32.mrf.mxu0
        %v3905 = vadd.f32 %v3744, %v3904
        %v3906 = vpop.f32.mrf.mxu0
        %v3907 = vpop.f32.mrf.mxu0
        %v3908 = vadd.f32 %v3747, %v3907
        %v3909 = vpop.f32.mrf.mxu0
        %3910 = vdwg.mxu0
        %v3911 = vadd.f32 %v2949, %v3785
        %v3912 = vadd.f32 %v2952, %v3788
        %v3913 = vadd.f32 %v2957, %v3793
        %v3914 = vadd.f32 %v2960, %v3796
        %v3915 = vadd.f32 %v2965, %v3801
        %v3916 = vadd.f32 %v2968, %v3804
        %v3917 = vadd.f32 %v2973, %v3809
        %v3918 = vadd.f32 %v2976, %v3812
        %v3919 = vadd.f32 %v2981, %v3817
        %v3920 = vadd.f32 %v2984, %v3820
        %v3921 = vadd.f32 %v2989, %v3825
        %v3922 = vadd.f32 %v2992, %v3828
        %v3923 = vadd.f32 %v2997, %v3833
        %v3924 = vadd.f32 %v3000, %v3836
        %v3925 = vadd.f32 %v3005, %v3841
        %v3926 = vadd.f32 %v3008, %v3844
        %v3927 = vadd.f32 %v3013, %v3849
        %v3928 = vadd.f32 %v3016, %v3852
        %v3929 = vadd.f32 %v3021, %v3857
        %v3930 = vadd.f32 %v3024, %v3860
        %v3931 = vadd.f32 %v3029, %v3865
        %v3932 = vadd.f32 %v3032, %v3868
        %v3933 = vadd.f32 %v3037, %v3873
        %v3934 = vadd.f32 %v3040, %v3876
        %v3935 = vadd.f32 %v3045, %v3881
        %v3936 = vadd.f32 %v3048, %v3884
        %v3937 = vadd.f32 %v3053, %v3889
        %v3938 = vadd.f32 %v3056, %v3892
        %v3939 = vadd.f32 %v3061, %v3897
        %v3940 = vadd.f32 %v3064, %v3900
        %v3941 = vadd.f32 %v3069, %v3905
        %v3942 = vadd.f32 %v3072, %v3908
        %v3943 = vld [vmem:[%s4] sm:$0x1]
        %v3945 = vlaneseq
        %v3946 = vshrl.u32 %v3945, 7
        %v3947 = vsub.s32 0, %v3946
        %v3948 = vrot.slane %v3943, %v3947
        %v3950 = vadd.f32 %v3911, %v3948
        %v3951 = vadd.f32 %v3912, %v3948
        %v3952 = vadd.f32 %v3913, %v3948
        %v3953 = vadd.f32 %v3914, %v3948
        %v3954 = vadd.f32 %v3915, %v3948
        %v3955 = vadd.f32 %v3916, %v3948
        %v3956 = vadd.f32 %v3917, %v3948
        %v3957 = vadd.f32 %v3918, %v3948
        %v3958 = vadd.f32 %v3919, %v3948
        %v3959 = vadd.f32 %v3920, %v3948
        %v3960 = vadd.f32 %v3921, %v3948
        %v3961 = vadd.f32 %v3922, %v3948
        %v3962 = vadd.f32 %v3923, %v3948
        %v3963 = vadd.f32 %v3924, %v3948
        %v3964 = vadd.f32 %v3925, %v3948
        %v3965 = vadd.f32 %v3926, %v3948
        %v3966 = vadd.f32 %v3927, %v3948
        %v3967 = vadd.f32 %v3928, %v3948
        %v3968 = vadd.f32 %v3929, %v3948
        %v3969 = vadd.f32 %v3930, %v3948
        %v3970 = vadd.f32 %v3931, %v3948
        %v3971 = vadd.f32 %v3932, %v3948
        %v3972 = vadd.f32 %v3933, %v3948
        %v3973 = vadd.f32 %v3934, %v3948
        %v3974 = vadd.f32 %v3935, %v3948
        %v3975 = vadd.f32 %v3936, %v3948
        %v3976 = vadd.f32 %v3937, %v3948
        %v3977 = vadd.f32 %v3938, %v3948
        %v3978 = vadd.f32 %v3939, %v3948
        %v3979 = vadd.f32 %v3940, %v3948
        %v3980 = vadd.f32 %v3941, %v3948
        %v3981 = vadd.f32 %v3942, %v3948
        %v3982 = vmax.f32 %v3950, 0.0
        %v3983 = vmax.f32 %v3951, 0.0
        %v3984 = vmax.f32 %v3952, 0.0
        %v3985 = vmax.f32 %v3953, 0.0
        %v3986 = vmax.f32 %v3954, 0.0
        %v3987 = vmax.f32 %v3955, 0.0
        %v3988 = vmax.f32 %v3956, 0.0
        %v3989 = vmax.f32 %v3957, 0.0
        %v3990 = vmax.f32 %v3958, 0.0
        %v3991 = vmax.f32 %v3959, 0.0
        %v3992 = vmax.f32 %v3960, 0.0
        %v3993 = vmax.f32 %v3961, 0.0
        %v3994 = vmax.f32 %v3962, 0.0
        %v3995 = vmax.f32 %v3963, 0.0
        %v3996 = vmax.f32 %v3964, 0.0
        %v3997 = vmax.f32 %v3965, 0.0
        %v3998 = vmax.f32 %v3966, 0.0
        %v3999 = vmax.f32 %v3967, 0.0
        %v4000 = vmax.f32 %v3968, 0.0
        %v4001 = vmax.f32 %v3969, 0.0
        %v4002 = vmax.f32 %v3970, 0.0
        %v4003 = vmax.f32 %v3971, 0.0
        %v4004 = vmax.f32 %v3972, 0.0
        %v4005 = vmax.f32 %v3973, 0.0
        %v4006 = vmax.f32 %v3974, 0.0
        %v4007 = vmax.f32 %v3975, 0.0
        %v4008 = vmax.f32 %v3976, 0.0
        %v4009 = vmax.f32 %v3977, 0.0
        %v4010 = vmax.f32 %v3978, 0.0
        %v4011 = vmax.f32 %v3979, 0.0
        %v4012 = vmax.f32 %v3980, 0.0
        %v4013 = vmax.f32 %v3981, 0.0
        %v4014 = vpack.c.bf16 %v3983, %v3982
        %v4015 = vpack.c.bf16 %v3985, %v3984
        %v4016 = vpack.c.bf16 %v3987, %v3986
        %v4017 = vpack.c.bf16 %v3989, %v3988
        %v4018 = vpack.c.bf16 %v3991, %v3990
        %v4019 = vpack.c.bf16 %v3993, %v3992
        %v4020 = vpack.c.bf16 %v3995, %v3994
        %v4021 = vpack.c.bf16 %v3997, %v3996
        %v4022 = vpack.c.bf16 %v3999, %v3998
        %v4023 = vpack.c.bf16 %v4001, %v4000
        %v4024 = vpack.c.bf16 %v4003, %v4002
        %v4025 = vpack.c.bf16 %v4005, %v4004
        %v4026 = vpack.c.bf16 %v4007, %v4006
        %v4027 = vpack.c.bf16 %v4009, %v4008
        %v4028 = vpack.c.bf16 %v4011, %v4010
        %v4029 = vpack.c.bf16 %v4013, %v4012
        %v4030 = vld [vmem:[#allocation9] sm:$0xf]
        %v4031 = vld [vmem:[#allocation9 + $0x4] sm:$0xf]
        %v4032 = vld [vmem:[#allocation9 + $0x8] sm:$0xf]
        %v4033 = vld [vmem:[#allocation9 + $0xc] sm:$0xf]
        %v4034 = vld [vmem:[#allocation9 + $0x10] sm:$0xf]
        %v4035 = vld [vmem:[#allocation9 + $0x14] sm:$0xf]
        %v4036 = vld [vmem:[#allocation9 + $0x18] sm:$0xf]
        %v4037 = vld [vmem:[#allocation9 + $0x1c] sm:$0xf]
        %v4038 = vld [vmem:[#allocation9 + $0x20] sm:$0xf]
        %v4039 = vld [vmem:[#allocation9 + $0x24] sm:$0xf]
        %v4040 = vld [vmem:[#allocation9 + $0x28] sm:$0xf]
        %v4041 = vld [vmem:[#allocation9 + $0x2c] sm:$0xf]
        %v4042 = vld [vmem:[#allocation9 + $0x30] sm:$0xf]
        %v4043 = vld [vmem:[#allocation9 + $0x34] sm:$0xf]
        %v4044 = vld [vmem:[#allocation9 + $0x38] sm:$0xf]
        %v4045 = vld [vmem:[#allocation9 + $0x3c] sm:$0xf]
        %v4046 = vld [vmem:[%s298] sm:$0xf]
        %v4047 = vld [vmem:[%s298 + $0x4] sm:$0xf]
        %v4048 = vld [vmem:[%s298 + $0x8] sm:$0xf]
        %v4049 = vld [vmem:[%s298 + $0xc] sm:$0xf]
        %v4050 = vld [vmem:[%s298 + $0x10] sm:$0xf]
        %v4051 = vld [vmem:[%s298 + $0x14] sm:$0xf]
        %v4052 = vld [vmem:[%s298 + $0x18] sm:$0xf]
        %v4053 = vld [vmem:[%s298 + $0x1c] sm:$0xf]
        %v4054 = vld [vmem:[%s298 + $0x20] sm:$0xf]
        %v4055 = vld [vmem:[%s298 + $0x24] sm:$0xf]
        %v4056 = vld [vmem:[%s298 + $0x28] sm:$0xf]
        %v4057 = vld [vmem:[%s298 + $0x2c] sm:$0xf]
        %v4058 = vld [vmem:[%s298 + $0x30] sm:$0xf]
        %v4059 = vld [vmem:[%s298 + $0x34] sm:$0xf]
        %v4060 = vld [vmem:[%s298 + $0x38] sm:$0xf]
        %v4061 = vld [vmem:[%s298 + $0x3c] sm:$0xf]
        %v4062 = vld [vmem:[%s298 + $0x40] sm:$0xf]
        %v4063 = vld [vmem:[%s298 + $0x44] sm:$0xf]
        %v4064 = vld [vmem:[%s298 + $0x48] sm:$0xf]
        %v4065 = vld [vmem:[%s298 + $0x4c] sm:$0xf]
        %v4066 = vld [vmem:[%s298 + $0x50] sm:$0xf]
        %v4067 = vld [vmem:[%s298 + $0x54] sm:$0xf]
        %v4068 = vld [vmem:[%s298 + $0x58] sm:$0xf]
        %v4069 = vld [vmem:[%s298 + $0x5c] sm:$0xf]
        %v4070 = vld [vmem:[%s298 + $0x60] sm:$0xf]
        %v4071 = vld [vmem:[%s298 + $0x64] sm:$0xf]
        %v4072 = vld [vmem:[%s298 + $0x68] sm:$0xf]
        %v4073 = vld [vmem:[%s298 + $0x6c] sm:$0xf]
        %v4074 = vld [vmem:[%s298 + $0x70] sm:$0xf]
        %v4075 = vld [vmem:[%s298 + $0x74] sm:$0xf]
        %v4076 = vld [vmem:[%s298 + $0x78] sm:$0xf]
        %v4077 = vld [vmem:[%s298 + $0x7c] sm:$0xf]
        %v4078 = vunpack.c.l.bf16 %v4046
        %v4079 = vunpack.c.l.bf16 %v4047
        %v4080 = vunpack.c.l.bf16 %v4048
        %v4081 = vunpack.c.l.bf16 %v4049
        %v4082 = vunpack.c.l.bf16 %v4050
        %v4083 = vunpack.c.l.bf16 %v4051
        %v4084 = vunpack.c.l.bf16 %v4052
        %v4085 = vunpack.c.l.bf16 %v4053
        %v4086 = vunpack.c.l.bf16 %v4054
        %v4087 = vunpack.c.l.bf16 %v4055
        %v4088 = vunpack.c.l.bf16 %v4056
        %v4089 = vunpack.c.l.bf16 %v4057
        %v4090 = vunpack.c.l.bf16 %v4058
        %v4091 = vunpack.c.l.bf16 %v4059
        %v4092 = vunpack.c.l.bf16 %v4060
        %v4093 = vunpack.c.l.bf16 %v4061
        %v4094 = vunpack.c.l.bf16 %v4062
        %v4095 = vunpack.c.l.bf16 %v4063
        %v4096 = vunpack.c.l.bf16 %v4064
        %v4097 = vunpack.c.l.bf16 %v4065
        %v4098 = vunpack.c.l.bf16 %v4066
        %v4099 = vunpack.c.l.bf16 %v4067
        %v4100 = vunpack.c.l.bf16 %v4068
        %v4101 = vunpack.c.l.bf16 %v4069
        %v4102 = vunpack.c.l.bf16 %v4070
        %v4103 = vunpack.c.l.bf16 %v4071
        %v4104 = vunpack.c.l.bf16 %v4072
        %v4105 = vunpack.c.l.bf16 %v4073
        %v4106 = vunpack.c.l.bf16 %v4074
        %v4107 = vunpack.c.l.bf16 %v4075
        %v4108 = vunpack.c.l.bf16 %v4076
        %v4109 = vunpack.c.l.bf16 %v4077
        %v4110 = vld [vmem:[%s6] sm:$0x1]
        %v4112 = vlaneseq
        %v4113 = vshrl.u32 %v4112, 7
        %v4114 = vsub.s32 0, %v4113
        %v4115 = vrot.slane %v4110, %v4114
        %v4133 = vunpack.c.l.b16 %v4030
        %v4134 = vunpack.c.l.b16 %v4031
        %v4135 = vunpack.c.l.b16 %v4032
        %v4136 = vunpack.c.l.b16 %v4033
        %v4137 = vunpack.c.l.b16 %v4034
        %v4138 = vunpack.c.l.b16 %v4035
        %v4139 = vunpack.c.l.b16 %v4036
        %v4140 = vunpack.c.l.b16 %v4037
        %v4141 = vunpack.c.l.b16 %v4038
        %v4142 = vunpack.c.l.b16 %v4039
        %v4143 = vunpack.c.l.b16 %v4040
        %v4144 = vunpack.c.l.b16 %v4041
        %v4145 = vunpack.c.l.b16 %v4042
        %v4146 = vunpack.c.l.b16 %v4043
        %v4147 = vunpack.c.l.b16 %v4044
        %v4148 = vunpack.c.l.b16 %v4045
        %v4149 = vpack.c.b16 %v4134, %v4133
        %v4150 = vpack.c.b16 %v4136, %v4135
        %v4151 = vpack.c.b16 %v4138, %v4137
        %v4152 = vpack.c.b16 %v4140, %v4139
        %v4153 = vpack.c.b16 %v4142, %v4141
        %v4154 = vpack.c.b16 %v4144, %v4143
        %v4155 = vpack.c.b16 %v4146, %v4145
        %v4156 = vpack.c.b16 %v4148, %v4147
        %4165 = vmatprep.subr.bf16.mxu0 0
        %4166 = vmatpush1.bf16.msra.mxu0 %v4156
        %4167 = vmatprep.subr.bf16.mxu0 0
        %4168 = vmatpush1.bf16.msra.mxu0 %v4155
        %4169 = vmatprep.subr.bf16.mxu0 0
        %4170 = vmatpush1.bf16.msra.mxu0 %v4154
        %4171 = vmatprep.subr.bf16.mxu0 0
        %4172 = vmatpush1.bf16.msra.mxu0 %v4153
        %4173 = vmatprep.subr.bf16.mxu0 0
        %4174 = vmatpush1.bf16.msra.mxu0 %v4152
        %4175 = vmatprep.subr.bf16.mxu0 0
        %4176 = vmatpush1.bf16.msra.mxu0 %v4151
        %4177 = vmatprep.subr.bf16.mxu0 0
        %4178 = vmatpush1.bf16.msra.mxu0 %v4150
        %4179 = vmatprep.subr.bf16.mxu0 0
        %4180 = vmatpush1.bf16.msra.mxu0 %v4149
        %4181 = vmatprep.subr.bf16.mxu0 0
        %4182 = vmatpush2.bf16.msra.mxu0 0
        %4183 = vmatprep.subr.bf16.mxu0 0
        %4184 = vmatpush2.bf16.msra.mxu0 0
        %4185 = vmatprep.subr.bf16.mxu0 0
        %4186 = vmatpush2.bf16.msra.mxu0 0
        %4187 = vmatprep.subr.bf16.mxu0 0
        %4188 = vmatpush2.bf16.msra.mxu0 0
        %4189 = vmatprep.subr.bf16.mxu0 0
        %4190 = vmatpush2.bf16.msra.mxu0 0
        %4191 = vmatprep.subr.bf16.mxu0 0
        %4192 = vmatpush2.bf16.msra.mxu0 0
        %4193 = vmatprep.subr.bf16.mxu0 0
        %4194 = vmatpush2.bf16.msra.mxu0 0
        %4195 = vmatprep.subr.bf16.mxu0 0
        %4196 = vmatpush2.bf16.msra.mxu0 0
        %4197 = vmatprep.mubr.bf16.mxu0 0
        %4198 = vmatmul.mubr.bf16.gmra.mxu0 %v4014
        %v4199 = vpop.f32.mrf.mxu0
        %v4200 = vadd.f32 %v4115, %v4199
        %v4201 = vpop.f32.mrf.mxu0
        %v4202 = vpop.f32.mrf.mxu0
        %v4203 = vadd.f32 %v4115, %v4202
        %v4204 = vpop.f32.mrf.mxu0
        %4205 = vmatprep.mubr.bf16.mxu0 0
        %4206 = vmatmul.mubr.bf16.gmra.mxu0 %v4015
        %v4207 = vpop.f32.mrf.mxu0
        %v4208 = vadd.f32 %v4115, %v4207
        %v4209 = vpop.f32.mrf.mxu0
        %v4210 = vpop.f32.mrf.mxu0
        %v4211 = vadd.f32 %v4115, %v4210
        %v4212 = vpop.f32.mrf.mxu0
        %4213 = vmatprep.mubr.bf16.mxu0 0
        %4214 = vmatmul.mubr.bf16.gmra.mxu0 %v4016
        %v4215 = vpop.f32.mrf.mxu0
        %v4216 = vadd.f32 %v4115, %v4215
        %v4217 = vpop.f32.mrf.mxu0
        %v4218 = vpop.f32.mrf.mxu0
        %v4219 = vadd.f32 %v4115, %v4218
        %v4220 = vpop.f32.mrf.mxu0
        %4221 = vmatprep.mubr.bf16.mxu0 0
        %4222 = vmatmul.mubr.bf16.gmra.mxu0 %v4017
        %v4223 = vpop.f32.mrf.mxu0
        %v4224 = vadd.f32 %v4115, %v4223
        %v4225 = vpop.f32.mrf.mxu0
        %v4226 = vpop.f32.mrf.mxu0
        %v4227 = vadd.f32 %v4115, %v4226
        %v4228 = vpop.f32.mrf.mxu0
        %4229 = vmatprep.mubr.bf16.mxu0 0
        %4230 = vmatmul.mubr.bf16.gmra.mxu0 %v4018
        %v4231 = vpop.f32.mrf.mxu0
        %v4232 = vadd.f32 %v4115, %v4231
        %v4233 = vpop.f32.mrf.mxu0
        %v4234 = vpop.f32.mrf.mxu0
        %v4235 = vadd.f32 %v4115, %v4234
        %v4236 = vpop.f32.mrf.mxu0
        %4237 = vmatprep.mubr.bf16.mxu0 0
        %4238 = vmatmul.mubr.bf16.gmra.mxu0 %v4019
        %v4239 = vpop.f32.mrf.mxu0
        %v4240 = vadd.f32 %v4115, %v4239
        %v4241 = vpop.f32.mrf.mxu0
        %v4242 = vpop.f32.mrf.mxu0
        %v4243 = vadd.f32 %v4115, %v4242
        %v4244 = vpop.f32.mrf.mxu0
        %4245 = vmatprep.mubr.bf16.mxu0 0
        %4246 = vmatmul.mubr.bf16.gmra.mxu0 %v4020
        %v4247 = vpop.f32.mrf.mxu0
        %v4248 = vadd.f32 %v4115, %v4247
        %v4249 = vpop.f32.mrf.mxu0
        %v4250 = vpop.f32.mrf.mxu0
        %v4251 = vadd.f32 %v4115, %v4250
        %v4252 = vpop.f32.mrf.mxu0
        %4253 = vmatprep.mubr.bf16.mxu0 0
        %4254 = vmatmul.mubr.bf16.gmra.mxu0 %v4021
        %v4255 = vpop.f32.mrf.mxu0
        %v4256 = vadd.f32 %v4115, %v4255
        %v4257 = vpop.f32.mrf.mxu0
        %v4258 = vpop.f32.mrf.mxu0
        %v4259 = vadd.f32 %v4115, %v4258
        %v4260 = vpop.f32.mrf.mxu0
        %4261 = vmatprep.mubr.bf16.mxu0 0
        %4262 = vmatmul.mubr.bf16.gmra.mxu0 %v4022
        %v4263 = vpop.f32.mrf.mxu0
        %v4264 = vadd.f32 %v4115, %v4263
        %v4265 = vpop.f32.mrf.mxu0
        %v4266 = vpop.f32.mrf.mxu0
        %v4267 = vadd.f32 %v4115, %v4266
        %v4268 = vpop.f32.mrf.mxu0
        %4269 = vmatprep.mubr.bf16.mxu0 0
        %4270 = vmatmul.mubr.bf16.gmra.mxu0 %v4023
        %v4271 = vpop.f32.mrf.mxu0
        %v4272 = vadd.f32 %v4115, %v4271
        %v4273 = vpop.f32.mrf.mxu0
        %v4274 = vpop.f32.mrf.mxu0
        %v4275 = vadd.f32 %v4115, %v4274
        %v4276 = vpop.f32.mrf.mxu0
        %4277 = vmatprep.mubr.bf16.mxu0 0
        %4278 = vmatmul.mubr.bf16.gmra.mxu0 %v4024
        %v4279 = vpop.f32.mrf.mxu0
        %v4280 = vadd.f32 %v4115, %v4279
        %v4281 = vpop.f32.mrf.mxu0
        %v4282 = vpop.f32.mrf.mxu0
        %v4283 = vadd.f32 %v4115, %v4282
        %v4284 = vpop.f32.mrf.mxu0
        %4285 = vmatprep.mubr.bf16.mxu0 0
        %4286 = vmatmul.mubr.bf16.gmra.mxu0 %v4025
        %v4287 = vpop.f32.mrf.mxu0
        %v4288 = vadd.f32 %v4115, %v4287
        %v4289 = vpop.f32.mrf.mxu0
        %v4290 = vpop.f32.mrf.mxu0
        %v4291 = vadd.f32 %v4115, %v4290
        %v4292 = vpop.f32.mrf.mxu0
        %4293 = vmatprep.mubr.bf16.mxu0 0
        %4294 = vmatmul.mubr.bf16.gmra.mxu0 %v4026
        %v4295 = vpop.f32.mrf.mxu0
        %v4296 = vadd.f32 %v4115, %v4295
        %v4297 = vpop.f32.mrf.mxu0
        %v4298 = vpop.f32.mrf.mxu0
        %v4299 = vadd.f32 %v4115, %v4298
        %v4300 = vpop.f32.mrf.mxu0
        %4301 = vmatprep.mubr.bf16.mxu0 0
        %4302 = vmatmul.mubr.bf16.gmra.mxu0 %v4027
        %v4303 = vpop.f32.mrf.mxu0
        %v4304 = vadd.f32 %v4115, %v4303
        %v4305 = vpop.f32.mrf.mxu0
        %v4306 = vpop.f32.mrf.mxu0
        %v4307 = vadd.f32 %v4115, %v4306
        %v4308 = vpop.f32.mrf.mxu0
        %4309 = vmatprep.mubr.bf16.mxu0 0
        %4310 = vmatmul.mubr.bf16.gmra.mxu0 %v4028
        %v4311 = vpop.f32.mrf.mxu0
        %v4312 = vadd.f32 %v4115, %v4311
        %v4313 = vpop.f32.mrf.mxu0
        %v4314 = vpop.f32.mrf.mxu0
        %v4315 = vadd.f32 %v4115, %v4314
        %v4316 = vpop.f32.mrf.mxu0
        %4317 = vmatprep.mubr.bf16.mxu0 0
        %4318 = vmatmul.mubr.bf16.gmra.mxu0 %v4029
        %v4319 = vpop.f32.mrf.mxu0
        %v4320 = vadd.f32 %v4115, %v4319
        %v4321 = vpop.f32.mrf.mxu0
        %v4322 = vpop.f32.mrf.mxu0
        %v4323 = vadd.f32 %v4115, %v4322
        %v4324 = vpop.f32.mrf.mxu0
        %4325 = vdwg.mxu0
        %v4326 = vadd.f32 %v4200, %v4078
        %v4327 = vadd.f32 %v4203, %v4079
        %v4328 = vadd.f32 %v4208, %v4080
        %v4329 = vadd.f32 %v4211, %v4081
        %v4330 = vadd.f32 %v4216, %v4082
        %v4331 = vadd.f32 %v4219, %v4083
        %v4332 = vadd.f32 %v4224, %v4084
        %v4333 = vadd.f32 %v4227, %v4085
        %v4334 = vadd.f32 %v4232, %v4086
        %v4335 = vadd.f32 %v4235, %v4087
        %v4336 = vadd.f32 %v4240, %v4088
        %v4337 = vadd.f32 %v4243, %v4089
        %v4338 = vadd.f32 %v4248, %v4090
        %v4339 = vadd.f32 %v4251, %v4091
        %v4340 = vadd.f32 %v4256, %v4092
        %v4341 = vadd.f32 %v4259, %v4093
        %v4342 = vadd.f32 %v4264, %v4094
        %v4343 = vadd.f32 %v4267, %v4095
        %v4344 = vadd.f32 %v4272, %v4096
        %v4345 = vadd.f32 %v4275, %v4097
        %v4346 = vadd.f32 %v4280, %v4098
        %v4347 = vadd.f32 %v4283, %v4099
        %v4348 = vadd.f32 %v4288, %v4100
        %v4349 = vadd.f32 %v4291, %v4101
        %v4350 = vadd.f32 %v4296, %v4102
        %v4351 = vadd.f32 %v4299, %v4103
        %v4352 = vadd.f32 %v4304, %v4104
        %v4353 = vadd.f32 %v4307, %v4105
        %v4354 = vadd.f32 %v4312, %v4106
        %v4355 = vadd.f32 %v4315, %v4107
        %v4356 = vadd.f32 %v4320, %v4108
        %v4357 = vadd.f32 %v4323, %v4109
        %v4358 = vmax.f32 %v4326, 0.0
        %v4359 = vmax.f32 %v4327, 0.0
        %v4360 = vmax.f32 %v4328, 0.0
        %v4361 = vmax.f32 %v4329, 0.0
        %v4362 = vmax.f32 %v4330, 0.0
        %v4363 = vmax.f32 %v4331, 0.0
        %v4364 = vmax.f32 %v4332, 0.0
        %v4365 = vmax.f32 %v4333, 0.0
        %v4366 = vmax.f32 %v4334, 0.0
        %v4367 = vmax.f32 %v4335, 0.0
        %v4368 = vmax.f32 %v4336, 0.0
        %v4369 = vmax.f32 %v4337, 0.0
        %v4370 = vmax.f32 %v4338, 0.0
        %v4371 = vmax.f32 %v4339, 0.0
        %v4372 = vmax.f32 %v4340, 0.0
        %v4373 = vmax.f32 %v4341, 0.0
        %v4374 = vmax.f32 %v4342, 0.0
        %v4375 = vmax.f32 %v4343, 0.0
        %v4376 = vmax.f32 %v4344, 0.0
        %v4377 = vmax.f32 %v4345, 0.0
        %v4378 = vmax.f32 %v4346, 0.0
        %v4379 = vmax.f32 %v4347, 0.0
        %v4380 = vmax.f32 %v4348, 0.0
        %v4381 = vmax.f32 %v4349, 0.0
        %v4382 = vmax.f32 %v4350, 0.0
        %v4383 = vmax.f32 %v4351, 0.0
        %v4384 = vmax.f32 %v4352, 0.0
        %v4385 = vmax.f32 %v4353, 0.0
        %v4386 = vmax.f32 %v4354, 0.0
        %v4387 = vmax.f32 %v4355, 0.0
        %v4388 = vmax.f32 %v4356, 0.0
        %v4389 = vmax.f32 %v4357, 0.0
        %v4390 = vpack.c.bf16 %v4359, %v4358
        %v4391 = vpack.c.bf16 %v4361, %v4360
        %v4392 = vpack.c.bf16 %v4363, %v4362
        %v4393 = vpack.c.bf16 %v4365, %v4364
        %v4394 = vpack.c.bf16 %v4367, %v4366
        %v4395 = vpack.c.bf16 %v4369, %v4368
        %v4396 = vpack.c.bf16 %v4371, %v4370
        %v4397 = vpack.c.bf16 %v4373, %v4372
        %v4398 = vpack.c.bf16 %v4375, %v4374
        %v4399 = vpack.c.bf16 %v4377, %v4376
        %v4400 = vpack.c.bf16 %v4379, %v4378
        %v4401 = vpack.c.bf16 %v4381, %v4380
        %v4402 = vpack.c.bf16 %v4383, %v4382
        %v4403 = vpack.c.bf16 %v4385, %v4384
        %v4404 = vpack.c.bf16 %v4387, %v4386
        %v4405 = vpack.c.bf16 %v4389, %v4388
        %v4422 = vunpack.c.l.b16 %v4390
        %v4423 = vunpack.c.h.b16 %v4390
        %v4424 = vunpack.c.l.b16 %v4391
        %v4425 = vunpack.c.h.b16 %v4391
        %v4426 = vunpack.c.l.b16 %v4392
        %v4427 = vunpack.c.h.b16 %v4392
        %v4428 = vunpack.c.l.b16 %v4393
        %v4429 = vunpack.c.h.b16 %v4393
        %v4430 = vunpack.c.l.b16 %v4394
        %v4431 = vunpack.c.h.b16 %v4394
        %v4432 = vunpack.c.l.b16 %v4395
        %v4433 = vunpack.c.h.b16 %v4395
        %v4434 = vunpack.c.l.b16 %v4396
        %v4435 = vunpack.c.h.b16 %v4396
        %v4436 = vunpack.c.l.b16 %v4397
        %v4437 = vunpack.c.h.b16 %v4397
        %v4438 = vunpack.c.l.b16 %v4398
        %v4439 = vunpack.c.h.b16 %v4398
        %v4440 = vunpack.c.l.b16 %v4399
        %v4441 = vunpack.c.h.b16 %v4399
        %v4442 = vunpack.c.l.b16 %v4400
        %v4443 = vunpack.c.h.b16 %v4400
        %v4444 = vunpack.c.l.b16 %v4401
        %v4445 = vunpack.c.h.b16 %v4401
        %v4446 = vunpack.c.l.b16 %v4402
        %v4447 = vunpack.c.h.b16 %v4402
        %v4448 = vunpack.c.l.b16 %v4403
        %v4449 = vunpack.c.h.b16 %v4403
        %v4450 = vunpack.c.l.b16 %v4404
        %v4451 = vunpack.c.h.b16 %v4404
        %v4452 = vunpack.c.l.b16 %v4405
        %v4453 = vunpack.c.h.b16 %v4405
        %v4454 = vpack.c.b16 %v4422, %v4422
        %v4455 = vpack.c.b16 %v4423, %v4423
        %v4456 = vpack.c.b16 %v4424, %v4424
        %v4457 = vpack.c.b16 %v4425, %v4425
        %v4458 = vpack.c.b16 %v4426, %v4426
        %v4459 = vpack.c.b16 %v4427, %v4427
        %v4460 = vpack.c.b16 %v4428, %v4428
        %v4461 = vpack.c.b16 %v4429, %v4429
        %v4462 = vpack.c.b16 %v4430, %v4430
        %v4463 = vpack.c.b16 %v4431, %v4431
        %v4464 = vpack.c.b16 %v4432, %v4432
        %v4465 = vpack.c.b16 %v4433, %v4433
        %v4466 = vpack.c.b16 %v4434, %v4434
        %v4467 = vpack.c.b16 %v4435, %v4435
        %v4468 = vpack.c.b16 %v4436, %v4436
        %v4469 = vpack.c.b16 %v4437, %v4437
        %v4470 = vpack.c.b16 %v4438, %v4438
        %v4471 = vpack.c.b16 %v4439, %v4439
        %v4472 = vpack.c.b16 %v4440, %v4440
        %v4473 = vpack.c.b16 %v4441, %v4441
        %v4474 = vpack.c.b16 %v4442, %v4442
        %v4475 = vpack.c.b16 %v4443, %v4443
        %v4476 = vpack.c.b16 %v4444, %v4444
        %v4477 = vpack.c.b16 %v4445, %v4445
        %v4478 = vpack.c.b16 %v4446, %v4446
        %v4479 = vpack.c.b16 %v4447, %v4447
        %v4480 = vpack.c.b16 %v4448, %v4448
        %v4481 = vpack.c.b16 %v4449, %v4449
        %v4482 = vpack.c.b16 %v4450, %v4450
        %v4483 = vpack.c.b16 %v4451, %v4451
        %v4484 = vpack.c.b16 %v4452, %v4452
        %v4485 = vpack.c.b16 %v4453, %v4453
        %4518 = vst [vmem:[%s340] sm:$0xf] %v4454
        %4519 = vst [vmem:[%s340 + $0x4] sm:$0xf] %v4455
        %4520 = vst [vmem:[%s340 + $0x8] sm:$0xf] %v4456
        %4521 = vst [vmem:[%s340 + $0xc] sm:$0xf] %v4457
        %4522 = vst [vmem:[%s340 + $0x10] sm:$0xf] %v4458
        %4523 = vst [vmem:[%s340 + $0x14] sm:$0xf] %v4459
        %4524 = vst [vmem:[%s340 + $0x18] sm:$0xf] %v4460
        %4525 = vst [vmem:[%s340 + $0x1c] sm:$0xf] %v4461
        %4526 = vst [vmem:[%s340 + $0x20] sm:$0xf] %v4462
        %4527 = vst [vmem:[%s340 + $0x24] sm:$0xf] %v4463
        %4528 = vst [vmem:[%s340 + $0x28] sm:$0xf] %v4464
        %4529 = vst [vmem:[%s340 + $0x2c] sm:$0xf] %v4465
        %4530 = vst [vmem:[%s340 + $0x30] sm:$0xf] %v4466
        %4531 = vst [vmem:[%s340 + $0x34] sm:$0xf] %v4467
        %4532 = vst [vmem:[%s340 + $0x38] sm:$0xf] %v4468
        %4533 = vst [vmem:[%s340 + $0x3c] sm:$0xf] %v4469
        %4534 = vst [vmem:[%s340 + $0x40] sm:$0xf] %v4470
        %4535 = vst [vmem:[%s340 + $0x44] sm:$0xf] %v4471
        %4536 = vst [vmem:[%s340 + $0x48] sm:$0xf] %v4472
        %4537 = vst [vmem:[%s340 + $0x4c] sm:$0xf] %v4473
        %4538 = vst [vmem:[%s340 + $0x50] sm:$0xf] %v4474
        %4539 = vst [vmem:[%s340 + $0x54] sm:$0xf] %v4475
        %4540 = vst [vmem:[%s340 + $0x58] sm:$0xf] %v4476
        %4541 = vst [vmem:[%s340 + $0x5c] sm:$0xf] %v4477
        %4542 = vst [vmem:[%s340 + $0x60] sm:$0xf] %v4478
        %4543 = vst [vmem:[%s340 + $0x64] sm:$0xf] %v4479
        %4544 = vst [vmem:[%s340 + $0x68] sm:$0xf] %v4480
        %4545 = vst [vmem:[%s340 + $0x6c] sm:$0xf] %v4481
        %4546 = vst [vmem:[%s340 + $0x70] sm:$0xf] %v4482
        %4547 = vst [vmem:[%s340 + $0x74] sm:$0xf] %v4483
        %4548 = vst [vmem:[%s340 + $0x78] sm:$0xf] %v4484
        %4549 = vst [vmem:[%s340 + $0x7c] sm:$0xf] %v4485
        %s4550 = sand.u32 %s186, 1
        %s4551 = scalar_lea.sflag [#allocation5], %s4550
        %s4552 = sand.u32 %s186, 1
        %s4553 = smul.addr %s4552, 128
        %s4554 = scalar_lea.vmem [#allocation11], %s4553
        // Predicated region
        $region65: #{tpu_custom_call.1} parent=47 // pred_check
          %p4555 = pneg %p196
        $region66: #{tpu_custom_call.1} parent=47 // pred_check_branch
          %4557 = sbr.rel (%p4555) target = $region68
        $region67: #{tpu_custom_call.1} parent=47 // pred_region
          %s4559 = ssub.s32 2048, 2048
          %4560 = vsyncadd %s4551, %s4559
          %s4561 = smul.addr %s26, 32
          %s4562 = smul.addr %s4561, 64
          %s4563 = scalar_lea.hbm %s7, %s4562
          %s4564 = sshll.u32 %s4554, 4
          %s4565 = int_to_ptr.vmem [resolvable:$true] %s4564
          %4570 = dma.vmem_to_hbm [thread:$0]  %s4565, 2048, %s4563, %s4551, 64, 64, 4
        $region68: #{tpu_custom_call.1} parent=47 // pred_fallthru
          _
      $region48: #{tpu_custom_call.1} parent=5 // pred_fallthru
        _
      %p4571 = scmp.le.s32.totalorder 2, %s21
      // Predicated region
      $region69: #{tpu_custom_call.1} parent=5 // pred_check
        %p4572 = pneg %p4571
      $region70: #{tpu_custom_call.1} parent=5 // pred_check_branch
        %4574 = sbr.rel (%p4572) target = $region72
      $region71: #{tpu_custom_call.1} parent=5 // pred_region
        %s4575 = ssub.s32 %s21, 2
        // Predicated region
        $region73: #{tpu_custom_call.1} parent=71 // pred_check
          %p4576 = pneg %p202
        $region74: #{tpu_custom_call.1} parent=71 // pred_check_branch
          %4578 = sbr.rel (%p4576) target = $region76
        $region75: #{tpu_custom_call.1} parent=71 // pred_region
          %s4579 = sand.u32 %s187, 1
          %s4580 = scalar_lea.sflag [#allocation5], %s4579
          %s4581 = sand.u32 %s187, 1
          %s4582 = smul.addr %s4581, 128
          %s4583 = scalar_lea.vmem [#allocation11], %s4582
          %4584 = dma.done %s4580, 2048
        $region76: #{tpu_custom_call.1} parent=71 // pred_fallthru
          _
      $region72: #{tpu_custom_call.1} parent=5 // pred_fallthru
        _
    $region6: #{tpu_custom_call.1} parent=1 // loop_footer
      %s25 = sadd.s32 1, %s21
    $region7: #{tpu_custom_call.1} parent=1 // loop_footer_branch
      %20 = sbr.rel target = $region3
    $region8: #{tpu_custom_call.1} parent=1 // loop_exit
      _
    %4585 = vsyncpa [#allocation4], 1
    %s4586 = scalar_lea.sflag [#allocation4], 1
    %4587 = vsyncpa %s4586, 1
    %4588 = vsyncpa [#allocation7], 1
    %4589 = vsyncpa [#allocation10], 1
    %4590 = vsyncpa [#allocation5], 1
    %s4591 = scalar_lea.sflag [#allocation5], 1
    %4592 = vsyncpa %s4591, 1

</llo_original>
